<compile_context>
chip_gen: v6e
topology: v6e:2x2x1
jax: 0.10.0
libtpu: 0.0.40
codegen_flags: <defaults>
</compile_context>

<pallas_src>
import functools

import jax
import jax.numpy as jnp
from jax import lax
from jax.experimental import pallas as pl
from jax.experimental.pallas import tpu as pltpu

LANE = 128


def _round_up(v, m):
    return (v + m - 1) // m * m


def _bottleneck_kernel(x_ref, halo_ref,
                       w1_ref, s1_ref, b1_ref,
                       w2_ref, s2_ref, b2_ref,
                       w3_ref, s3_ref, b3_ref,
                       o_ref, out1_scr,
                       *, height, dilation):
    f32, bf16 = jnp.float32, jnp.bfloat16
    d = dilation
    TH = o_ref.shape[1]            # rows in this tile
    W = o_ref.shape[2]             # real image width
    Wp = x_ref.shape[2]            # W + 2d (wrapper-padded columns)
    Cin_p = x_ref.shape[3]
    P_p = w1_ref.shape[1]
    Cout_p = w3_ref.shape[1]
    THp = TH + 2 * d
    t = pl.program_id(1)

    # ---- conv1 (1x1) + bn1 + relu over main rows + both halo slabs ----------
    xm = x_ref[0]                                             # (TH, Wp, Cin_p)
    xh = halo_ref[0]                                          # (2d, Wp, Cin_p)
    xall = jnp.concatenate([xh[:d], xm, xh[d:]], axis=0)      # (THp, Wp, Cin_p)
    h1 = jnp.dot(xall.reshape(THp * Wp, Cin_p).astype(bf16), w1_ref[...],
                 preferred_element_type=f32)
    h1 = jnp.maximum(h1 * s1_ref[...] + b1_ref[...], 0.0).reshape(THp, Wp, P_p)

    # Zero everything off-image (halo overruns, bottom row padding when
    # H % TH != 0, and the left/right zero-pad ring of conv2); without the
    # mask those positions would hold relu(b1) != 0.
    r = t * TH - d + lax.broadcasted_iota(jnp.int32, (THp, Wp, P_p), 0)
    c = lax.broadcasted_iota(jnp.int32, (THp, Wp, P_p), 1)
    valid = (r >= 0) & (r < height) & (c >= d) & (c < d + W)
    out1_scr[...] = jnp.where(valid, h1, 0.0).astype(bf16)

    # ---- conv2 (3x3, stride 1, dilation d) + bn2 + relu ----------------------
    # 9 consecutive accumulating dots into one f32 accumulator; taps are static
    # slices of the padded out1 scratch (no concatenated pad copies).
    acc = jnp.zeros((TH * W, P_p), f32)
    for ky in range(3):
        for kx in range(3):
            tap = out1_scr[ky * d:ky * d + TH, kx * d:kx * d + W, :]
            acc = acc + jnp.dot(tap.reshape(TH * W, P_p), w2_ref[ky, kx],
                                preferred_element_type=f32)
    out2 = jnp.maximum(acc * s2_ref[...] + b2_ref[...], 0.0)

    # ---- conv3 (1x1) + bn3 + residual add + relu -----------------------------
    out3 = jnp.dot(out2.astype(bf16), w3_ref[...], preferred_element_type=f32)
    out3 = out3 * s3_ref[...] + b3_ref[...]
    resid = x_ref[0][:, d:d + W, :].reshape(TH * W, Cout_p).astype(f32)
    y = jnp.maximum(out3 + resid, 0.0)
    o_ref[0] = y.reshape(TH, W, Cout_p).astype(o_ref.dtype)


def bottleneck_pallas_nhwc(x_nhwc, params, *, dilation=1, row_tile=8):
    """x_nhwc: (N, H, W, Cin). Returns (N, H, W, Cin). NHWC end-to-end."""
    (w1, s1, b1, w2, s2, b2, w3, s3, b3) = params
    N, H, W, Cin = x_nhwc.shape
    P = w1.shape[1]
    Cout = w3.shape[1]
    assert Cout == Cin, "downsample is None => inplanes must equal planes*4"
    d = dilation
    dtype = x_nhwc.dtype

    TH = min(row_tile, H)
    HT = -(-H // TH)                      # number of row tiles
    Hp = HT * TH                          # H padded up to a multiple of TH
    Wp = W + 2 * d                        # columns padded for the 3x3 halo

    # Lane-dense channel padding (no-op for real >=128-channel layers).
    Cin_p = _round_up(Cin, LANE)
    P_p = _round_up(P, LANE)
    Cout_p = _round_up(Cout, LANE)

    # ---- activations: pad rows to Hp, add d-wide column halo, pad channels --
    xw = jnp.pad(x_nhwc, ((0, 0), (0, Hp - H), (d, d), (0, Cin_p - Cin)))
    xh = jnp.pad(xw, ((0, 0), (d, d), (0, 0), (0, 0)))        # d rows top/bottom
    halos = []
    for t in range(HT):
        top = xh[:, t * TH:t * TH + d]                        # rows t*TH-d .. t*TH-1
        bot = xh[:, (t + 1) * TH + d:(t + 1) * TH + 2 * d]    # rows (t+1)*TH .. +d-1
        halos.append(jnp.concatenate([top, bot], axis=1))
    halo = jnp.stack(halos, axis=1).reshape(N * HT, 2 * d, Wp, Cin_p)

    # ---- weights: pad to lane-dense shapes, pre-cast to bf16 for the MXU ----
    bf16 = jnp.bfloat16
    w1p = jnp.zeros((Cin_p, P_p), jnp.float32).at[:Cin, :P].set(w1).astype(bf16)
    w2p = jnp.zeros((3, 3, P_p, P_p), jnp.float32).at[:, :, :P, :P].set(w2).astype(bf16)
    w3p = jnp.zeros((P_p, Cout_p), jnp.float32).at[:P, :Cout].set(w3).astype(bf16)
    s1p = jnp.zeros((1, P_p), jnp.float32).at[0, :P].set(s1)
    b1p = jnp.zeros((1, P_p), jnp.float32).at[0, :P].set(b1)
    s2p = jnp.zeros((1, P_p), jnp.float32).at[0, :P].set(s2)
    b2p = jnp.zeros((1, P_p), jnp.float32).at[0, :P].set(b2)
    s3p = jnp.zeros((1, Cout_p), jnp.float32).at[0, :Cout].set(s3)
    b3p = jnp.zeros((1, Cout_p), jnp.float32).at[0, :Cout].set(b3)

    def rep(a):
        return pl.BlockSpec(a.shape, lambda n, t, _nd=a.ndim: (0,) * _nd)

    itemsize = jnp.dtype(dtype).itemsize
    flops = 2 * N * Hp * W * (Cin_p * P_p + 9 * P_p * P_p + P_p * Cout_p)
    bytes_accessed = int(xw.size * itemsize + halo.size * itemsize
                         + N * Hp * W * Cout_p * itemsize
                         + 2 * (w1p.size + w2p.size + w3p.size))

    out = pl.pallas_call(
        functools.partial(_bottleneck_kernel, height=H, dilation=d),
        out_shape=jax.ShapeDtypeStruct((N, Hp, W, Cout_p), dtype),
        grid_spec=pltpu.PrefetchScalarGridSpec(
            num_scalar_prefetch=0,
            grid=(N, HT),
            in_specs=[
                pl.BlockSpec((1, TH, Wp, Cin_p), lambda n, t: (n, t, 0, 0)),
                pl.BlockSpec((1, 2 * d, Wp, Cin_p),
                             lambda n, t, _ht=HT: (n * _ht + t, 0, 0, 0)),
                rep(w1p), rep(s1p), rep(b1p),
                rep(w2p), rep(s2p), rep(b2p),
                rep(w3p), rep(s3p), rep(b3p),
            ],
            out_specs=pl.BlockSpec((1, TH, W, Cout_p), lambda n, t: (n, t, 0, 0)),
            scratch_shapes=[pltpu.VMEM((TH + 2 * d, Wp, P_p), jnp.bfloat16)],
        ),
        compiler_params=pltpu.CompilerParams(
            dimension_semantics=("parallel", "parallel"),
            vmem_limit_bytes=32 * 1024 * 1024),
        cost_estimate=pl.CostEstimate(flops=flops, transcendentals=0,
                                      bytes_accessed=bytes_accessed),
    )(xw, halo, w1p, s1p, b1p, w2p, s2p, b2p, w3p, s3p, b3p)

    return out[:, :H, :, :Cout]


def bottleneck_pallas(x_nchw, params, *, dilation=1, row_tile=8):
    """PyTorch-convention NCHW wrapper.

    TODO(synk): in a full network keep activations NHWC end-to-end so these two
    transposes (each a full HBM read+write) are paid once, not per block.
    """
    x = jnp.transpose(x_nchw, (0, 2, 3, 1))
    y = bottleneck_pallas_nhwc(x, params, dilation=dilation, row_tile=row_tile)
    return jnp.transpose(y, (0, 3, 1, 2))


def _fold_bn(gamma, beta, mean, var, eps=1e-5):
    scale = gamma / jnp.sqrt(var + eps)
    bias = beta - mean * scale
    return scale, bias


def _reference(x_nchw, params, dilation):
    """Pure-JAX f32 reference (lax convs) for verification."""
    (w1, s1, b1, w2, s2, b2, w3, s3, b3) = params
    x = jnp.transpose(x_nchw, (0, 2, 3, 1))
    dn = lax.conv_dimension_numbers(x.shape, (1, 1, 1, 1), ("NHWC", "HWIO", "NHWC"))

    def conv(inp, w_hwio, dil):
        return lax.conv_general_dilated(
            inp, w_hwio, window_strides=(1, 1),
            padding=[(dil * (w_hwio.shape[0] // 2),) * 2,
                     (dil * (w_hwio.shape[1] // 2),) * 2],
            rhs_dilation=(dil, dil), dimension_numbers=dn)

    o = conv(x, w1.reshape(1, 1, *w1.shape), 1)
    o = jnp.maximum(o * s1 + b1, 0.0)
    o = conv(o, w2, dilation)
    o = jnp.maximum(o * s2 + b2, 0.0)
    o = conv(o, w3.reshape(1, 1, *w3.shape), 1)
    o = o * s3 + b3
    o = jnp.maximum(o + x, 0.0)
    return jnp.transpose(o, (0, 3, 1, 2))


if __name__ == "__main__":
    # Small shapes consistent with the module: planes=8, inplanes=planes*4=32,
    # stride=1, dilation=1, downsample=None.
    N, H, W = 2, 16, 16
    planes = 8
    inplanes = planes * 4          # expansion = 4
    dilation = 1

    key = jax.random.PRNGKey(0)
    ks = jax.random.split(key, 16)

    x = jax.random.normal(ks[0], (N, inplanes, H, W), jnp.float32)

    # Conv weights (matmul-friendly layouts; HWIO for the 3x3).
    w1 = jax.random.normal(ks[1], (inplanes, planes), jnp.float32) * 0.1      # 1x1: (Cin, P)
    w2 = jax.random.normal(ks[2], (3, 3, planes, planes), jnp.float32) * 0.1  # 3x3: HWIO
    w3 = jax.random.normal(ks[3], (planes, inplanes), jnp.float32) * 0.1      # 1x1: (P, 4P)

    # BatchNorm (eval mode, running statistics) folded into scale/bias.
    def bn_params(kg, kb, km, kv, c):
        gamma = 1.0 + 0.1 * jax.random.normal(kg, (c,), jnp.float32)
        beta = 0.1 * jax.random.normal(kb, (c,), jnp.float32)
        mean = 0.1 * jax.random.normal(km, (c,), jnp.float32)
        var = jnp.abs(jax.random.normal(kv, (c,), jnp.float32)) + 0.5
        return _fold_bn(gamma, beta, mean, var)

    s1, b1 = bn_params(ks[4], ks[5], ks[6], ks[7], planes)
    s2, b2 = bn_params(ks[8], ks[9], ks[10], ks[11], planes)
    s3, b3 = bn_params(ks[12], ks[13], ks[14], ks[15], inplanes)

    params = (w1, s1, b1, w2, s2, b2, w3, s3, b3)

    fwd = jax.jit(lambda xx, pp: bottleneck_pallas(xx, pp, dilation=dilation,
                                                   row_tile=8))
    out = jax.block_until_ready(fwd(x, params))

    ref = _reference(x, params, dilation)
    assert out.shape == (N, inplanes, H, W)
    # bf16 MXU inputs with f32 accumulation vs. an all-f32 reference.
    assert jnp.allclose(out, ref, atol=3e-2, rtol=3e-2), "mismatch vs reference"

    print("KERNEL_OK")
</pallas_src>

<mosaic_0001>
module attributes {stable_mosaic.version = 11 : i64} {
  func.func @_bottleneck_kernel(%arg0: i32, %arg1: i32, %arg2: memref<1x8x18x128xf32, #tpu.memory_space<vmem>>, %arg3: memref<1x2x18x128xf32, #tpu.memory_space<vmem>>, %arg4: memref<128x128xbf16, #tpu.memory_space<vmem>>, %arg5: memref<1x128xf32, #tpu.memory_space<vmem>>, %arg6: memref<1x128xf32, #tpu.memory_space<vmem>>, %arg7: memref<3x3x128x128xbf16, #tpu.memory_space<vmem>>, %arg8: memref<1x128xf32, #tpu.memory_space<vmem>>, %arg9: memref<1x128xf32, #tpu.memory_space<vmem>>, %arg10: memref<128x128xbf16, #tpu.memory_space<vmem>>, %arg11: memref<1x128xf32, #tpu.memory_space<vmem>>, %arg12: memref<1x128xf32, #tpu.memory_space<vmem>>, %arg13: memref<1x8x16x128xf32, #tpu.memory_space<vmem>>, %arg14: memref<10x18x128xbf16, #tpu.memory_space<vmem>>) attributes {dimension_semantics = [#tpu.dimension_semantics<parallel>, #tpu.dimension_semantics<parallel>], iteration_bounds = array<i64: 2, 2>, scalar_prefetch = 0 : i64, scratch_operands = 1 : i64, tpu.core_type = #tpu.core_type<tc>, window_params = [{transform_indices = @transform_0, window_bounds = array<i64: 1, 8, 18, 128>}, {transform_indices = @transform_1, window_bounds = array<i64: 1, 2, 18, 128>}, {pipeline_mode = #tpu.pipeline_mode<synchronous>, transform_indices = @transform_2, window_bounds = array<i64: 128, 128>}, {pipeline_mode = #tpu.pipeline_mode<synchronous>, transform_indices = @transform_3, window_bounds = array<i64: 1, 128>}, {pipeline_mode = #tpu.pipeline_mode<synchronous>, transform_indices = @transform_4, window_bounds = array<i64: 1, 128>}, {pipeline_mode = #tpu.pipeline_mode<synchronous>, transform_indices = @transform_5, window_bounds = array<i64: 3, 3, 128, 128>}, {pipeline_mode = #tpu.pipeline_mode<synchronous>, transform_indices = @transform_6, window_bounds = array<i64: 1, 128>}, {pipeline_mode = #tpu.pipeline_mode<synchronous>, transform_indices = @transform_7, window_bounds = array<i64: 1, 128>}, {pipeline_mode = #tpu.pipeline_mode<synchronous>, transform_indices = @transform_8, window_bounds = array<i64: 128, 128>}, {pipeline_mode = #tpu.pipeline_mode<synchronous>, transform_indices = @transform_9, window_bounds = array<i64: 1, 128>}, {pipeline_mode = #tpu.pipeline_mode<synchronous>, transform_indices = @transform_10, window_bounds = array<i64: 1, 128>}, {transform_indices = @transform_11, window_bounds = array<i64: 1, 8, 16, 128>}]} {
    %c0 = arith.constant 0 : index
    %c0_0 = arith.constant 0 : index
    %c0_1 = arith.constant 0 : index
    %c0_2 = arith.constant 0 : index
    %0 = vector.load %arg2[%c0, %c0_0, %c0_1, %c0_2] : memref<1x8x18x128xf32, #tpu.memory_space<vmem>>, vector<1x8x18x128xf32>
    %1 = vector.shape_cast %0 : vector<1x8x18x128xf32> to vector<8x18x128xf32>
    %c0_3 = arith.constant 0 : index
    %c0_4 = arith.constant 0 : index
    %c0_5 = arith.constant 0 : index
    %c0_6 = arith.constant 0 : index
    %2 = vector.load %arg3[%c0_3, %c0_4, %c0_5, %c0_6] : memref<1x2x18x128xf32, #tpu.memory_space<vmem>>, vector<1x2x18x128xf32>
    %3 = vector.shape_cast %2 : vector<1x2x18x128xf32> to vector<2x18x128xf32>
    %4 = vector.extract_strided_slice %3 {offsets = [0, 0, 0], sizes = [1, 18, 128], strides = [1, 1, 1]} : vector<2x18x128xf32> to vector<1x18x128xf32>
    %5 = vector.extract_strided_slice %3 {offsets = [1, 0, 0], sizes = [1, 18, 128], strides = [1, 1, 1]} : vector<2x18x128xf32> to vector<1x18x128xf32>
    %6 = tpu.concatenate %4, %1, %5 in 0 : vector<1x18x128xf32>, vector<8x18x128xf32>, vector<1x18x128xf32> -> vector<10x18x128xf32>
    %7 = vector.shape_cast %6 : vector<10x18x128xf32> to vector<180x128xf32>
    %8 = arith.truncf %7 : vector<180x128xf32> to vector<180x128xbf16>
    %c0_7 = arith.constant 0 : index
    %c0_8 = arith.constant 0 : index
    %9 = vector.load %arg4[%c0_7, %c0_8] : memref<128x128xbf16, #tpu.memory_space<vmem>>, vector<128x128xbf16>
    %cst = arith.constant dense<0.000000e+00> : vector<180x128xf32>
    %10 = tpu.matmul %8, %9, %cst {dimension_numbers = #tpu.dot_dimension_numbers<[1], [0], [0], [1], [0, 0, 1, 1], [], []>} : vector<180x128xbf16>, vector<128x128xbf16>, vector<180x128xf32> -> vector<180x128xf32>
    %c0_9 = arith.constant 0 : index
    %c0_10 = arith.constant 0 : index
    %11 = vector.load %arg5[%c0_9, %c0_10] : memref<1x128xf32, #tpu.memory_space<vmem>>, vector<1x128xf32>
    %12 = vector.broadcast %11 : vector<1x128xf32> to vector<180x128xf32>
    %13 = arith.mulf %10, %12 : vector<180x128xf32>
    %c0_11 = arith.constant 0 : index
    %c0_12 = arith.constant 0 : index
    %14 = vector.load %arg6[%c0_11, %c0_12] : memref<1x128xf32, #tpu.memory_space<vmem>>, vector<1x128xf32>
    %15 = vector.broadcast %14 : vector<1x128xf32> to vector<180x128xf32>
    %16 = arith.addf %13, %15 : vector<180x128xf32>
    %cst_13 = arith.constant 0.000000e+00 : f32
    %17 = vector.broadcast %cst_13 : f32 to vector<180x128xf32>
    %18 = arith.maximumf %16, %17 : vector<180x128xf32>
    %19 = vector.shape_cast %18 : vector<180x128xf32> to vector<10x18x128xf32>
    %c8_i32 = arith.constant 8 : i32
    %20 = arith.muli %arg1, %c8_i32 : i32
    %c1_i32 = arith.constant 1 : i32
    %21 = arith.subi %20, %c1_i32 : i32
    %22 = tpu.iota {dimensions = array<i32: 0>} : vector<10x18x128xi32>
    %23 = vector.broadcast %21 : i32 to vector<10x18x128xi32>
    %24 = arith.addi %23, %22 : vector<10x18x128xi32>
    %25 = tpu.iota {dimensions = array<i32: 1>} : vector<10x18x128xi32>
    %c0_i32 = arith.constant 0 : i32
    %26 = vector.broadcast %c0_i32 : i32 to vector<10x18x128xi32>
    %27 = arith.cmpi sge, %24, %26 : vector<10x18x128xi32>
    %c16_i32 = arith.constant 16 : i32
    %28 = vector.broadcast %c16_i32 : i32 to vector<10x18x128xi32>
    %29 = arith.cmpi slt, %24, %28 : vector<10x18x128xi32>
    %30 = arith.andi %27, %29 : vector<10x18x128xi1>
    %c1_i32_14 = arith.constant 1 : i32
    %31 = vector.broadcast %c1_i32_14 : i32 to vector<10x18x128xi32>
    %32 = arith.cmpi sge, %25, %31 : vector<10x18x128xi32>
    %33 = arith.andi %30, %32 : vector<10x18x128xi1>
    %c17_i32 = arith.constant 17 : i32
    %34 = vector.broadcast %c17_i32 : i32 to vector<10x18x128xi32>
    %35 = arith.cmpi slt, %25, %34 : vector<10x18x128xi32>
    %36 = arith.andi %33, %35 : vector<10x18x128xi1>
    %cst_15 = arith.constant 0.000000e+00 : f32
    %37 = vector.broadcast %cst_15 : f32 to vector<10x18x128xf32>
    %38 = arith.select %36, %19, %37 : vector<10x18x128xi1>, vector<10x18x128xf32>
    %39 = arith.truncf %38 : vector<10x18x128xf32> to vector<10x18x128xbf16>
    %c0_16 = arith.constant 0 : index
    %c0_17 = arith.constant 0 : index
    %c0_18 = arith.constant 0 : index
    %40 = vector.load %arg14[%c0_16, %c0_17, %c0_18] : memref<10x18x128xbf16, #tpu.memory_space<vmem>>, vector<10x18x128xbf16>
    tpu.vector_store %arg14[%c0_16, %c0_17, %c0_18], %39 {strides = array<i32>} : memref<10x18x128xbf16, #tpu.memory_space<vmem>>, vector<10x18x128xbf16>,
    %cst_19 = arith.constant 0.000000e+00 : f32
    %41 = vector.broadcast %cst_19 : f32 to vector<128x128xf32>
    %c0_20 = arith.constant 0 : index
    %c0_21 = arith.constant 0 : index
    %c0_22 = arith.constant 0 : index
    %42 = vector.load %arg14[%c0_20, %c0_21, %c0_22] : memref<10x18x128xbf16, #tpu.memory_space<vmem>>, vector<8x16x128xbf16>
    %43 = vector.shape_cast %42 : vector<8x16x128xbf16> to vector<128x128xbf16>
    %c0_23 = arith.constant 0 : index
    %c0_24 = arith.constant 0 : index
    %c0_25 = arith.constant 0 : index
    %c0_26 = arith.constant 0 : index
    %44 = vector.load %arg7[%c0_23, %c0_24, %c0_25, %c0_26] : memref<3x3x128x128xbf16, #tpu.memory_space<vmem>>, vector<1x1x128x128xbf16>
    %45 = vector.shape_cast %44 : vector<1x1x128x128xbf16> to vector<128x128xbf16>
    %cst_27 = arith.constant dense<0.000000e+00> : vector<128x128xf32>
    %46 = tpu.matmul %43, %45, %cst_27 {dimension_numbers = #tpu.dot_dimension_numbers<[1], [0], [0], [1], [0, 0, 1, 1], [], []>} : vector<128x128xbf16>, vector<128x128xbf16>, vector<128x128xf32> -> vector<128x128xf32>
    %47 = arith.addf %41, %46 : vector<128x128xf32>
    %c0_28 = arith.constant 0 : index
    %c1 = arith.constant 1 : index
    %c0_29 = arith.constant 0 : index
    %48 = vector.load %arg14[%c0_28, %c1, %c0_29] : memref<10x18x128xbf16, #tpu.memory_space<vmem>>, vector<8x16x128xbf16>
    %49 = vector.shape_cast %48 : vector<8x16x128xbf16> to vector<128x128xbf16>
    %c0_30 = arith.constant 0 : index
    %c1_31 = arith.constant 1 : index
    %c0_32 = arith.constant 0 : index
    %c0_33 = arith.constant 0 : index
    %50 = vector.load %arg7[%c0_30, %c1_31, %c0_32, %c0_33] : memref<3x3x128x128xbf16, #tpu.memory_space<vmem>>, vector<1x1x128x128xbf16>
    %51 = vector.shape_cast %50 : vector<1x1x128x128xbf16> to vector<128x128xbf16>
    %cst_34 = arith.constant dense<0.000000e+00> : vector<128x128xf32>
    %52 = tpu.matmul %49, %51, %cst_34 {dimension_numbers = #tpu.dot_dimension_numbers<[1], [0], [0], [1], [0, 0, 1, 1], [], []>} : vector<128x128xbf16>, vector<128x128xbf16>, vector<128x128xf32> -> vector<128x128xf32>
    %53 = arith.addf %47, %52 : vector<128x128xf32>
    %c0_35 = arith.constant 0 : index
    %c2 = arith.constant 2 : index
    %c0_36 = arith.constant 0 : index
    %54 = vector.load %arg14[%c0_35, %c2, %c0_36] : memref<10x18x128xbf16, #tpu.memory_space<vmem>>, vector<8x16x128xbf16>
    %55 = vector.shape_cast %54 : vector<8x16x128xbf16> to vector<128x128xbf16>
    %c0_37 = arith.constant 0 : index
    %c2_38 = arith.constant 2 : index
    %c0_39 = arith.constant 0 : index
    %c0_40 = arith.constant 0 : index
    %56 = vector.load %arg7[%c0_37, %c2_38, %c0_39, %c0_40] : memref<3x3x128x128xbf16, #tpu.memory_space<vmem>>, vector<1x1x128x128xbf16>
    %57 = vector.shape_cast %56 : vector<1x1x128x128xbf16> to vector<128x128xbf16>
    %cst_41 = arith.constant dense<0.000000e+00> : vector<128x128xf32>
    %58 = tpu.matmul %55, %57, %cst_41 {dimension_numbers = #tpu.dot_dimension_numbers<[1], [0], [0], [1], [0, 0, 1, 1], [], []>} : vector<128x128xbf16>, vector<128x128xbf16>, vector<128x128xf32> -> vector<128x128xf32>
    %59 = arith.addf %53, %58 : vector<128x128xf32>
    %c1_42 = arith.constant 1 : index
    %c0_43 = arith.constant 0 : index
    %c0_44 = arith.constant 0 : index
    %60 = vector.load %arg14[%c1_42, %c0_43, %c0_44] : memref<10x18x128xbf16, #tpu.memory_space<vmem>>, vector<8x16x128xbf16>
    %61 = vector.shape_cast %60 : vector<8x16x128xbf16> to vector<128x128xbf16>
    %c1_45 = arith.constant 1 : index
    %c0_46 = arith.constant 0 : index
    %c0_47 = arith.constant 0 : index
    %c0_48 = arith.constant 0 : index
    %62 = vector.load %arg7[%c1_45, %c0_46, %c0_47, %c0_48] : memref<3x3x128x128xbf16, #tpu.memory_space<vmem>>, vector<1x1x128x128xbf16>
    %63 = vector.shape_cast %62 : vector<1x1x128x128xbf16> to vector<128x128xbf16>
    %cst_49 = arith.constant dense<0.000000e+00> : vector<128x128xf32>
    %64 = tpu.matmul %61, %63, %cst_49 {dimension_numbers = #tpu.dot_dimension_numbers<[1], [0], [0], [1], [0, 0, 1, 1], [], []>} : vector<128x128xbf16>, vector<128x128xbf16>, vector<128x128xf32> -> vector<128x128xf32>
    %65 = arith.addf %59, %64 : vector<128x128xf32>
    %c1_50 = arith.constant 1 : index
    %c1_51 = arith.constant 1 : index
    %c0_52 = arith.constant 0 : index
    %66 = vector.load %arg14[%c1_50, %c1_51, %c0_52] : memref<10x18x128xbf16, #tpu.memory_space<vmem>>, vector<8x16x128xbf16>
    %67 = vector.shape_cast %66 : vector<8x16x128xbf16> to vector<128x128xbf16>
    %c1_53 = arith.constant 1 : index
    %c1_54 = arith.constant 1 : index
    %c0_55 = arith.constant 0 : index
    %c0_56 = arith.constant 0 : index
    %68 = vector.load %arg7[%c1_53, %c1_54, %c0_55, %c0_56] : memref<3x3x128x128xbf16, #tpu.memory_space<vmem>>, vector<1x1x128x128xbf16>
    %69 = vector.shape_cast %68 : vector<1x1x128x128xbf16> to vector<128x128xbf16>
    %cst_57 = arith.constant dense<0.000000e+00> : vector<128x128xf32>
    %70 = tpu.matmul %67, %69, %cst_57 {dimension_numbers = #tpu.dot_dimension_numbers<[1], [0], [0], [1], [0, 0, 1, 1], [], []>} : vector<128x128xbf16>, vector<128x128xbf16>, vector<128x128xf32> -> vector<128x128xf32>
    %71 = arith.addf %65, %70 : vector<128x128xf32>
    %c1_58 = arith.constant 1 : index
    %c2_59 = arith.constant 2 : index
    %c0_60 = arith.constant 0 : index
    %72 = vector.load %arg14[%c1_58, %c2_59, %c0_60] : memref<10x18x128xbf16, #tpu.memory_space<vmem>>, vector<8x16x128xbf16>
    %73 = vector.shape_cast %72 : vector<8x16x128xbf16> to vector<128x128xbf16>
    %c1_61 = arith.constant 1 : index
    %c2_62 = arith.constant 2 : index
    %c0_63 = arith.constant 0 : index
    %c0_64 = arith.constant 0 : index
    %74 = vector.load %arg7[%c1_61, %c2_62, %c0_63, %c0_64] : memref<3x3x128x128xbf16, #tpu.memory_space<vmem>>, vector<1x1x128x128xbf16>
    %75 = vector.shape_cast %74 : vector<1x1x128x128xbf16> to vector<128x128xbf16>
    %cst_65 = arith.constant dense<0.000000e+00> : vector<128x128xf32>
    %76 = tpu.matmul %73, %75, %cst_65 {dimension_numbers = #tpu.dot_dimension_numbers<[1], [0], [0], [1], [0, 0, 1, 1], [], []>} : vector<128x128xbf16>, vector<128x128xbf16>, vector<128x128xf32> -> vector<128x128xf32>
    %77 = arith.addf %71, %76 : vector<128x128xf32>
    %c2_66 = arith.constant 2 : index
    %c0_67 = arith.constant 0 : index
    %c0_68 = arith.constant 0 : index
    %78 = vector.load %arg14[%c2_66, %c0_67, %c0_68] : memref<10x18x128xbf16, #tpu.memory_space<vmem>>, vector<8x16x128xbf16>
    %79 = vector.shape_cast %78 : vector<8x16x128xbf16> to vector<128x128xbf16>
    %c2_69 = arith.constant 2 : index
    %c0_70 = arith.constant 0 : index
    %c0_71 = arith.constant 0 : index
    %c0_72 = arith.constant 0 : index
    %80 = vector.load %arg7[%c2_69, %c0_70, %c0_71, %c0_72] : memref<3x3x128x128xbf16, #tpu.memory_space<vmem>>, vector<1x1x128x128xbf16>
    %81 = vector.shape_cast %80 : vector<1x1x128x128xbf16> to vector<128x128xbf16>
    %cst_73 = arith.constant dense<0.000000e+00> : vector<128x128xf32>
    %82 = tpu.matmul %79, %81, %cst_73 {dimension_numbers = #tpu.dot_dimension_numbers<[1], [0], [0], [1], [0, 0, 1, 1], [], []>} : vector<128x128xbf16>, vector<128x128xbf16>, vector<128x128xf32> -> vector<128x128xf32>
    %83 = arith.addf %77, %82 : vector<128x128xf32>
    %c2_74 = arith.constant 2 : index
    %c1_75 = arith.constant 1 : index
    %c0_76 = arith.constant 0 : index
    %84 = vector.load %arg14[%c2_74, %c1_75, %c0_76] : memref<10x18x128xbf16, #tpu.memory_space<vmem>>, vector<8x16x128xbf16>
    %85 = vector.shape_cast %84 : vector<8x16x128xbf16> to vector<128x128xbf16>
    %c2_77 = arith.constant 2 : index
    %c1_78 = arith.constant 1 : index
    %c0_79 = arith.constant 0 : index
    %c0_80 = arith.constant 0 : index
    %86 = vector.load %arg7[%c2_77, %c1_78, %c0_79, %c0_80] : memref<3x3x128x128xbf16, #tpu.memory_space<vmem>>, vector<1x1x128x128xbf16>
    %87 = vector.shape_cast %86 : vector<1x1x128x128xbf16> to vector<128x128xbf16>
    %cst_81 = arith.constant dense<0.000000e+00> : vector<128x128xf32>
    %88 = tpu.matmul %85, %87, %cst_81 {dimension_numbers = #tpu.dot_dimension_numbers<[1], [0], [0], [1], [0, 0, 1, 1], [], []>} : vector<128x128xbf16>, vector<128x128xbf16>, vector<128x128xf32> -> vector<128x128xf32>
    %89 = arith.addf %83, %88 : vector<128x128xf32>
    %c2_82 = arith.constant 2 : index
    %c2_83 = arith.constant 2 : index
    %c0_84 = arith.constant 0 : index
    %90 = vector.load %arg14[%c2_82, %c2_83, %c0_84] : memref<10x18x128xbf16, #tpu.memory_space<vmem>>, vector<8x16x128xbf16>
    %91 = vector.shape_cast %90 : vector<8x16x128xbf16> to vector<128x128xbf16>
    %c2_85 = arith.constant 2 : index
    %c2_86 = arith.constant 2 : index
    %c0_87 = arith.constant 0 : index
    %c0_88 = arith.constant 0 : index
    %92 = vector.load %arg7[%c2_85, %c2_86, %c0_87, %c0_88] : memref<3x3x128x128xbf16, #tpu.memory_space<vmem>>, vector<1x1x128x128xbf16>
    %93 = vector.shape_cast %92 : vector<1x1x128x128xbf16> to vector<128x128xbf16>
    %cst_89 = arith.constant dense<0.000000e+00> : vector<128x128xf32>
    %94 = tpu.matmul %91, %93, %cst_89 {dimension_numbers = #tpu.dot_dimension_numbers<[1], [0], [0], [1], [0, 0, 1, 1], [], []>} : vector<128x128xbf16>, vector<128x128xbf16>, vector<128x128xf32> -> vector<128x128xf32>
    %95 = arith.addf %89, %94 : vector<128x128xf32>
    %c0_90 = arith.constant 0 : index
    %c0_91 = arith.constant 0 : index
    %96 = vector.load %arg8[%c0_90, %c0_91] : memref<1x128xf32, #tpu.memory_space<vmem>>, vector<1x128xf32>
    %97 = vector.broadcast %96 : vector<1x128xf32> to vector<128x128xf32>
    %98 = arith.mulf %95, %97 : vector<128x128xf32>
    %c0_92 = arith.constant 0 : index
    %c0_93 = arith.constant 0 : index
    %99 = vector.load %arg9[%c0_92, %c0_93] : memref<1x128xf32, #tpu.memory_space<vmem>>, vector<1x128xf32>
    %100 = vector.broadcast %99 : vector<1x128xf32> to vector<128x128xf32>
    %101 = arith.addf %98, %100 : vector<128x128xf32>
    %cst_94 = arith.constant 0.000000e+00 : f32
    %102 = vector.broadcast %cst_94 : f32 to vector<128x128xf32>
    %103 = arith.maximumf %101, %102 : vector<128x128xf32>
    %104 = arith.truncf %103 : vector<128x128xf32> to vector<128x128xbf16>
    %c0_95 = arith.constant 0 : index
    %c0_96 = arith.constant 0 : index
    %105 = vector.load %arg10[%c0_95, %c0_96] : memref<128x128xbf16, #tpu.memory_space<vmem>>, vector<128x128xbf16>
    %cst_97 = arith.constant dense<0.000000e+00> : vector<128x128xf32>
    %106 = tpu.matmul %104, %105, %cst_97 {dimension_numbers = #tpu.dot_dimension_numbers<[1], [0], [0], [1], [0, 0, 1, 1], [], []>} : vector<128x128xbf16>, vector<128x128xbf16>, vector<128x128xf32> -> vector<128x128xf32>
    %c0_98 = arith.constant 0 : index
    %c0_99 = arith.constant 0 : index
    %107 = vector.load %arg11[%c0_98, %c0_99] : memref<1x128xf32, #tpu.memory_space<vmem>>, vector<1x128xf32>
    %108 = vector.broadcast %107 : vector<1x128xf32> to vector<128x128xf32>
    %109 = arith.mulf %106, %108 : vector<128x128xf32>
    %c0_100 = arith.constant 0 : index
    %c0_101 = arith.constant 0 : index
    %110 = vector.load %arg12[%c0_100, %c0_101] : memref<1x128xf32, #tpu.memory_space<vmem>>, vector<1x128xf32>
    %111 = vector.broadcast %110 : vector<1x128xf32> to vector<128x128xf32>
    %112 = arith.addf %109, %111 : vector<128x128xf32>
    %c0_102 = arith.constant 0 : index
    %c0_103 = arith.constant 0 : index
    %c0_104 = arith.constant 0 : index
    %c0_105 = arith.constant 0 : index
    %113 = vector.load %arg2[%c0_102, %c0_103, %c0_104, %c0_105] : memref<1x8x18x128xf32, #tpu.memory_space<vmem>>, vector<1x8x18x128xf32>
    %114 = vector.shape_cast %113 : vector<1x8x18x128xf32> to vector<8x18x128xf32>
    %115 = vector.extract_strided_slice %114 {offsets = [0, 1, 0], sizes = [8, 16, 128], strides = [1, 1, 1]} : vector<8x18x128xf32> to vector<8x16x128xf32>
    %116 = vector.shape_cast %115 : vector<8x16x128xf32> to vector<128x128xf32>
    %117 = arith.addf %112, %116 : vector<128x128xf32>
    %cst_106 = arith.constant 0.000000e+00 : f32
    %118 = vector.broadcast %cst_106 : f32 to vector<128x128xf32>
    %119 = arith.maximumf %117, %118 : vector<128x128xf32>
    %120 = vector.shape_cast %119 : vector<128x128xf32> to vector<8x16x128xf32>
    %c0_107 = arith.constant 0 : index
    %c0_108 = arith.constant 0 : index
    %c0_109 = arith.constant 0 : index
    %c0_110 = arith.constant 0 : index
    %121 = vector.load %arg13[%c0_107, %c0_108, %c0_109, %c0_110] : memref<1x8x16x128xf32, #tpu.memory_space<vmem>>, vector<1x8x16x128xf32>
    %122 = vector.shape_cast %121 : vector<1x8x16x128xf32> to vector<8x16x128xf32>
    %123 = vector.shape_cast %120 : vector<8x16x128xf32> to vector<1x8x16x128xf32>
    tpu.vector_store %arg13[%c0_107, %c0_108, %c0_109, %c0_110], %123 {strides = array<i32>} : memref<1x8x16x128xf32, #tpu.memory_space<vmem>>, vector<1x8x16x128xf32>,
    return
  }
  func.func @transform_0(%arg0: i32, %arg1: i32) -> (i32, i32, i32, i32) {
    %c0_i32 = arith.constant 0 : i32
    %c0_i32_0 = arith.constant 0 : i32
    %c0_i32_1 = arith.constant 0 : i32
    return %arg0, %arg1, %c0_i32, %c0_i32_0 : i32, i32, i32, i32
  }
  func.func @transform_1(%arg0: i32, %arg1: i32) -> (i32, i32, i32, i32) {
    %c2_i32 = arith.constant 2 : i32
    %0 = arith.muli %arg0, %c2_i32 : i32
    %1 = arith.addi %0, %arg1 : i32
    %c0_i32 = arith.constant 0 : i32
    %c0_i32_0 = arith.constant 0 : i32
    %c0_i32_1 = arith.constant 0 : i32
    %c0_i32_2 = arith.constant 0 : i32
    return %1, %c0_i32, %c0_i32_0, %c0_i32_1 : i32, i32, i32, i32
  }
  func.func @transform_2(%arg0: i32, %arg1: i32) -> (i32, i32) {
    %c0_i32 = arith.constant 0 : i32
    %c0_i32_0 = arith.constant 0 : i32
    %c0_i32_1 = arith.constant 0 : i32
    return %c0_i32, %c0_i32_0 : i32, i32
  }
  func.func @transform_3(%arg0: i32, %arg1: i32) -> (i32, i32) {
    %c0_i32 = arith.constant 0 : i32
    %c0_i32_0 = arith.constant 0 : i32
    %c0_i32_1 = arith.constant 0 : i32
    return %c0_i32, %c0_i32_0 : i32, i32
  }
  func.func @transform_4(%arg0: i32, %arg1: i32) -> (i32, i32) {
    %c0_i32 = arith.constant 0 : i32
    %c0_i32_0 = arith.constant 0 : i32
    %c0_i32_1 = arith.constant 0 : i32
    return %c0_i32, %c0_i32_0 : i32, i32
  }
  func.func @transform_5(%arg0: i32, %arg1: i32) -> (i32, i32, i32, i32) {
    %c0_i32 = arith.constant 0 : i32
    %c0_i32_0 = arith.constant 0 : i32
    %c0_i32_1 = arith.constant 0 : i32
    %c0_i32_2 = arith.constant 0 : i32
    %c0_i32_3 = arith.constant 0 : i32
    return %c0_i32, %c0_i32_0, %c0_i32_1, %c0_i32_2 : i32, i32, i32, i32
  }
  func.func @transform_6(%arg0: i32, %arg1: i32) -> (i32, i32) {
    %c0_i32 = arith.constant 0 : i32
    %c0_i32_0 = arith.constant 0 : i32
    %c0_i32_1 = arith.constant 0 : i32
    return %c0_i32, %c0_i32_0 : i32, i32
  }
  func.func @transform_7(%arg0: i32, %arg1: i32) -> (i32, i32) {
    %c0_i32 = arith.constant 0 : i32
    %c0_i32_0 = arith.constant 0 : i32
    %c0_i32_1 = arith.constant 0 : i32
    return %c0_i32, %c0_i32_0 : i32, i32
  }
  func.func @transform_8(%arg0: i32, %arg1: i32) -> (i32, i32) {
    %c0_i32 = arith.constant 0 : i32
    %c0_i32_0 = arith.constant 0 : i32
    %c0_i32_1 = arith.constant 0 : i32
    return %c0_i32, %c0_i32_0 : i32, i32
  }
  func.func @transform_9(%arg0: i32, %arg1: i32) -> (i32, i32) {
    %c0_i32 = arith.constant 0 : i32
    %c0_i32_0 = arith.constant 0 : i32
    %c0_i32_1 = arith.constant 0 : i32
    return %c0_i32, %c0_i32_0 : i32, i32
  }
  func.func @transform_10(%arg0: i32, %arg1: i32) -> (i32, i32) {
    %c0_i32 = arith.constant 0 : i32
    %c0_i32_0 = arith.constant 0 : i32
    %c0_i32_1 = arith.constant 0 : i32
    return %c0_i32, %c0_i32_0 : i32, i32
  }
  func.func @transform_11(%arg0: i32, %arg1: i32) -> (i32, i32, i32, i32) {
    %c0_i32 = arith.constant 0 : i32
    %c0_i32_0 = arith.constant 0 : i32
    %c0_i32_1 = arith.constant 0 : i32
    return %arg0, %arg1, %c0_i32, %c0_i32_0 : i32, i32, i32, i32
  }
}

</mosaic_0001>

<llo_original>
// kernel: _lambda_.1
$region0: #{_lambda_.1}
  #allocation0 [shape = 'u32[]', space=smem, size = 0x4, offset = 0x4, fixed_abs, tag = 'smem constant byte address 0x4 - core index']
  #allocation1 [shape = 'u32[144,128]{1,0:T(1,128)}', space=vmem, size = 0x12000, scoped, tag = 'internal scratch']
  #allocation2 [shape = 'bf16[10,18,128]{2,1,0:T(8,128)(2,1)}', space=vmem, size = 0xf000, scoped, tag = 'scratch operand']
  %s0 = inlined_call_operand.vmem [shape: f32[2,16,18,128], index: 0, kind: input, shape index: {}]
  %s1 = inlined_call_operand.vmem [shape: f32[4,2,18,128], index: 1, kind: input, shape index: {}]
  %s2 = inlined_call_operand.vmem [shape: bf16[128,128], index: 2, kind: input, shape index: {}]
  %s3 = inlined_call_operand.vmem [shape: f32[1,128], index: 3, kind: input, shape index: {}]
  %s4 = inlined_call_operand.vmem [shape: f32[1,128], index: 4, kind: input, shape index: {}]
  %s5 = inlined_call_operand.vmem [shape: bf16[3,3,128,128], index: 5, kind: input, shape index: {}]
  %s6 = inlined_call_operand.vmem [shape: f32[1,128], index: 6, kind: input, shape index: {}]
  %s7 = inlined_call_operand.vmem [shape: f32[1,128], index: 7, kind: input, shape index: {}]
  %s8 = inlined_call_operand.vmem [shape: bf16[128,128], index: 8, kind: input, shape index: {}]
  %s9 = inlined_call_operand.vmem [shape: f32[1,128], index: 9, kind: input, shape index: {}]
  %s10 = inlined_call_operand.vmem [shape: f32[1,128], index: 10, kind: input, shape index: {}]
  %s11 = inlined_call_operand.vmem [shape: f32[2,16,16,128], index: 11, kind: output, shape index: {}]
  %s12 = sld [smem:[#allocation0]]
  $region77: #{_lambda_.1} parent=0
    _
  %s14 = ssub.s32 1, %s12
  %s15 = scalar_select 0, %s14, %s12
  loop: start=0, step=1, limit=6
  $region2: #{_lambda_.1} parent=0 // loop_pre_header
    _
  $region3: #{_lambda_.1} parent=0 // loop_header
    %s17 = sphi 0, %s21
    %p18 = scmp.ge.s32.totalorder %s17, 6
    %s24 = sphi 0, %s36
    %s25 = sphi 0, %s32
    %s26 = sphi 0, %s24
    %s27 = sphi 0, %s25
    %s28 = sphi 0, %s26
    %s29 = sphi 0, %s27
    %s41 = sphi 0, %s43
    %s44 = sphi 0, %s41
    %s45 = sphi 0, %s44
    %s61 = sphi 0, %s45
    %s71 = sphi 0, %s73
    %s74 = sphi 0, %s71
    %s75 = sphi 0, %s74
    %s91 = sphi 0, %s75
    %s95 = sphi 0, %s95
    %s97 = sphi 0, %s95
    %s98 = sphi 0, %s97
    %s112 = sphi 0, %s98
    %s116 = sphi 0, %s116
    %s118 = sphi 0, %s116
    %s119 = sphi 0, %s118
    %s133 = sphi 0, %s119
    %s137 = sphi 0, %s137
    %s139 = sphi 0, %s137
    %s140 = sphi 0, %s139
    %s154 = sphi 0, %s140
    %s158 = sphi 0, %s158
    %s160 = sphi 0, %s158
    %s161 = sphi 0, %s160
    %s175 = sphi 0, %s161
    %s179 = sphi 0, %s179
    %s181 = sphi 0, %s179
    %s182 = sphi 0, %s181
    %s196 = sphi 0, %s182
    %s200 = sphi 0, %s200
    %s202 = sphi 0, %s200
    %s203 = sphi 0, %s202
    %s217 = sphi 0, %s203
    %s221 = sphi 0, %s221
    %s223 = sphi 0, %s221
    %s224 = sphi 0, %s223
    %s238 = sphi 0, %s224
    %s242 = sphi 0, %s242
    %s244 = sphi 0, %s242
    %s245 = sphi 0, %s244
    %s259 = sphi 0, %s245
    %s263 = sphi 0, %s263
    %s265 = sphi 0, %s263
    %s266 = sphi 0, %s265
    %s280 = sphi 0, %s266
    %s288 = sphi 0, %s290
    %s291 = sphi 0, %s288
    %s292 = sphi 0, %s291
    %s308 = sphi 0, %s292
  $region4: #{_lambda_.1} parent=0 // loop_header_branch
    %20 = sbr.rel (%p18) target = $region8
  $region5: #{_lambda_.1} parent=0 // loop_body
    %s22 = ssub.s32 %s17, 1
    %s23 = ssub.s32 %s17, 2
    %s30 = sadd.s32 1, %s25
    %p31 = scmp.ge.s32.totalorder %s30, 2
    %s32 = scalar_select %p31, 0, %s30
    %s33 = sadd.s32 1, %s24
    %s34 = scalar_select %p31, %s33, %s24
    %p35 = scmp.ge.s32.totalorder %s34, 2
    %s36 = scalar_select %p35, 0, %s34
    %s37 = ssub.s32 %s24, %s36
    %s38 = ssub.s32 %s25, %s32
    %s39 = sor.u32 %s37, %s38
    %p40 = scmp.eq.s32.totalorder %s39, 0
    %s42 = sadd.s32 %s41, 1
    %s43 = scalar_select %p40, %s41, %s42
    %p46 = pneg %p40
    %p47 = scmp.eq.s32.totalorder %s17, 3
    %p48 = por %p46, %p47
    %p49 = scmp.ne.s32.totalorder %s41, %s44
    %p50 = scmp.eq.s32.totalorder %s17, 0
    %p51 = por %p49, %p50
    %p52 = scmp.ne.s32.totalorder %s41, %s44
    %p53 = scmp.eq.s32.totalorder %s22, 3
    %p54 = por %p52, %p53
    %p55 = scmp.ne.s32.totalorder %s44, %s45
    %p56 = scmp.eq.s32.totalorder %s22, 0
    %p57 = por %p55, %p56
    %p58 = scmp.ne.s32.totalorder %s44, %s45
    %p59 = scmp.eq.s32.totalorder %s23, 3
    %p60 = por %p58, %p59
    %p62 = scmp.ne.s32.totalorder %s45, %s61
    %p63 = scmp.eq.s32.totalorder %s23, 0
    %p64 = por %p62, %p63
    %s65 = smul.u32 %s24, 2
    %s66 = sadd.s32 %s65, %s25
    %s67 = smul.u32 %s36, 2
    %s68 = sadd.s32 %s67, %s32
    %s69 = ssub.s32 %s66, %s68
    %p70 = scmp.eq.s32.totalorder %s69, 0
    %s72 = sadd.s32 %s71, 1
    %s73 = scalar_select %p70, %s71, %s72
    %p76 = pneg %p70
    %p77 = scmp.eq.s32.totalorder %s17, 3
    %p78 = por %p76, %p77
    %p79 = scmp.ne.s32.totalorder %s71, %s74
    %p80 = scmp.eq.s32.totalorder %s17, 0
    %p81 = por %p79, %p80
    %p82 = scmp.ne.s32.totalorder %s71, %s74
    %p83 = scmp.eq.s32.totalorder %s22, 3
    %p84 = por %p82, %p83
    %p85 = scmp.ne.s32.totalorder %s74, %s75
    %p86 = scmp.eq.s32.totalorder %s22, 0
    %p87 = por %p85, %p86
    %p88 = scmp.ne.s32.totalorder %s74, %s75
    %p89 = scmp.eq.s32.totalorder %s23, 3
    %p90 = por %p88, %p89
    %p92 = scmp.ne.s32.totalorder %s75, %s91
    %p93 = scmp.eq.s32.totalorder %s23, 0
    %p94 = por %p92, %p93
    %s96 = sadd.s32 %s95, 1
    %p99 = scmp.eq.s32.totalorder %s17, 3
    %p100 = scmp.ne.s32.totalorder %s95, %s97
    %p101 = scmp.eq.s32.totalorder %s17, 0
    %p102 = por %p100, %p101
    %p103 = scmp.ne.s32.totalorder %s95, %s97
    %p104 = scmp.eq.s32.totalorder %s22, 3
    %p105 = por %p103, %p104
    %p106 = scmp.ne.s32.totalorder %s97, %s98
    %p107 = scmp.eq.s32.totalorder %s22, 0
    %p108 = por %p106, %p107
    %p109 = scmp.ne.s32.totalorder %s97, %s98
    %p110 = scmp.eq.s32.totalorder %s23, 3
    %p111 = por %p109, %p110
    %p113 = scmp.ne.s32.totalorder %s98, %s112
    %p114 = scmp.eq.s32.totalorder %s23, 0
    %p115 = por %p113, %p114
    %s117 = sadd.s32 %s116, 1
    %p120 = scmp.eq.s32.totalorder %s17, 3
    %p121 = scmp.ne.s32.totalorder %s116, %s118
    %p122 = scmp.eq.s32.totalorder %s17, 0
    %p123 = por %p121, %p122
    %p124 = scmp.ne.s32.totalorder %s116, %s118
    %p125 = scmp.eq.s32.totalorder %s22, 3
    %p126 = por %p124, %p125
    %p127 = scmp.ne.s32.totalorder %s118, %s119
    %p128 = scmp.eq.s32.totalorder %s22, 0
    %p129 = por %p127, %p128
    %p130 = scmp.ne.s32.totalorder %s118, %s119
    %p131 = scmp.eq.s32.totalorder %s23, 3
    %p132 = por %p130, %p131
    %p134 = scmp.ne.s32.totalorder %s119, %s133
    %p135 = scmp.eq.s32.totalorder %s23, 0
    %p136 = por %p134, %p135
    %s138 = sadd.s32 %s137, 1
    %p141 = scmp.eq.s32.totalorder %s17, 3
    %p142 = scmp.ne.s32.totalorder %s137, %s139
    %p143 = scmp.eq.s32.totalorder %s17, 0
    %p144 = por %p142, %p143
    %p145 = scmp.ne.s32.totalorder %s137, %s139
    %p146 = scmp.eq.s32.totalorder %s22, 3
    %p147 = por %p145, %p146
    %p148 = scmp.ne.s32.totalorder %s139, %s140
    %p149 = scmp.eq.s32.totalorder %s22, 0
    %p150 = por %p148, %p149
    %p151 = scmp.ne.s32.totalorder %s139, %s140
    %p152 = scmp.eq.s32.totalorder %s23, 3
    %p153 = por %p151, %p152
    %p155 = scmp.ne.s32.totalorder %s140, %s154
    %p156 = scmp.eq.s32.totalorder %s23, 0
    %p157 = por %p155, %p156
    %s159 = sadd.s32 %s158, 1
    %p162 = scmp.eq.s32.totalorder %s17, 3
    %p163 = scmp.ne.s32.totalorder %s158, %s160
    %p164 = scmp.eq.s32.totalorder %s17, 0
    %p165 = por %p163, %p164
    %p166 = scmp.ne.s32.totalorder %s158, %s160
    %p167 = scmp.eq.s32.totalorder %s22, 3
    %p168 = por %p166, %p167
    %p169 = scmp.ne.s32.totalorder %s160, %s161
    %p170 = scmp.eq.s32.totalorder %s22, 0
    %p171 = por %p169, %p170
    %p172 = scmp.ne.s32.totalorder %s160, %s161
    %p173 = scmp.eq.s32.totalorder %s23, 3
    %p174 = por %p172, %p173
    %p176 = scmp.ne.s32.totalorder %s161, %s175
    %p177 = scmp.eq.s32.totalorder %s23, 0
    %p178 = por %p176, %p177
    %s180 = sadd.s32 %s179, 1
    %p183 = scmp.eq.s32.totalorder %s17, 3
    %p184 = scmp.ne.s32.totalorder %s179, %s181
    %p185 = scmp.eq.s32.totalorder %s17, 0
    %p186 = por %p184, %p185
    %p187 = scmp.ne.s32.totalorder %s179, %s181
    %p188 = scmp.eq.s32.totalorder %s22, 3
    %p189 = por %p187, %p188
    %p190 = scmp.ne.s32.totalorder %s181, %s182
    %p191 = scmp.eq.s32.totalorder %s22, 0
    %p192 = por %p190, %p191
    %p193 = scmp.ne.s32.totalorder %s181, %s182
    %p194 = scmp.eq.s32.totalorder %s23, 3
    %p195 = por %p193, %p194
    %p197 = scmp.ne.s32.totalorder %s182, %s196
    %p198 = scmp.eq.s32.totalorder %s23, 0
    %p199 = por %p197, %p198
    %s201 = sadd.s32 %s200, 1
    %p204 = scmp.eq.s32.totalorder %s17, 3
    %p205 = scmp.ne.s32.totalorder %s200, %s202
    %p206 = scmp.eq.s32.totalorder %s17, 0
    %p207 = por %p205, %p206
    %p208 = scmp.ne.s32.totalorder %s200, %s202
    %p209 = scmp.eq.s32.totalorder %s22, 3
    %p210 = por %p208, %p209
    %p211 = scmp.ne.s32.totalorder %s202, %s203
    %p212 = scmp.eq.s32.totalorder %s22, 0
    %p213 = por %p211, %p212
    %p214 = scmp.ne.s32.totalorder %s202, %s203
    %p215 = scmp.eq.s32.totalorder %s23, 3
    %p216 = por %p214, %p215
    %p218 = scmp.ne.s32.totalorder %s203, %s217
    %p219 = scmp.eq.s32.totalorder %s23, 0
    %p220 = por %p218, %p219
    %s222 = sadd.s32 %s221, 1
    %p225 = scmp.eq.s32.totalorder %s17, 3
    %p226 = scmp.ne.s32.totalorder %s221, %s223
    %p227 = scmp.eq.s32.totalorder %s17, 0
    %p228 = por %p226, %p227
    %p229 = scmp.ne.s32.totalorder %s221, %s223
    %p230 = scmp.eq.s32.totalorder %s22, 3
    %p231 = por %p229, %p230
    %p232 = scmp.ne.s32.totalorder %s223, %s224
    %p233 = scmp.eq.s32.totalorder %s22, 0
    %p234 = por %p232, %p233
    %p235 = scmp.ne.s32.totalorder %s223, %s224
    %p236 = scmp.eq.s32.totalorder %s23, 3
    %p237 = por %p235, %p236
    %p239 = scmp.ne.s32.totalorder %s224, %s238
    %p240 = scmp.eq.s32.totalorder %s23, 0
    %p241 = por %p239, %p240
    %s243 = sadd.s32 %s242, 1
    %p246 = scmp.eq.s32.totalorder %s17, 3
    %p247 = scmp.ne.s32.totalorder %s242, %s244
    %p248 = scmp.eq.s32.totalorder %s17, 0
    %p249 = por %p247, %p248
    %p250 = scmp.ne.s32.totalorder %s242, %s244
    %p251 = scmp.eq.s32.totalorder %s22, 3
    %p252 = por %p250, %p251
    %p253 = scmp.ne.s32.totalorder %s244, %s245
    %p254 = scmp.eq.s32.totalorder %s22, 0
    %p255 = por %p253, %p254
    %p256 = scmp.ne.s32.totalorder %s244, %s245
    %p257 = scmp.eq.s32.totalorder %s23, 3
    %p258 = por %p256, %p257
    %p260 = scmp.ne.s32.totalorder %s245, %s259
    %p261 = scmp.eq.s32.totalorder %s23, 0
    %p262 = por %p260, %p261
    %s264 = sadd.s32 %s263, 1
    %p267 = scmp.eq.s32.totalorder %s17, 3
    %p268 = scmp.ne.s32.totalorder %s263, %s265
    %p269 = scmp.eq.s32.totalorder %s17, 0
    %p270 = por %p268, %p269
    %p271 = scmp.ne.s32.totalorder %s263, %s265
    %p272 = scmp.eq.s32.totalorder %s22, 3
    %p273 = por %p271, %p272
    %p274 = scmp.ne.s32.totalorder %s265, %s266
    %p275 = scmp.eq.s32.totalorder %s22, 0
    %p276 = por %p274, %p275
    %p277 = scmp.ne.s32.totalorder %s265, %s266
    %p278 = scmp.eq.s32.totalorder %s23, 3
    %p279 = por %p277, %p278
    %p281 = scmp.ne.s32.totalorder %s266, %s280
    %p282 = scmp.eq.s32.totalorder %s23, 0
    %p283 = por %p281, %p282
    %s284 = ssub.s32 %s24, %s36
    %s285 = ssub.s32 %s25, %s32
    %s286 = sor.u32 %s284, %s285
    %p287 = scmp.eq.s32.totalorder %s286, 0
    %s289 = sadd.s32 %s288, 1
    %s290 = scalar_select %p287, %s288, %s289
    %p293 = pneg %p287
    %p294 = scmp.eq.s32.totalorder %s17, 3
    %p295 = por %p293, %p294
    %p296 = scmp.ne.s32.totalorder %s288, %s291
    %p297 = scmp.eq.s32.totalorder %s17, 0
    %p298 = por %p296, %p297
    %p299 = scmp.ne.s32.totalorder %s288, %s291
    %p300 = scmp.eq.s32.totalorder %s22, 3
    %p301 = por %p299, %p300
    %p302 = scmp.ne.s32.totalorder %s291, %s292
    %p303 = scmp.eq.s32.totalorder %s22, 0
    %p304 = por %p302, %p303
    %p305 = scmp.ne.s32.totalorder %s291, %s292
    %p306 = scmp.eq.s32.totalorder %s23, 3
    %p307 = por %p305, %p306
    %p309 = scmp.ne.s32.totalorder %s292, %s308
    %p310 = scmp.eq.s32.totalorder %s23, 0
    %p311 = por %p309, %p310
    %p312 = scmp.le.s32.totalorder 1, %s17
    %p313 = scmp.lt.s32.totalorder %s17, 5
    %p314 = pnand %p312, %p313
    %p315 = pneg %p314
    // Predicated region
    $region9: #{_lambda_.1} parent=5 // pred_check
      _
    $region10: #{_lambda_.1} parent=5 // pred_check_branch
      %317 = sbr.rel (%p314) target = $region12
    $region11: #{_lambda_.1} parent=5 // pred_region
      %s318 = ssub.s32 %s17, 1
      // Predicated region
      $region13: #{_lambda_.1} parent=11 // pred_check
        %p319 = pneg %p108
      $region14: #{_lambda_.1} parent=11 // pred_check_branch
        %321 = sbr.rel (%p319) target = $region16
      $region15: #{_lambda_.1} parent=11 // pred_region
        _
      $region16: #{_lambda_.1} parent=11 // pred_fallthru
        _
      // Predicated region
      $region17: #{_lambda_.1} parent=11 // pred_check
        %p322 = pneg %p129
      $region18: #{_lambda_.1} parent=11 // pred_check_branch
        %324 = sbr.rel (%p322) target = $region20
      $region19: #{_lambda_.1} parent=11 // pred_region
        _
      $region20: #{_lambda_.1} parent=11 // pred_fallthru
        _
      // Predicated region
      $region21: #{_lambda_.1} parent=11 // pred_check
        %p325 = pneg %p150
      $region22: #{_lambda_.1} parent=11 // pred_check_branch
        %327 = sbr.rel (%p325) target = $region24
      $region23: #{_lambda_.1} parent=11 // pred_region
        _
      $region24: #{_lambda_.1} parent=11 // pred_fallthru
        _
      // Predicated region
      $region25: #{_lambda_.1} parent=11 // pred_check
        %p328 = pneg %p171
      $region26: #{_lambda_.1} parent=11 // pred_check_branch
        %330 = sbr.rel (%p328) target = $region28
      $region27: #{_lambda_.1} parent=11 // pred_region
        _
      $region28: #{_lambda_.1} parent=11 // pred_fallthru
        _
      // Predicated region
      $region29: #{_lambda_.1} parent=11 // pred_check
        %p331 = pneg %p192
      $region30: #{_lambda_.1} parent=11 // pred_check_branch
        %333 = sbr.rel (%p331) target = $region32
      $region31: #{_lambda_.1} parent=11 // pred_region
        _
      $region32: #{_lambda_.1} parent=11 // pred_fallthru
        _
      // Predicated region
      $region33: #{_lambda_.1} parent=11 // pred_check
        %p334 = pneg %p213
      $region34: #{_lambda_.1} parent=11 // pred_check_branch
        %336 = sbr.rel (%p334) target = $region36
      $region35: #{_lambda_.1} parent=11 // pred_region
        _
      $region36: #{_lambda_.1} parent=11 // pred_fallthru
        _
      // Predicated region
      $region37: #{_lambda_.1} parent=11 // pred_check
        %p337 = pneg %p234
      $region38: #{_lambda_.1} parent=11 // pred_check_branch
        %339 = sbr.rel (%p337) target = $region40
      $region39: #{_lambda_.1} parent=11 // pred_region
        _
      $region40: #{_lambda_.1} parent=11 // pred_fallthru
        _
      // Predicated region
      $region41: #{_lambda_.1} parent=11 // pred_check
        %p340 = pneg %p255
      $region42: #{_lambda_.1} parent=11 // pred_check_branch
        %342 = sbr.rel (%p340) target = $region44
      $region43: #{_lambda_.1} parent=11 // pred_region
        _
      $region44: #{_lambda_.1} parent=11 // pred_fallthru
        _
      // Predicated region
      $region45: #{_lambda_.1} parent=11 // pred_check
        %p343 = pneg %p276
      $region46: #{_lambda_.1} parent=11 // pred_check_branch
        %345 = sbr.rel (%p343) target = $region48
      $region47: #{_lambda_.1} parent=11 // pred_region
        _
      $region48: #{_lambda_.1} parent=11 // pred_fallthru
        _
    $region12: #{_lambda_.1} parent=5 // pred_fallthru
      _
    %p346 = scmp.lt.s32.totalorder %s17, 4
    // Predicated region
    $region49: #{_lambda_.1} parent=5 // pred_check
      %p347 = pneg %p346
    $region50: #{_lambda_.1} parent=5 // pred_check_branch
      %349 = sbr.rel (%p347) target = $region52
    $region51: #{_lambda_.1} parent=5 // pred_region
      // Predicated region
      $region53: #{_lambda_.1} parent=51 // pred_check
        %p350 = pneg %p51
      $region54: #{_lambda_.1} parent=51 // pred_check_branch
        %352 = sbr.rel (%p350) target = $region56
      $region55: #{_lambda_.1} parent=51 // pred_region
        %s353 = smul.u32 8, %s25
        %p354 = scmp.lt.s32.totalorder %s24, 1
        %s355 = scalar_select %p354, %s24, 1
        %p356 = scmp.lt.s32.totalorder %s353, 15
        %s357 = scalar_select %p356, %s353, 15
        %s358 = smul.addr %s357, 3
        %s359 = smul.addr %s355, 48
        %s360 = sadd.s32 %s358, %s359
        %s361 = smul.addr %s360, 8
        %s362 = scalar_lea.vmem %s0, %s361
        %s363 = smul.u32 8, %s25
      $region56: #{_lambda_.1} parent=51 // pred_fallthru
        _
      // Predicated region
      $region57: #{_lambda_.1} parent=51 // pred_check
        %p364 = pneg %p81
      $region58: #{_lambda_.1} parent=51 // pred_check_branch
        %366 = sbr.rel (%p364) target = $region60
      $region59: #{_lambda_.1} parent=51 // pred_region
        %s367 = smul.u32 %s24, 2
        %s368 = sadd.s32 %s367, %s25
        %p369 = scmp.lt.s32.totalorder %s368, 3
        %s370 = scalar_select %p369, %s368, 3
        %s371 = smul.addr %s370, 6
        %s372 = smul.addr %s371, 8
        %s373 = scalar_lea.vmem %s1, %s372
        %s374 = smul.u32 %s24, 2
        %s375 = sadd.s32 %s374, %s25
      $region60: #{_lambda_.1} parent=51 // pred_fallthru
        _
    $region52: #{_lambda_.1} parent=5 // pred_fallthru
      _
    %p376 = scmp.le.s32.totalorder 1, %s17
    %p377 = scmp.lt.s32.totalorder %s17, 5
    %p378 = pnand %p376, %p377
    %p379 = pneg %p378
    // Predicated region
    $region61: #{_lambda_.1} parent=5 // pred_check
      _
    $region62: #{_lambda_.1} parent=5 // pred_check_branch
      %381 = sbr.rel (%p378) target = $region64
    $region63: #{_lambda_.1} parent=5 // pred_region
      %s382 = ssub.s32 %s17, 1
      %s383 = smul.u32 8, %s27
      %p384 = scmp.lt.s32.totalorder %s26, 1
      %s385 = scalar_select %p384, %s26, 1
      %p386 = scmp.lt.s32.totalorder %s383, 15
      %s387 = scalar_select %p386, %s383, 15
      %s388 = smul.addr %s387, 3
      %s389 = smul.addr %s385, 48
      %s390 = sadd.s32 %s388, %s389
      %s391 = smul.addr %s390, 8
      %s392 = scalar_lea.vmem %s0, %s391
      %p393 = pneg %p57
      %p394 = pneg %p54
      %s395 = smul.u32 %s26, 2
      %s396 = sadd.s32 %s395, %s27
      %p397 = scmp.lt.s32.totalorder %s396, 3
      %s398 = scalar_select %p397, %s396, 3
      %s399 = smul.addr %s398, 6
      %s400 = smul.addr %s399, 8
      %s401 = scalar_lea.vmem %s1, %s400
      %p402 = pneg %p87
      %p403 = pneg %p84
      %p404 = pneg %p108
      %p405 = pneg %p105
      %p406 = pneg %p129
      %p407 = pneg %p126
      %p408 = pneg %p150
      %p409 = pneg %p147
      %p410 = pneg %p171
      %p411 = pneg %p168
      %p412 = pneg %p192
      %p413 = pneg %p189
      %p414 = pneg %p213
      %p415 = pneg %p210
      %p416 = pneg %p234
      %p417 = pneg %p231
      %p418 = pneg %p255
      %p419 = pneg %p252
      %p420 = pneg %p276
      %p421 = pneg %p273
      %p422 = pneg %p304
      %p423 = pneg %p301
      %s424 = smul.u32 8, %s27
      %p425 = scmp.lt.s32.totalorder %s26, 1
      %s426 = scalar_select %p425, %s26, 1
      %p427 = scmp.lt.s32.totalorder %s424, 15
      %s428 = scalar_select %p427, %s424, 15
      %s429 = smul.addr %s428, 2
      %s430 = smul.addr %s426, 32
      %s431 = sadd.s32 %s429, %s430
      %s432 = smul.addr %s431, 8
      %s433 = scalar_lea.vmem %s11, %s432
      %s434 = smul.u32 8, %s27
      %p435 = scmp.lt.s32.totalorder %s26, 1
      %s436 = scalar_select %p435, %s26, 1
      %p437 = scmp.lt.s32.totalorder %s434, 15
      %s438 = scalar_select %p437, %s434, 15
      %s439 = smul.addr %s438, 3
      %s440 = smul.addr %s436, 48
      %s441 = sadd.s32 %s439, %s440
      %s442 = smul.addr %s441, 8
      %s443 = scalar_lea.vmem %s0, %s442
      %s444 = smul.u32 8, %s27
      %s445 = smul.u32 %s26, 2
      %s446 = sadd.s32 %s445, %s27
      %p447 = scmp.lt.s32.totalorder %s446, 3
      %s448 = scalar_select %p447, %s446, 3
      %s449 = smul.addr %s448, 6
      %s450 = smul.addr %s449, 8
      %s451 = scalar_lea.vmem %s1, %s450
      %s452 = smul.u32 %s26, 2
      %s453 = sadd.s32 %s452, %s27
      %s454 = smul.u32 8, %s27
      %p455 = scmp.lt.s32.totalorder %s26, 1
      %s456 = scalar_select %p455, %s26, 1
      %p457 = scmp.lt.s32.totalorder %s454, 15
      %s458 = scalar_select %p457, %s454, 15
      %s459 = smul.addr %s458, 2
      %s460 = smul.addr %s456, 32
      %s461 = sadd.s32 %s459, %s460
      %s462 = smul.addr %s461, 8
      %s463 = scalar_lea.vmem %s11, %s462
      %s464 = smul.u32 8, %s27
      %v466 = vld [vmem:[%s443] sm:$0xff]
      %v467 = vld [vmem:[%s443 + $0x8] sm:$0xff]
      %v468 = vld [vmem:[%s443 + $0x10] sm:$0x3]
      %v469 = vld [vmem:[%s443 + $0x18] sm:$0xff]
      %v470 = vld [vmem:[%s443 + $0x20] sm:$0xff]
      %v471 = vld [vmem:[%s443 + $0x28] sm:$0x3]
      %v472 = vld [vmem:[%s443 + $0x30] sm:$0xff]
      %v473 = vld [vmem:[%s443 + $0x38] sm:$0xff]
      %v474 = vld [vmem:[%s443 + $0x40] sm:$0x3]
      %v475 = vld [vmem:[%s443 + $0x48] sm:$0xff]
      %v476 = vld [vmem:[%s443 + $0x50] sm:$0xff]
      %v477 = vld [vmem:[%s443 + $0x58] sm:$0x3]
      %v478 = vld [vmem:[%s443 + $0x60] sm:$0xff]
      %v479 = vld [vmem:[%s443 + $0x68] sm:$0xff]
      %v480 = vld [vmem:[%s443 + $0x70] sm:$0x3]
      %v481 = vld [vmem:[%s443 + $0x78] sm:$0xff]
      %v482 = vld [vmem:[%s443 + $0x80] sm:$0xff]
      %v483 = vld [vmem:[%s443 + $0x88] sm:$0x3]
      %v484 = vld [vmem:[%s443 + $0x90] sm:$0xff]
      %v485 = vld [vmem:[%s443 + $0x98] sm:$0xff]
      %v486 = vld [vmem:[%s443 + $0xa0] sm:$0x3]
      %v487 = vld [vmem:[%s443 + $0xa8] sm:$0xff]
      %v488 = vld [vmem:[%s443 + $0xb0] sm:$0xff]
      %v489 = vld [vmem:[%s443 + $0xb8] sm:$0x3]
      %v490 = vld [vmem:[%s451] sm:$0xff]
      %v491 = vld [vmem:[%s451 + $0x8] sm:$0xff]
      %v492 = vld [vmem:[%s451 + $0x10] sm:$0x3]
      %v493 = vld [vmem:[%s451 + $0x18] sm:$0xff]
      %v494 = vld [vmem:[%s451 + $0x20] sm:$0xff]
      %v495 = vld [vmem:[%s451 + $0x28] sm:$0x3]
      %v526 = vcombine.high %v490, %v490
      %v528 = vunpack.c.l.s4 1983009808
      %v529 = vunpack.c.0.s8 %v528
      %v530 = vlaneseq
      %v531 = vshrl.u32 %v530, 7
      %v532 = vsub.s32 %v529, %v531
      %v533 = vrot.slane %v490, %v532
      %v535 = vunpack.c.l.s4 1983009808
      %v536 = vunpack.c.0.s8 %v535
      %v537 = vlaneseq
      %v538 = vshrl.u32 %v537, 7
      %v539 = vsub.s32 %v536, %v538
      %v540 = vrot.slane %v526, %v539
      %v541 = vcombine.high %v533, %v533
      %v542 = vcombine.high %v540, %v540
      %v543 = vcombine.high %v491, %v491
      %v545 = vunpack.c.l.s4 1983009808
      %v546 = vunpack.c.0.s8 %v545
      %v547 = vlaneseq
      %v548 = vshrl.u32 %v547, 7
      %v549 = vsub.s32 %v546, %v548
      %v550 = vrot.slane %v491, %v549
      %v552 = vunpack.c.l.s4 1983009808
      %v553 = vunpack.c.0.s8 %v552
      %v554 = vlaneseq
      %v555 = vshrl.u32 %v554, 7
      %v556 = vsub.s32 %v553, %v555
      %v557 = vrot.slane %v543, %v556
      %v558 = vcombine.high %v550, %v550
      %v559 = vcombine.high %v557, %v557
      %v561 = vunpack.c.l.s4 1983009808
      %v562 = vunpack.c.0.s8 %v561
      %v563 = vlaneseq
      %v564 = vshrl.u32 %v563, 7
      %v565 = vsub.s32 %v562, %v564
      %v566 = vrot.slane %v492, %v565
      %v567 = vcombine.high %v466, %v466
      %v569 = vunpack.c.l.s4 1983009808
      %v570 = vunpack.c.0.s8 %v569
      %v571 = vlaneseq
      %v572 = vshrl.u32 %v571, 7
      %v573 = vsub.s32 %v570, %v572
      %v574 = vrot.slane %v466, %v573
      %v576 = vunpack.c.l.s4 1983009808
      %v577 = vunpack.c.0.s8 %v576
      %v578 = vlaneseq
      %v579 = vshrl.u32 %v578, 7
      %v580 = vsub.s32 %v577, %v579
      %v581 = vrot.slane %v567, %v580
      %v582 = vcombine.high %v574, %v574
      %v583 = vcombine.high %v581, %v581
      %v584 = vcombine.high %v467, %v467
      %v586 = vunpack.c.l.s4 1983009808
      %v587 = vunpack.c.0.s8 %v586
      %v588 = vlaneseq
      %v589 = vshrl.u32 %v588, 7
      %v590 = vsub.s32 %v587, %v589
      %v591 = vrot.slane %v467, %v590
      %v593 = vunpack.c.l.s4 1983009808
      %v594 = vunpack.c.0.s8 %v593
      %v595 = vlaneseq
      %v596 = vshrl.u32 %v595, 7
      %v597 = vsub.s32 %v594, %v596
      %v598 = vrot.slane %v584, %v597
      %v599 = vcombine.high %v591, %v591
      %v600 = vcombine.high %v598, %v598
      %v602 = vunpack.c.l.s4 1983009808
      %v603 = vunpack.c.0.s8 %v602
      %v604 = vlaneseq
      %v605 = vshrl.u32 %v604, 7
      %v606 = vsub.s32 %v603, %v605
      %v607 = vrot.slane %v468, %v606
      %v608 = vcombine.high %v469, %v469
      %v610 = vunpack.c.l.s4 1983009808
      %v611 = vunpack.c.0.s8 %v610
      %v612 = vlaneseq
      %v613 = vshrl.u32 %v612, 7
      %v614 = vsub.s32 %v611, %v613
      %v615 = vrot.slane %v469, %v614
      %v617 = vunpack.c.l.s4 1983009808
      %v618 = vunpack.c.0.s8 %v617
      %v619 = vlaneseq
      %v620 = vshrl.u32 %v619, 7
      %v621 = vsub.s32 %v618, %v620
      %v622 = vrot.slane %v608, %v621
      %v623 = vcombine.high %v615, %v615
      %v624 = vcombine.high %v622, %v622
      %v625 = vcombine.high %v470, %v470
      %v627 = vunpack.c.l.s4 1983009808
      %v628 = vunpack.c.0.s8 %v627
      %v629 = vlaneseq
      %v630 = vshrl.u32 %v629, 7
      %v631 = vsub.s32 %v628, %v630
      %v632 = vrot.slane %v470, %v631
      %v634 = vunpack.c.l.s4 1983009808
      %v635 = vunpack.c.0.s8 %v634
      %v636 = vlaneseq
      %v637 = vshrl.u32 %v636, 7
      %v638 = vsub.s32 %v635, %v637
      %v639 = vrot.slane %v625, %v638
      %v640 = vcombine.high %v632, %v632
      %v641 = vcombine.high %v639, %v639
      %v643 = vunpack.c.l.s4 1983009808
      %v644 = vunpack.c.0.s8 %v643
      %v645 = vlaneseq
      %v646 = vshrl.u32 %v645, 7
      %v647 = vsub.s32 %v644, %v646
      %v648 = vrot.slane %v471, %v647
      %v649 = vcombine.high %v472, %v472
      %v651 = vunpack.c.l.s4 1983009808
      %v652 = vunpack.c.0.s8 %v651
      %v653 = vlaneseq
      %v654 = vshrl.u32 %v653, 7
      %v655 = vsub.s32 %v652, %v654
      %v656 = vrot.slane %v472, %v655
      %v658 = vunpack.c.l.s4 1983009808
      %v659 = vunpack.c.0.s8 %v658
      %v660 = vlaneseq
      %v661 = vshrl.u32 %v660, 7
      %v662 = vsub.s32 %v659, %v661
      %v663 = vrot.slane %v649, %v662
      %v664 = vcombine.high %v656, %v656
      %v665 = vcombine.high %v663, %v663
      %v666 = vcombine.high %v473, %v473
      %v668 = vunpack.c.l.s4 1983009808
      %v669 = vunpack.c.0.s8 %v668
      %v670 = vlaneseq
      %v671 = vshrl.u32 %v670, 7
      %v672 = vsub.s32 %v669, %v671
      %v673 = vrot.slane %v473, %v672
      %v675 = vunpack.c.l.s4 1983009808
      %v676 = vunpack.c.0.s8 %v675
      %v677 = vlaneseq
      %v678 = vshrl.u32 %v677, 7
      %v679 = vsub.s32 %v676, %v678
      %v680 = vrot.slane %v666, %v679
      %v681 = vcombine.high %v673, %v673
      %v682 = vcombine.high %v680, %v680
      %v684 = vunpack.c.l.s4 1983009808
      %v685 = vunpack.c.0.s8 %v684
      %v686 = vlaneseq
      %v687 = vshrl.u32 %v686, 7
      %v688 = vsub.s32 %v685, %v687
      %v689 = vrot.slane %v474, %v688
      %v690 = vcombine.high %v475, %v475
      %v692 = vunpack.c.l.s4 1983009808
      %v693 = vunpack.c.0.s8 %v692
      %v694 = vlaneseq
      %v695 = vshrl.u32 %v694, 7
      %v696 = vsub.s32 %v693, %v695
      %v697 = vrot.slane %v475, %v696
      %v699 = vunpack.c.l.s4 1983009808
      %v700 = vunpack.c.0.s8 %v699
      %v701 = vlaneseq
      %v702 = vshrl.u32 %v701, 7
      %v703 = vsub.s32 %v700, %v702
      %v704 = vrot.slane %v690, %v703
      %v705 = vcombine.high %v697, %v697
      %v706 = vcombine.high %v704, %v704
      %v707 = vcombine.high %v476, %v476
      %v709 = vunpack.c.l.s4 1983009808
      %v710 = vunpack.c.0.s8 %v709
      %v711 = vlaneseq
      %v712 = vshrl.u32 %v711, 7
      %v713 = vsub.s32 %v710, %v712
      %v714 = vrot.slane %v476, %v713
      %v716 = vunpack.c.l.s4 1983009808
      %v717 = vunpack.c.0.s8 %v716
      %v718 = vlaneseq
      %v719 = vshrl.u32 %v718, 7
      %v720 = vsub.s32 %v717, %v719
      %v721 = vrot.slane %v707, %v720
      %v722 = vcombine.high %v714, %v714
      %v723 = vcombine.high %v721, %v721
      %v725 = vunpack.c.l.s4 1983009808
      %v726 = vunpack.c.0.s8 %v725
      %v727 = vlaneseq
      %v728 = vshrl.u32 %v727, 7
      %v729 = vsub.s32 %v726, %v728
      %v730 = vrot.slane %v477, %v729
      %v731 = vcombine.high %v478, %v478
      %v733 = vunpack.c.l.s4 1983009808
      %v734 = vunpack.c.0.s8 %v733
      %v735 = vlaneseq
      %v736 = vshrl.u32 %v735, 7
      %v737 = vsub.s32 %v734, %v736
      %v738 = vrot.slane %v478, %v737
      %v740 = vunpack.c.l.s4 1983009808
      %v741 = vunpack.c.0.s8 %v740
      %v742 = vlaneseq
      %v743 = vshrl.u32 %v742, 7
      %v744 = vsub.s32 %v741, %v743
      %v745 = vrot.slane %v731, %v744
      %v746 = vcombine.high %v738, %v738
      %v747 = vcombine.high %v745, %v745
      %v748 = vcombine.high %v479, %v479
      %v750 = vunpack.c.l.s4 1983009808
      %v751 = vunpack.c.0.s8 %v750
      %v752 = vlaneseq
      %v753 = vshrl.u32 %v752, 7
      %v754 = vsub.s32 %v751, %v753
      %v755 = vrot.slane %v479, %v754
      %v757 = vunpack.c.l.s4 1983009808
      %v758 = vunpack.c.0.s8 %v757
      %v759 = vlaneseq
      %v760 = vshrl.u32 %v759, 7
      %v761 = vsub.s32 %v758, %v760
      %v762 = vrot.slane %v748, %v761
      %v763 = vcombine.high %v755, %v755
      %v764 = vcombine.high %v762, %v762
      %v766 = vunpack.c.l.s4 1983009808
      %v767 = vunpack.c.0.s8 %v766
      %v768 = vlaneseq
      %v769 = vshrl.u32 %v768, 7
      %v770 = vsub.s32 %v767, %v769
      %v771 = vrot.slane %v480, %v770
      %v772 = vcombine.high %v481, %v481
      %v774 = vunpack.c.l.s4 1983009808
      %v775 = vunpack.c.0.s8 %v774
      %v776 = vlaneseq
      %v777 = vshrl.u32 %v776, 7
      %v778 = vsub.s32 %v775, %v777
      %v779 = vrot.slane %v481, %v778
      %v781 = vunpack.c.l.s4 1983009808
      %v782 = vunpack.c.0.s8 %v781
      %v783 = vlaneseq
      %v784 = vshrl.u32 %v783, 7
      %v785 = vsub.s32 %v782, %v784
      %v786 = vrot.slane %v772, %v785
      %v787 = vcombine.high %v779, %v779
      %v788 = vcombine.high %v786, %v786
      %v789 = vcombine.high %v482, %v482
      %v791 = vunpack.c.l.s4 1983009808
      %v792 = vunpack.c.0.s8 %v791
      %v793 = vlaneseq
      %v794 = vshrl.u32 %v793, 7
      %v795 = vsub.s32 %v792, %v794
      %v796 = vrot.slane %v482, %v795
      %v798 = vunpack.c.l.s4 1983009808
      %v799 = vunpack.c.0.s8 %v798
      %v800 = vlaneseq
      %v801 = vshrl.u32 %v800, 7
      %v802 = vsub.s32 %v799, %v801
      %v803 = vrot.slane %v789, %v802
      %v804 = vcombine.high %v796, %v796
      %v805 = vcombine.high %v803, %v803
      %v807 = vunpack.c.l.s4 1983009808
      %v808 = vunpack.c.0.s8 %v807
      %v809 = vlaneseq
      %v810 = vshrl.u32 %v809, 7
      %v811 = vsub.s32 %v808, %v810
      %v812 = vrot.slane %v483, %v811
      %v813 = vcombine.high %v484, %v484
      %v815 = vunpack.c.l.s4 1983009808
      %v816 = vunpack.c.0.s8 %v815
      %v817 = vlaneseq
      %v818 = vshrl.u32 %v817, 7
      %v819 = vsub.s32 %v816, %v818
      %v820 = vrot.slane %v484, %v819
      %v822 = vunpack.c.l.s4 1983009808
      %v823 = vunpack.c.0.s8 %v822
      %v824 = vlaneseq
      %v825 = vshrl.u32 %v824, 7
      %v826 = vsub.s32 %v823, %v825
      %v827 = vrot.slane %v813, %v826
      %v828 = vcombine.high %v820, %v820
      %v829 = vcombine.high %v827, %v827
      %v830 = vcombine.high %v485, %v485
      %v832 = vunpack.c.l.s4 1983009808
      %v833 = vunpack.c.0.s8 %v832
      %v834 = vlaneseq
      %v835 = vshrl.u32 %v834, 7
      %v836 = vsub.s32 %v833, %v835
      %v837 = vrot.slane %v485, %v836
      %v839 = vunpack.c.l.s4 1983009808
      %v840 = vunpack.c.0.s8 %v839
      %v841 = vlaneseq
      %v842 = vshrl.u32 %v841, 7
      %v843 = vsub.s32 %v840, %v842
      %v844 = vrot.slane %v830, %v843
      %v845 = vcombine.high %v837, %v837
      %v846 = vcombine.high %v844, %v844
      %v848 = vunpack.c.l.s4 1983009808
      %v849 = vunpack.c.0.s8 %v848
      %v850 = vlaneseq
      %v851 = vshrl.u32 %v850, 7
      %v852 = vsub.s32 %v849, %v851
      %v853 = vrot.slane %v486, %v852
      %v854 = vcombine.high %v487, %v487
      %v856 = vunpack.c.l.s4 1983009808
      %v857 = vunpack.c.0.s8 %v856
      %v858 = vlaneseq
      %v859 = vshrl.u32 %v858, 7
      %v860 = vsub.s32 %v857, %v859
      %v861 = vrot.slane %v487, %v860
      %v863 = vunpack.c.l.s4 1983009808
      %v864 = vunpack.c.0.s8 %v863
      %v865 = vlaneseq
      %v866 = vshrl.u32 %v865, 7
      %v867 = vsub.s32 %v864, %v866
      %v868 = vrot.slane %v854, %v867
      %v869 = vcombine.high %v861, %v861
      %v870 = vcombine.high %v868, %v868
      %v871 = vcombine.high %v488, %v488
      %v873 = vunpack.c.l.s4 1983009808
      %v874 = vunpack.c.0.s8 %v873
      %v875 = vlaneseq
      %v876 = vshrl.u32 %v875, 7
      %v877 = vsub.s32 %v874, %v876
      %v878 = vrot.slane %v488, %v877
      %v880 = vunpack.c.l.s4 1983009808
      %v881 = vunpack.c.0.s8 %v880
      %v882 = vlaneseq
      %v883 = vshrl.u32 %v882, 7
      %v884 = vsub.s32 %v881, %v883
      %v885 = vrot.slane %v871, %v884
      %v886 = vcombine.high %v878, %v878
      %v887 = vcombine.high %v885, %v885
      %v889 = vunpack.c.l.s4 1983009808
      %v890 = vunpack.c.0.s8 %v889
      %v891 = vlaneseq
      %v892 = vshrl.u32 %v891, 7
      %v893 = vsub.s32 %v890, %v892
      %v894 = vrot.slane %v489, %v893
      %v895 = vcombine.high %v493, %v493
      %v897 = vunpack.c.l.s4 1983009808
      %v898 = vunpack.c.0.s8 %v897
      %v899 = vlaneseq
      %v900 = vshrl.u32 %v899, 7
      %v901 = vsub.s32 %v898, %v900
      %v902 = vrot.slane %v493, %v901
      %v904 = vunpack.c.l.s4 1983009808
      %v905 = vunpack.c.0.s8 %v904
      %v906 = vlaneseq
      %v907 = vshrl.u32 %v906, 7
      %v908 = vsub.s32 %v905, %v907
      %v909 = vrot.slane %v895, %v908
      %v910 = vcombine.high %v902, %v902
      %v911 = vcombine.high %v909, %v909
      %v912 = vcombine.high %v494, %v494
      %v914 = vunpack.c.l.s4 1983009808
      %v915 = vunpack.c.0.s8 %v914
      %v916 = vlaneseq
      %v917 = vshrl.u32 %v916, 7
      %v918 = vsub.s32 %v915, %v917
      %v919 = vrot.slane %v494, %v918
      %v921 = vunpack.c.l.s4 1983009808
      %v922 = vunpack.c.0.s8 %v921
      %v923 = vlaneseq
      %v924 = vshrl.u32 %v923, 7
      %v925 = vsub.s32 %v922, %v924
      %v926 = vrot.slane %v912, %v925
      %v927 = vcombine.high %v919, %v919
      %v928 = vcombine.high %v926, %v926
      %v930 = vunpack.c.l.s4 1983009808
      %v931 = vunpack.c.0.s8 %v930
      %v932 = vlaneseq
      %v933 = vshrl.u32 %v932, 7
      %v934 = vsub.s32 %v931, %v933
      %v935 = vrot.slane %v495, %v934
      %v936 = vcombine.low %v533, %v541
      %v937 = vcombine.low %v540, %v542
      %v939 = vunpack.c.l.s4 1983009808
      %v940 = vunpack.c.0.s8 %v939
      %v941 = vlaneseq
      %v942 = vshrl.u32 %v941, 7
      %v943 = vsub.s32 %v940, %v942
      %v944 = vrot.slane %v936, %v943
      %v946 = vunpack.c.l.s4 1983009808
      %v947 = vunpack.c.0.s8 %v946
      %v948 = vlaneseq
      %v949 = vshrl.u32 %v948, 7
      %v950 = vsub.s32 %v947, %v949
      %v951 = vrot.slane %v937, %v950
      %v952 = vcombine.low %v944, %v951
      %v953 = vcombine.low %v550, %v558
      %v954 = vcombine.low %v557, %v559
      %v956 = vunpack.c.l.s4 1983009808
      %v957 = vunpack.c.0.s8 %v956
      %v958 = vlaneseq
      %v959 = vshrl.u32 %v958, 7
      %v960 = vsub.s32 %v957, %v959
      %v961 = vrot.slane %v953, %v960
      %v963 = vunpack.c.l.s4 1983009808
      %v964 = vunpack.c.0.s8 %v963
      %v965 = vlaneseq
      %v966 = vshrl.u32 %v965, 7
      %v967 = vsub.s32 %v964, %v966
      %v968 = vrot.slane %v954, %v967
      %v969 = vcombine.low %v961, %v968
      %v970 = vcombine.low %v566, %v574
      %v971 = vcombine.low %v582, %v581
      %v973 = vunpack.c.l.s4 1983009808
      %v974 = vunpack.c.0.s8 %v973
      %v975 = vlaneseq
      %v976 = vshrl.u32 %v975, 7
      %v977 = vsub.s32 %v974, %v976
      %v978 = vrot.slane %v970, %v977
      %v980 = vunpack.c.l.s4 1983009808
      %v981 = vunpack.c.0.s8 %v980
      %v982 = vlaneseq
      %v983 = vshrl.u32 %v982, 7
      %v984 = vsub.s32 %v981, %v983
      %v985 = vrot.slane %v971, %v984
      %v986 = vcombine.low %v978, %v985
      %v987 = vcombine.low %v583, %v591
      %v988 = vcombine.low %v599, %v598
      %v990 = vunpack.c.l.s4 1983009808
      %v991 = vunpack.c.0.s8 %v990
      %v992 = vlaneseq
      %v993 = vshrl.u32 %v992, 7
      %v994 = vsub.s32 %v991, %v993
      %v995 = vrot.slane %v987, %v994
      %v997 = vunpack.c.l.s4 1983009808
      %v998 = vunpack.c.0.s8 %v997
      %v999 = vlaneseq
      %v1000 = vshrl.u32 %v999, 7
      %v1001 = vsub.s32 %v998, %v1000
      %v1002 = vrot.slane %v988, %v1001
      %v1003 = vcombine.low %v995, %v1002
      %v1004 = vcombine.low %v600, %v607
      %v1005 = vcombine.low %v615, %v623
      %v1007 = vunpack.c.l.s4 1983009808
      %v1008 = vunpack.c.0.s8 %v1007
      %v1009 = vlaneseq
      %v1010 = vshrl.u32 %v1009, 7
      %v1011 = vsub.s32 %v1008, %v1010
      %v1012 = vrot.slane %v1004, %v1011
      %v1014 = vunpack.c.l.s4 1983009808
      %v1015 = vunpack.c.0.s8 %v1014
      %v1016 = vlaneseq
      %v1017 = vshrl.u32 %v1016, 7
      %v1018 = vsub.s32 %v1015, %v1017
      %v1019 = vrot.slane %v1005, %v1018
      %v1020 = vcombine.low %v1012, %v1019
      %v1021 = vcombine.low %v622, %v624
      %v1022 = vcombine.low %v632, %v640
      %v1024 = vunpack.c.l.s4 1983009808
      %v1025 = vunpack.c.0.s8 %v1024
      %v1026 = vlaneseq
      %v1027 = vshrl.u32 %v1026, 7
      %v1028 = vsub.s32 %v1025, %v1027
      %v1029 = vrot.slane %v1021, %v1028
      %v1031 = vunpack.c.l.s4 1983009808
      %v1032 = vunpack.c.0.s8 %v1031
      %v1033 = vlaneseq
      %v1034 = vshrl.u32 %v1033, 7
      %v1035 = vsub.s32 %v1032, %v1034
      %v1036 = vrot.slane %v1022, %v1035
      %v1037 = vcombine.low %v1029, %v1036
      %v1038 = vcombine.low %v639, %v641
      %v1039 = vcombine.low %v648, %v656
      %v1041 = vunpack.c.l.s4 1983009808
      %v1042 = vunpack.c.0.s8 %v1041
      %v1043 = vlaneseq
      %v1044 = vshrl.u32 %v1043, 7
      %v1045 = vsub.s32 %v1042, %v1044
      %v1046 = vrot.slane %v1038, %v1045
      %v1048 = vunpack.c.l.s4 1983009808
      %v1049 = vunpack.c.0.s8 %v1048
      %v1050 = vlaneseq
      %v1051 = vshrl.u32 %v1050, 7
      %v1052 = vsub.s32 %v1049, %v1051
      %v1053 = vrot.slane %v1039, %v1052
      %v1054 = vcombine.low %v1046, %v1053
      %v1055 = vcombine.low %v664, %v663
      %v1056 = vcombine.low %v665, %v673
      %v1058 = vunpack.c.l.s4 1983009808
      %v1059 = vunpack.c.0.s8 %v1058
      %v1060 = vlaneseq
      %v1061 = vshrl.u32 %v1060, 7
      %v1062 = vsub.s32 %v1059, %v1061
      %v1063 = vrot.slane %v1055, %v1062
      %v1065 = vunpack.c.l.s4 1983009808
      %v1066 = vunpack.c.0.s8 %v1065
      %v1067 = vlaneseq
      %v1068 = vshrl.u32 %v1067, 7
      %v1069 = vsub.s32 %v1066, %v1068
      %v1070 = vrot.slane %v1056, %v1069
      %v1071 = vcombine.low %v1063, %v1070
      %v1072 = vcombine.low %v681, %v680
      %v1073 = vcombine.low %v682, %v689
      %v1075 = vunpack.c.l.s4 1983009808
      %v1076 = vunpack.c.0.s8 %v1075
      %v1077 = vlaneseq
      %v1078 = vshrl.u32 %v1077, 7
      %v1079 = vsub.s32 %v1076, %v1078
      %v1080 = vrot.slane %v1072, %v1079
      %v1082 = vunpack.c.l.s4 1983009808
      %v1083 = vunpack.c.0.s8 %v1082
      %v1084 = vlaneseq
      %v1085 = vshrl.u32 %v1084, 7
      %v1086 = vsub.s32 %v1083, %v1085
      %v1087 = vrot.slane %v1073, %v1086
      %v1088 = vcombine.low %v1080, %v1087
      %v1089 = vcombine.low %v697, %v705
      %v1090 = vcombine.low %v704, %v706
      %v1092 = vunpack.c.l.s4 1983009808
      %v1093 = vunpack.c.0.s8 %v1092
      %v1094 = vlaneseq
      %v1095 = vshrl.u32 %v1094, 7
      %v1096 = vsub.s32 %v1093, %v1095
      %v1097 = vrot.slane %v1089, %v1096
      %v1099 = vunpack.c.l.s4 1983009808
      %v1100 = vunpack.c.0.s8 %v1099
      %v1101 = vlaneseq
      %v1102 = vshrl.u32 %v1101, 7
      %v1103 = vsub.s32 %v1100, %v1102
      %v1104 = vrot.slane %v1090, %v1103
      %v1105 = vcombine.low %v1097, %v1104
      %v1106 = vcombine.low %v714, %v722
      %v1107 = vcombine.low %v721, %v723
      %v1109 = vunpack.c.l.s4 1983009808
      %v1110 = vunpack.c.0.s8 %v1109
      %v1111 = vlaneseq
      %v1112 = vshrl.u32 %v1111, 7
      %v1113 = vsub.s32 %v1110, %v1112
      %v1114 = vrot.slane %v1106, %v1113
      %v1116 = vunpack.c.l.s4 1983009808
      %v1117 = vunpack.c.0.s8 %v1116
      %v1118 = vlaneseq
      %v1119 = vshrl.u32 %v1118, 7
      %v1120 = vsub.s32 %v1117, %v1119
      %v1121 = vrot.slane %v1107, %v1120
      %v1122 = vcombine.low %v1114, %v1121
      %v1123 = vcombine.low %v730, %v738
      %v1124 = vcombine.low %v746, %v745
      %v1126 = vunpack.c.l.s4 1983009808
      %v1127 = vunpack.c.0.s8 %v1126
      %v1128 = vlaneseq
      %v1129 = vshrl.u32 %v1128, 7
      %v1130 = vsub.s32 %v1127, %v1129
      %v1131 = vrot.slane %v1123, %v1130
      %v1133 = vunpack.c.l.s4 1983009808
      %v1134 = vunpack.c.0.s8 %v1133
      %v1135 = vlaneseq
      %v1136 = vshrl.u32 %v1135, 7
      %v1137 = vsub.s32 %v1134, %v1136
      %v1138 = vrot.slane %v1124, %v1137
      %v1139 = vcombine.low %v1131, %v1138
      %v1140 = vcombine.low %v747, %v755
      %v1141 = vcombine.low %v763, %v762
      %v1143 = vunpack.c.l.s4 1983009808
      %v1144 = vunpack.c.0.s8 %v1143
      %v1145 = vlaneseq
      %v1146 = vshrl.u32 %v1145, 7
      %v1147 = vsub.s32 %v1144, %v1146
      %v1148 = vrot.slane %v1140, %v1147
      %v1150 = vunpack.c.l.s4 1983009808
      %v1151 = vunpack.c.0.s8 %v1150
      %v1152 = vlaneseq
      %v1153 = vshrl.u32 %v1152, 7
      %v1154 = vsub.s32 %v1151, %v1153
      %v1155 = vrot.slane %v1141, %v1154
      %v1156 = vcombine.low %v1148, %v1155
      %v1157 = vcombine.low %v764, %v771
      %v1158 = vcombine.low %v779, %v787
      %v1160 = vunpack.c.l.s4 1983009808
      %v1161 = vunpack.c.0.s8 %v1160
      %v1162 = vlaneseq
      %v1163 = vshrl.u32 %v1162, 7
      %v1164 = vsub.s32 %v1161, %v1163
      %v1165 = vrot.slane %v1157, %v1164
      %v1167 = vunpack.c.l.s4 1983009808
      %v1168 = vunpack.c.0.s8 %v1167
      %v1169 = vlaneseq
      %v1170 = vshrl.u32 %v1169, 7
      %v1171 = vsub.s32 %v1168, %v1170
      %v1172 = vrot.slane %v1158, %v1171
      %v1173 = vcombine.low %v1165, %v1172
      %v1174 = vcombine.low %v786, %v788
      %v1175 = vcombine.low %v796, %v804
      %v1177 = vunpack.c.l.s4 1983009808
      %v1178 = vunpack.c.0.s8 %v1177
      %v1179 = vlaneseq
      %v1180 = vshrl.u32 %v1179, 7
      %v1181 = vsub.s32 %v1178, %v1180
      %v1182 = vrot.slane %v1174, %v1181
      %v1184 = vunpack.c.l.s4 1983009808
      %v1185 = vunpack.c.0.s8 %v1184
      %v1186 = vlaneseq
      %v1187 = vshrl.u32 %v1186, 7
      %v1188 = vsub.s32 %v1185, %v1187
      %v1189 = vrot.slane %v1175, %v1188
      %v1190 = vcombine.low %v1182, %v1189
      %v1191 = vcombine.low %v803, %v805
      %v1192 = vcombine.low %v812, %v820
      %v1194 = vunpack.c.l.s4 1983009808
      %v1195 = vunpack.c.0.s8 %v1194
      %v1196 = vlaneseq
      %v1197 = vshrl.u32 %v1196, 7
      %v1198 = vsub.s32 %v1195, %v1197
      %v1199 = vrot.slane %v1191, %v1198
      %v1201 = vunpack.c.l.s4 1983009808
      %v1202 = vunpack.c.0.s8 %v1201
      %v1203 = vlaneseq
      %v1204 = vshrl.u32 %v1203, 7
      %v1205 = vsub.s32 %v1202, %v1204
      %v1206 = vrot.slane %v1192, %v1205
      %v1207 = vcombine.low %v1199, %v1206
      %v1208 = vcombine.low %v828, %v827
      %v1209 = vcombine.low %v829, %v837
      %v1211 = vunpack.c.l.s4 1983009808
      %v1212 = vunpack.c.0.s8 %v1211
      %v1213 = vlaneseq
      %v1214 = vshrl.u32 %v1213, 7
      %v1215 = vsub.s32 %v1212, %v1214
      %v1216 = vrot.slane %v1208, %v1215
      %v1218 = vunpack.c.l.s4 1983009808
      %v1219 = vunpack.c.0.s8 %v1218
      %v1220 = vlaneseq
      %v1221 = vshrl.u32 %v1220, 7
      %v1222 = vsub.s32 %v1219, %v1221
      %v1223 = vrot.slane %v1209, %v1222
      %v1224 = vcombine.low %v1216, %v1223
      %v1225 = vcombine.low %v845, %v844
      %v1226 = vcombine.low %v846, %v853
      %v1228 = vunpack.c.l.s4 1983009808
      %v1229 = vunpack.c.0.s8 %v1228
      %v1230 = vlaneseq
      %v1231 = vshrl.u32 %v1230, 7
      %v1232 = vsub.s32 %v1229, %v1231
      %v1233 = vrot.slane %v1225, %v1232
      %v1235 = vunpack.c.l.s4 1983009808
      %v1236 = vunpack.c.0.s8 %v1235
      %v1237 = vlaneseq
      %v1238 = vshrl.u32 %v1237, 7
      %v1239 = vsub.s32 %v1236, %v1238
      %v1240 = vrot.slane %v1226, %v1239
      %v1241 = vcombine.low %v1233, %v1240
      %v1242 = vcombine.low %v861, %v869
      %v1243 = vcombine.low %v868, %v870
      %v1245 = vunpack.c.l.s4 1983009808
      %v1246 = vunpack.c.0.s8 %v1245
      %v1247 = vlaneseq
      %v1248 = vshrl.u32 %v1247, 7
      %v1249 = vsub.s32 %v1246, %v1248
      %v1250 = vrot.slane %v1242, %v1249
      %v1252 = vunpack.c.l.s4 1983009808
      %v1253 = vunpack.c.0.s8 %v1252
      %v1254 = vlaneseq
      %v1255 = vshrl.u32 %v1254, 7
      %v1256 = vsub.s32 %v1253, %v1255
      %v1257 = vrot.slane %v1243, %v1256
      %v1258 = vcombine.low %v1250, %v1257
      %v1259 = vcombine.low %v878, %v886
      %v1260 = vcombine.low %v885, %v887
      %v1262 = vunpack.c.l.s4 1983009808
      %v1263 = vunpack.c.0.s8 %v1262
      %v1264 = vlaneseq
      %v1265 = vshrl.u32 %v1264, 7
      %v1266 = vsub.s32 %v1263, %v1265
      %v1267 = vrot.slane %v1259, %v1266
      %v1269 = vunpack.c.l.s4 1983009808
      %v1270 = vunpack.c.0.s8 %v1269
      %v1271 = vlaneseq
      %v1272 = vshrl.u32 %v1271, 7
      %v1273 = vsub.s32 %v1270, %v1272
      %v1274 = vrot.slane %v1260, %v1273
      %v1275 = vcombine.low %v1267, %v1274
      %v1276 = vcombine.low %v894, %v902
      %v1277 = vcombine.low %v910, %v909
      %v1279 = vunpack.c.l.s4 1983009808
      %v1280 = vunpack.c.0.s8 %v1279
      %v1281 = vlaneseq
      %v1282 = vshrl.u32 %v1281, 7
      %v1283 = vsub.s32 %v1280, %v1282
      %v1284 = vrot.slane %v1276, %v1283
      %v1286 = vunpack.c.l.s4 1983009808
      %v1287 = vunpack.c.0.s8 %v1286
      %v1288 = vlaneseq
      %v1289 = vshrl.u32 %v1288, 7
      %v1290 = vsub.s32 %v1287, %v1289
      %v1291 = vrot.slane %v1277, %v1290
      %v1292 = vcombine.low %v1284, %v1291
      %v1293 = vcombine.low %v911, %v919
      %v1294 = vcombine.low %v927, %v926
      %v1296 = vunpack.c.l.s4 1983009808
      %v1297 = vunpack.c.0.s8 %v1296
      %v1298 = vlaneseq
      %v1299 = vshrl.u32 %v1298, 7
      %v1300 = vsub.s32 %v1297, %v1299
      %v1301 = vrot.slane %v1293, %v1300
      %v1303 = vunpack.c.l.s4 1983009808
      %v1304 = vunpack.c.0.s8 %v1303
      %v1305 = vlaneseq
      %v1306 = vshrl.u32 %v1305, 7
      %v1307 = vsub.s32 %v1304, %v1306
      %v1308 = vrot.slane %v1294, %v1307
      %v1309 = vcombine.low %v1301, %v1308
      %v1310 = vcombine.low %v928, %v935
      %v1312 = vunpack.c.l.s4 1983009808
      %v1313 = vunpack.c.0.s8 %v1312
      %v1314 = vlaneseq
      %v1315 = vshrl.u32 %v1314, 7
      %v1316 = vsub.s32 %v1313, %v1315
      %v1317 = vrot.slane %v1310, %v1316
      %v1341 = vpack.c.bf16 %v969, %v952
      %v1342 = vpack.c.bf16 %v1003, %v986
      %v1343 = vpack.c.bf16 %v1037, %v1020
      %v1344 = vpack.c.bf16 %v1071, %v1054
      %v1345 = vpack.c.bf16 %v1105, %v1088
      %v1346 = vpack.c.bf16 %v1139, %v1122
      %v1347 = vpack.c.bf16 %v1173, %v1156
      %v1348 = vpack.c.bf16 %v1207, %v1190
      %v1349 = vpack.c.bf16 %v1241, %v1224
      %v1350 = vpack.c.bf16 %v1275, %v1258
      %v1351 = vpack.c.bf16 %v1309, %v1292
      %v1352 = vpack.c.bf16 %v1317, %v1317
      %v1353 = vld [vmem:[%s2] sm:$0xf]
      %v1354 = vld [vmem:[%s2 + $0x4] sm:$0xf]
      %v1355 = vld [vmem:[%s2 + $0x8] sm:$0xf]
      %v1356 = vld [vmem:[%s2 + $0xc] sm:$0xf]
      %v1357 = vld [vmem:[%s2 + $0x10] sm:$0xf]
      %v1358 = vld [vmem:[%s2 + $0x14] sm:$0xf]
      %v1359 = vld [vmem:[%s2 + $0x18] sm:$0xf]
      %v1360 = vld [vmem:[%s2 + $0x1c] sm:$0xf]
      %v1361 = vld [vmem:[%s2 + $0x20] sm:$0xf]
      %v1362 = vld [vmem:[%s2 + $0x24] sm:$0xf]
      %v1363 = vld [vmem:[%s2 + $0x28] sm:$0xf]
      %v1364 = vld [vmem:[%s2 + $0x2c] sm:$0xf]
      %v1365 = vld [vmem:[%s2 + $0x30] sm:$0xf]
      %v1366 = vld [vmem:[%s2 + $0x34] sm:$0xf]
      %v1367 = vld [vmem:[%s2 + $0x38] sm:$0xf]
      %v1368 = vld [vmem:[%s2 + $0x3c] sm:$0xf]
      %v1385 = vunpack.c.l.b16 %v1353
      %v1386 = vunpack.c.l.b16 %v1354
      %v1387 = vunpack.c.l.b16 %v1355
      %v1388 = vunpack.c.l.b16 %v1356
      %v1389 = vunpack.c.l.b16 %v1357
      %v1390 = vunpack.c.l.b16 %v1358
      %v1391 = vunpack.c.l.b16 %v1359
      %v1392 = vunpack.c.l.b16 %v1360
      %v1393 = vunpack.c.l.b16 %v1361
      %v1394 = vunpack.c.l.b16 %v1362
      %v1395 = vunpack.c.l.b16 %v1363
      %v1396 = vunpack.c.l.b16 %v1364
      %v1397 = vunpack.c.l.b16 %v1365
      %v1398 = vunpack.c.l.b16 %v1366
      %v1399 = vunpack.c.l.b16 %v1367
      %v1400 = vunpack.c.l.b16 %v1368
      %v1401 = vpack.c.b16 %v1386, %v1385
      %v1402 = vpack.c.b16 %v1388, %v1387
      %v1403 = vpack.c.b16 %v1390, %v1389
      %v1404 = vpack.c.b16 %v1392, %v1391
      %v1405 = vpack.c.b16 %v1394, %v1393
      %v1406 = vpack.c.b16 %v1396, %v1395
      %v1407 = vpack.c.b16 %v1398, %v1397
      %v1408 = vpack.c.b16 %v1400, %v1399
      %1417 = vmatprep.subr.bf16.mxu0 0
      %1418 = vmatpush1.bf16.msra.mxu0 %v1408
      %1419 = vmatprep.subr.bf16.mxu0 0
      %1420 = vmatpush1.bf16.msra.mxu0 %v1407
      %1421 = vmatprep.subr.bf16.mxu0 0
      %1422 = vmatpush1.bf16.msra.mxu0 %v1406
      %1423 = vmatprep.subr.bf16.mxu0 0
      %1424 = vmatpush1.bf16.msra.mxu0 %v1405
      %1425 = vmatprep.subr.bf16.mxu0 0
      %1426 = vmatpush1.bf16.msra.mxu0 %v1404
      %1427 = vmatprep.subr.bf16.mxu0 0
      %1428 = vmatpush1.bf16.msra.mxu0 %v1403
      %1429 = vmatprep.subr.bf16.mxu0 0
      %1430 = vmatpush1.bf16.msra.mxu0 %v1402
      %1431 = vmatprep.subr.bf16.mxu0 0
      %1432 = vmatpush1.bf16.msra.mxu0 %v1401
      %1433 = vmatprep.subr.bf16.mxu0 0
      %1434 = vmatpush2.bf16.msra.mxu0 0
      %1435 = vmatprep.subr.bf16.mxu0 0
      %1436 = vmatpush2.bf16.msra.mxu0 0
      %1437 = vmatprep.subr.bf16.mxu0 0
      %1438 = vmatpush2.bf16.msra.mxu0 0
      %1439 = vmatprep.subr.bf16.mxu0 0
      %1440 = vmatpush2.bf16.msra.mxu0 0
      %1441 = vmatprep.subr.bf16.mxu0 0
      %1442 = vmatpush2.bf16.msra.mxu0 0
      %1443 = vmatprep.subr.bf16.mxu0 0
      %1444 = vmatpush2.bf16.msra.mxu0 0
      %1445 = vmatprep.subr.bf16.mxu0 0
      %1446 = vmatpush2.bf16.msra.mxu0 0
      %1447 = vmatprep.subr.bf16.mxu0 0
      %1448 = vmatpush2.bf16.msra.mxu0 0
      %1449 = vmatprep.mubr.bf16.mxu0 0
      %1450 = vmatmul.mubr.bf16.gmra.mxu0 %v1341
      %v1451 = vpop.f32.mrf.mxu0
      %v1452 = vadd.f32 0.0, %v1451
      %v1453 = vpop.f32.mrf.mxu0
      %v1454 = vpop.f32.mrf.mxu0
      %v1455 = vadd.f32 0.0, %v1454
      %v1456 = vpop.f32.mrf.mxu0
      %1457 = vmatprep.mubr.bf16.mxu0 0
      %1458 = vmatmul.mubr.bf16.gmra.mxu0 %v1342
      %v1459 = vpop.f32.mrf.mxu0
      %v1460 = vadd.f32 0.0, %v1459
      %v1461 = vpop.f32.mrf.mxu0
      %v1462 = vpop.f32.mrf.mxu0
      %v1463 = vadd.f32 0.0, %v1462
      %v1464 = vpop.f32.mrf.mxu0
      %1465 = vmatprep.mubr.bf16.mxu0 0
      %1466 = vmatmul.mubr.bf16.gmra.mxu0 %v1343
      %v1467 = vpop.f32.mrf.mxu0
      %v1468 = vadd.f32 0.0, %v1467
      %v1469 = vpop.f32.mrf.mxu0
      %v1470 = vpop.f32.mrf.mxu0
      %v1471 = vadd.f32 0.0, %v1470
      %v1472 = vpop.f32.mrf.mxu0
      %1473 = vmatprep.mubr.bf16.mxu0 0
      %1474 = vmatmul.mubr.bf16.gmra.mxu0 %v1344
      %v1475 = vpop.f32.mrf.mxu0
      %v1476 = vadd.f32 0.0, %v1475
      %v1477 = vpop.f32.mrf.mxu0
      %v1478 = vpop.f32.mrf.mxu0
      %v1479 = vadd.f32 0.0, %v1478
      %v1480 = vpop.f32.mrf.mxu0
      %1481 = vmatprep.mubr.bf16.mxu0 0
      %1482 = vmatmul.mubr.bf16.gmra.mxu0 %v1345
      %v1483 = vpop.f32.mrf.mxu0
      %v1484 = vadd.f32 0.0, %v1483
      %v1485 = vpop.f32.mrf.mxu0
      %v1486 = vpop.f32.mrf.mxu0
      %v1487 = vadd.f32 0.0, %v1486
      %v1488 = vpop.f32.mrf.mxu0
      %1489 = vmatprep.mubr.bf16.mxu0 0
      %1490 = vmatmul.mubr.bf16.gmra.mxu0 %v1346
      %v1491 = vpop.f32.mrf.mxu0
      %v1492 = vadd.f32 0.0, %v1491
      %v1493 = vpop.f32.mrf.mxu0
      %v1494 = vpop.f32.mrf.mxu0
      %v1495 = vadd.f32 0.0, %v1494
      %v1496 = vpop.f32.mrf.mxu0
      %1497 = vmatprep.mubr.bf16.mxu0 0
      %1498 = vmatmul.mubr.bf16.gmra.mxu0 %v1347
      %v1499 = vpop.f32.mrf.mxu0
      %v1500 = vadd.f32 0.0, %v1499
      %v1501 = vpop.f32.mrf.mxu0
      %v1502 = vpop.f32.mrf.mxu0
      %v1503 = vadd.f32 0.0, %v1502
      %v1504 = vpop.f32.mrf.mxu0
      %1505 = vmatprep.mubr.bf16.mxu0 0
      %1506 = vmatmul.mubr.bf16.gmra.mxu0 %v1348
      %v1507 = vpop.f32.mrf.mxu0
      %v1508 = vadd.f32 0.0, %v1507
      %v1509 = vpop.f32.mrf.mxu0
      %v1510 = vpop.f32.mrf.mxu0
      %v1511 = vadd.f32 0.0, %v1510
      %v1512 = vpop.f32.mrf.mxu0
      %1513 = vmatprep.mubr.bf16.mxu0 0
      %1514 = vmatmul.mubr.bf16.gmra.mxu0 %v1349
      %v1515 = vpop.f32.mrf.mxu0
      %v1516 = vadd.f32 0.0, %v1515
      %v1517 = vpop.f32.mrf.mxu0
      %v1518 = vpop.f32.mrf.mxu0
      %v1519 = vadd.f32 0.0, %v1518
      %v1520 = vpop.f32.mrf.mxu0
      %1521 = vmatprep.mubr.bf16.mxu0 0
      %1522 = vmatmul.mubr.bf16.gmra.mxu0 %v1350
      %v1523 = vpop.f32.mrf.mxu0
      %v1524 = vadd.f32 0.0, %v1523
      %v1525 = vpop.f32.mrf.mxu0
      %v1526 = vpop.f32.mrf.mxu0
      %v1527 = vadd.f32 0.0, %v1526
      %v1528 = vpop.f32.mrf.mxu0
      %1529 = vmatprep.mubr.bf16.mxu0 0
      %1530 = vmatmul.mubr.bf16.gmra.mxu0 %v1351
      %v1531 = vpop.f32.mrf.mxu0
      %v1532 = vadd.f32 0.0, %v1531
      %v1533 = vpop.f32.mrf.mxu0
      %v1534 = vpop.f32.mrf.mxu0
      %v1535 = vadd.f32 0.0, %v1534
      %v1536 = vpop.f32.mrf.mxu0
      %1537 = vmatprep.mubr.bf16.mxu0 0
      %1538 = vmatmul.mubr.bf16.gmra.mxu0 %v1352
      %v1539 = vpop.f32.mrf.mxu0
      %v1540 = vadd.f32 0.0, %v1539
      %v1541 = vpop.f32.mrf.mxu0
      %v1542 = vpop.f32.mrf.mxu0
      %v1543 = vpop.f32.mrf.mxu0
      %1544 = vdwg.mxu0
      %v1545 = vld [vmem:[%s3] sm:$0x1]
      %v1547 = vlaneseq
      %v1548 = vshrl.u32 %v1547, 7
      %v1549 = vsub.s32 0, %v1548
      %v1550 = vrot.slane %v1545, %v1549
      %v1552 = vmul.f32 %v1452, %v1550
      %v1553 = vmul.f32 %v1455, %v1550
      %v1554 = vmul.f32 %v1460, %v1550
      %v1555 = vmul.f32 %v1463, %v1550
      %v1556 = vmul.f32 %v1468, %v1550
      %v1557 = vmul.f32 %v1471, %v1550
      %v1558 = vmul.f32 %v1476, %v1550
      %v1559 = vmul.f32 %v1479, %v1550
      %v1560 = vmul.f32 %v1484, %v1550
      %v1561 = vmul.f32 %v1487, %v1550
      %v1562 = vmul.f32 %v1492, %v1550
      %v1563 = vmul.f32 %v1495, %v1550
      %v1564 = vmul.f32 %v1500, %v1550
      %v1565 = vmul.f32 %v1503, %v1550
      %v1566 = vmul.f32 %v1508, %v1550
      %v1567 = vmul.f32 %v1511, %v1550
      %v1568 = vmul.f32 %v1516, %v1550
      %v1569 = vmul.f32 %v1519, %v1550
      %v1570 = vmul.f32 %v1524, %v1550
      %v1571 = vmul.f32 %v1527, %v1550
      %v1572 = vmul.f32 %v1532, %v1550
      %v1573 = vmul.f32 %v1535, %v1550
      %v1574 = vmul.f32 %v1540, %v1550
      %v1575 = vld [vmem:[%s4] sm:$0x1]
      %v1577 = vlaneseq
      %v1578 = vshrl.u32 %v1577, 7
      %v1579 = vsub.s32 0, %v1578
      %v1580 = vrot.slane %v1575, %v1579
      %v1582 = vadd.f32 %v1552, %v1580
      %v1583 = vadd.f32 %v1553, %v1580
      %v1584 = vadd.f32 %v1554, %v1580
      %v1585 = vadd.f32 %v1555, %v1580
      %v1586 = vadd.f32 %v1556, %v1580
      %v1587 = vadd.f32 %v1557, %v1580
      %v1588 = vadd.f32 %v1558, %v1580
      %v1589 = vadd.f32 %v1559, %v1580
      %v1590 = vadd.f32 %v1560, %v1580
      %v1591 = vadd.f32 %v1561, %v1580
      %v1592 = vadd.f32 %v1562, %v1580
      %v1593 = vadd.f32 %v1563, %v1580
      %v1594 = vadd.f32 %v1564, %v1580
      %v1595 = vadd.f32 %v1565, %v1580
      %v1596 = vadd.f32 %v1566, %v1580
      %v1597 = vadd.f32 %v1567, %v1580
      %v1598 = vadd.f32 %v1568, %v1580
      %v1599 = vadd.f32 %v1569, %v1580
      %v1600 = vadd.f32 %v1570, %v1580
      %v1601 = vadd.f32 %v1571, %v1580
      %v1602 = vadd.f32 %v1572, %v1580
      %v1603 = vadd.f32 %v1573, %v1580
      %v1604 = vadd.f32 %v1574, %v1580
      %v1605 = vmax.f32 %v1582, 0.0
      %v1606 = vmax.f32 %v1583, 0.0
      %v1607 = vmax.f32 %v1584, 0.0
      %v1608 = vmax.f32 %v1585, 0.0
      %v1609 = vmax.f32 %v1586, 0.0
      %v1610 = vmax.f32 %v1587, 0.0
      %v1611 = vmax.f32 %v1588, 0.0
      %v1612 = vmax.f32 %v1589, 0.0
      %v1613 = vmax.f32 %v1590, 0.0
      %v1614 = vmax.f32 %v1591, 0.0
      %v1615 = vmax.f32 %v1592, 0.0
      %v1616 = vmax.f32 %v1593, 0.0
      %v1617 = vmax.f32 %v1594, 0.0
      %v1618 = vmax.f32 %v1595, 0.0
      %v1619 = vmax.f32 %v1596, 0.0
      %v1620 = vmax.f32 %v1597, 0.0
      %v1621 = vmax.f32 %v1598, 0.0
      %v1622 = vmax.f32 %v1599, 0.0
      %v1623 = vmax.f32 %v1600, 0.0
      %v1624 = vmax.f32 %v1601, 0.0
      %v1625 = vmax.f32 %v1602, 0.0
      %v1626 = vmax.f32 %v1603, 0.0
      %v1627 = vmax.f32 %v1604, 0.0
      %v1651 = vcombine.high %v1605, %v1605
      %v1653 = vunpack.c.l.s4 1983009808
      %v1654 = vunpack.c.0.s8 %v1653
      %v1655 = vlaneseq
      %v1656 = vshrl.u32 %v1655, 7
      %v1657 = vsub.s32 %v1654, %v1656
      %v1658 = vrot.slane %v1605, %v1657
      %v1660 = vunpack.c.l.s4 1983009808
      %v1661 = vunpack.c.0.s8 %v1660
      %v1662 = vlaneseq
      %v1663 = vshrl.u32 %v1662, 7
      %v1664 = vsub.s32 %v1661, %v1663
      %v1665 = vrot.slane %v1651, %v1664
      %v1666 = vcombine.high %v1658, %v1658
      %v1667 = vcombine.high %v1665, %v1665
      %v1668 = vcombine.high %v1606, %v1606
      %v1670 = vunpack.c.l.s4 1983009808
      %v1671 = vunpack.c.0.s8 %v1670
      %v1672 = vlaneseq
      %v1673 = vshrl.u32 %v1672, 7
      %v1674 = vsub.s32 %v1671, %v1673
      %v1675 = vrot.slane %v1606, %v1674
      %v1677 = vunpack.c.l.s4 1983009808
      %v1678 = vunpack.c.0.s8 %v1677
      %v1679 = vlaneseq
      %v1680 = vshrl.u32 %v1679, 7
      %v1681 = vsub.s32 %v1678, %v1680
      %v1682 = vrot.slane %v1668, %v1681
      %v1683 = vcombine.high %v1675, %v1675
      %v1684 = vcombine.high %v1682, %v1682
      %v1685 = vcombine.high %v1607, %v1607
      %v1687 = vunpack.c.l.s4 1983009808
      %v1688 = vunpack.c.0.s8 %v1687
      %v1689 = vlaneseq
      %v1690 = vshrl.u32 %v1689, 7
      %v1691 = vsub.s32 %v1688, %v1690
      %v1692 = vrot.slane %v1607, %v1691
      %v1694 = vunpack.c.l.s4 1983009808
      %v1695 = vunpack.c.0.s8 %v1694
      %v1696 = vlaneseq
      %v1697 = vshrl.u32 %v1696, 7
      %v1698 = vsub.s32 %v1695, %v1697
      %v1699 = vrot.slane %v1685, %v1698
      %v1700 = vcombine.high %v1692, %v1692
      %v1701 = vcombine.high %v1699, %v1699
      %v1702 = vcombine.high %v1608, %v1608
      %v1704 = vunpack.c.l.s4 1983009808
      %v1705 = vunpack.c.0.s8 %v1704
      %v1706 = vlaneseq
      %v1707 = vshrl.u32 %v1706, 7
      %v1708 = vsub.s32 %v1705, %v1707
      %v1709 = vrot.slane %v1608, %v1708
      %v1711 = vunpack.c.l.s4 1983009808
      %v1712 = vunpack.c.0.s8 %v1711
      %v1713 = vlaneseq
      %v1714 = vshrl.u32 %v1713, 7
      %v1715 = vsub.s32 %v1712, %v1714
      %v1716 = vrot.slane %v1702, %v1715
      %v1717 = vcombine.high %v1709, %v1709
      %v1718 = vcombine.high %v1716, %v1716
      %v1719 = vcombine.high %v1609, %v1609
      %v1721 = vunpack.c.l.s4 1983009808
      %v1722 = vunpack.c.0.s8 %v1721
      %v1723 = vlaneseq
      %v1724 = vshrl.u32 %v1723, 7
      %v1725 = vsub.s32 %v1722, %v1724
      %v1726 = vrot.slane %v1609, %v1725
      %v1728 = vunpack.c.l.s4 1983009808
      %v1729 = vunpack.c.0.s8 %v1728
      %v1730 = vlaneseq
      %v1731 = vshrl.u32 %v1730, 7
      %v1732 = vsub.s32 %v1729, %v1731
      %v1733 = vrot.slane %v1719, %v1732
      %v1734 = vcombine.high %v1726, %v1726
      %v1735 = vcombine.high %v1733, %v1733
      %v1736 = vcombine.high %v1610, %v1610
      %v1738 = vunpack.c.l.s4 1983009808
      %v1739 = vunpack.c.0.s8 %v1738
      %v1740 = vlaneseq
      %v1741 = vshrl.u32 %v1740, 7
      %v1742 = vsub.s32 %v1739, %v1741
      %v1743 = vrot.slane %v1610, %v1742
      %v1745 = vunpack.c.l.s4 1983009808
      %v1746 = vunpack.c.0.s8 %v1745
      %v1747 = vlaneseq
      %v1748 = vshrl.u32 %v1747, 7
      %v1749 = vsub.s32 %v1746, %v1748
      %v1750 = vrot.slane %v1736, %v1749
      %v1751 = vcombine.high %v1743, %v1743
      %v1752 = vcombine.high %v1750, %v1750
      %v1753 = vcombine.high %v1611, %v1611
      %v1755 = vunpack.c.l.s4 1983009808
      %v1756 = vunpack.c.0.s8 %v1755
      %v1757 = vlaneseq
      %v1758 = vshrl.u32 %v1757, 7
      %v1759 = vsub.s32 %v1756, %v1758
      %v1760 = vrot.slane %v1611, %v1759
      %v1762 = vunpack.c.l.s4 1983009808
      %v1763 = vunpack.c.0.s8 %v1762
      %v1764 = vlaneseq
      %v1765 = vshrl.u32 %v1764, 7
      %v1766 = vsub.s32 %v1763, %v1765
      %v1767 = vrot.slane %v1753, %v1766
      %v1768 = vcombine.high %v1760, %v1760
      %v1769 = vcombine.high %v1767, %v1767
      %v1770 = vcombine.high %v1612, %v1612
      %v1772 = vunpack.c.l.s4 1983009808
      %v1773 = vunpack.c.0.s8 %v1772
      %v1774 = vlaneseq
      %v1775 = vshrl.u32 %v1774, 7
      %v1776 = vsub.s32 %v1773, %v1775
      %v1777 = vrot.slane %v1612, %v1776
      %v1779 = vunpack.c.l.s4 1983009808
      %v1780 = vunpack.c.0.s8 %v1779
      %v1781 = vlaneseq
      %v1782 = vshrl.u32 %v1781, 7
      %v1783 = vsub.s32 %v1780, %v1782
      %v1784 = vrot.slane %v1770, %v1783
      %v1785 = vcombine.high %v1777, %v1777
      %v1786 = vcombine.high %v1784, %v1784
      %v1787 = vcombine.high %v1613, %v1613
      %v1789 = vunpack.c.l.s4 1983009808
      %v1790 = vunpack.c.0.s8 %v1789
      %v1791 = vlaneseq
      %v1792 = vshrl.u32 %v1791, 7
      %v1793 = vsub.s32 %v1790, %v1792
      %v1794 = vrot.slane %v1613, %v1793
      %v1796 = vunpack.c.l.s4 1983009808
      %v1797 = vunpack.c.0.s8 %v1796
      %v1798 = vlaneseq
      %v1799 = vshrl.u32 %v1798, 7
      %v1800 = vsub.s32 %v1797, %v1799
      %v1801 = vrot.slane %v1787, %v1800
      %v1802 = vcombine.high %v1794, %v1794
      %v1803 = vcombine.high %v1801, %v1801
      %v1804 = vcombine.high %v1614, %v1614
      %v1806 = vunpack.c.l.s4 1983009808
      %v1807 = vunpack.c.0.s8 %v1806
      %v1808 = vlaneseq
      %v1809 = vshrl.u32 %v1808, 7
      %v1810 = vsub.s32 %v1807, %v1809
      %v1811 = vrot.slane %v1614, %v1810
      %v1813 = vunpack.c.l.s4 1983009808
      %v1814 = vunpack.c.0.s8 %v1813
      %v1815 = vlaneseq
      %v1816 = vshrl.u32 %v1815, 7
      %v1817 = vsub.s32 %v1814, %v1816
      %v1818 = vrot.slane %v1804, %v1817
      %v1819 = vcombine.high %v1811, %v1811
      %v1820 = vcombine.high %v1818, %v1818
      %v1821 = vcombine.high %v1615, %v1615
      %v1823 = vunpack.c.l.s4 1983009808
      %v1824 = vunpack.c.0.s8 %v1823
      %v1825 = vlaneseq
      %v1826 = vshrl.u32 %v1825, 7
      %v1827 = vsub.s32 %v1824, %v1826
      %v1828 = vrot.slane %v1615, %v1827
      %v1830 = vunpack.c.l.s4 1983009808
      %v1831 = vunpack.c.0.s8 %v1830
      %v1832 = vlaneseq
      %v1833 = vshrl.u32 %v1832, 7
      %v1834 = vsub.s32 %v1831, %v1833
      %v1835 = vrot.slane %v1821, %v1834
      %v1836 = vcombine.high %v1828, %v1828
      %v1837 = vcombine.high %v1835, %v1835
      %v1838 = vcombine.high %v1616, %v1616
      %v1840 = vunpack.c.l.s4 1983009808
      %v1841 = vunpack.c.0.s8 %v1840
      %v1842 = vlaneseq
      %v1843 = vshrl.u32 %v1842, 7
      %v1844 = vsub.s32 %v1841, %v1843
      %v1845 = vrot.slane %v1616, %v1844
      %v1847 = vunpack.c.l.s4 1983009808
      %v1848 = vunpack.c.0.s8 %v1847
      %v1849 = vlaneseq
      %v1850 = vshrl.u32 %v1849, 7
      %v1851 = vsub.s32 %v1848, %v1850
      %v1852 = vrot.slane %v1838, %v1851
      %v1853 = vcombine.high %v1845, %v1845
      %v1854 = vcombine.high %v1852, %v1852
      %v1855 = vcombine.high %v1617, %v1617
      %v1857 = vunpack.c.l.s4 1983009808
      %v1858 = vunpack.c.0.s8 %v1857
      %v1859 = vlaneseq
      %v1860 = vshrl.u32 %v1859, 7
      %v1861 = vsub.s32 %v1858, %v1860
      %v1862 = vrot.slane %v1617, %v1861
      %v1864 = vunpack.c.l.s4 1983009808
      %v1865 = vunpack.c.0.s8 %v1864
      %v1866 = vlaneseq
      %v1867 = vshrl.u32 %v1866, 7
      %v1868 = vsub.s32 %v1865, %v1867
      %v1869 = vrot.slane %v1855, %v1868
      %v1870 = vcombine.high %v1862, %v1862
      %v1871 = vcombine.high %v1869, %v1869
      %v1872 = vcombine.high %v1618, %v1618
      %v1874 = vunpack.c.l.s4 1983009808
      %v1875 = vunpack.c.0.s8 %v1874
      %v1876 = vlaneseq
      %v1877 = vshrl.u32 %v1876, 7
      %v1878 = vsub.s32 %v1875, %v1877
      %v1879 = vrot.slane %v1618, %v1878
      %v1881 = vunpack.c.l.s4 1983009808
      %v1882 = vunpack.c.0.s8 %v1881
      %v1883 = vlaneseq
      %v1884 = vshrl.u32 %v1883, 7
      %v1885 = vsub.s32 %v1882, %v1884
      %v1886 = vrot.slane %v1872, %v1885
      %v1887 = vcombine.high %v1879, %v1879
      %v1888 = vcombine.high %v1886, %v1886
      %v1889 = vcombine.high %v1619, %v1619
      %v1891 = vunpack.c.l.s4 1983009808
      %v1892 = vunpack.c.0.s8 %v1891
      %v1893 = vlaneseq
      %v1894 = vshrl.u32 %v1893, 7
      %v1895 = vsub.s32 %v1892, %v1894
      %v1896 = vrot.slane %v1619, %v1895
      %v1898 = vunpack.c.l.s4 1983009808
      %v1899 = vunpack.c.0.s8 %v1898
      %v1900 = vlaneseq
      %v1901 = vshrl.u32 %v1900, 7
      %v1902 = vsub.s32 %v1899, %v1901
      %v1903 = vrot.slane %v1889, %v1902
      %v1904 = vcombine.high %v1896, %v1896
      %v1905 = vcombine.high %v1903, %v1903
      %v1906 = vcombine.high %v1620, %v1620
      %v1908 = vunpack.c.l.s4 1983009808
      %v1909 = vunpack.c.0.s8 %v1908
      %v1910 = vlaneseq
      %v1911 = vshrl.u32 %v1910, 7
      %v1912 = vsub.s32 %v1909, %v1911
      %v1913 = vrot.slane %v1620, %v1912
      %v1915 = vunpack.c.l.s4 1983009808
      %v1916 = vunpack.c.0.s8 %v1915
      %v1917 = vlaneseq
      %v1918 = vshrl.u32 %v1917, 7
      %v1919 = vsub.s32 %v1916, %v1918
      %v1920 = vrot.slane %v1906, %v1919
      %v1921 = vcombine.high %v1913, %v1913
      %v1922 = vcombine.high %v1920, %v1920
      %v1923 = vcombine.high %v1621, %v1621
      %v1925 = vunpack.c.l.s4 1983009808
      %v1926 = vunpack.c.0.s8 %v1925
      %v1927 = vlaneseq
      %v1928 = vshrl.u32 %v1927, 7
      %v1929 = vsub.s32 %v1926, %v1928
      %v1930 = vrot.slane %v1621, %v1929
      %v1932 = vunpack.c.l.s4 1983009808
      %v1933 = vunpack.c.0.s8 %v1932
      %v1934 = vlaneseq
      %v1935 = vshrl.u32 %v1934, 7
      %v1936 = vsub.s32 %v1933, %v1935
      %v1937 = vrot.slane %v1923, %v1936
      %v1938 = vcombine.high %v1930, %v1930
      %v1939 = vcombine.high %v1937, %v1937
      %v1940 = vcombine.high %v1622, %v1622
      %v1942 = vunpack.c.l.s4 1983009808
      %v1943 = vunpack.c.0.s8 %v1942
      %v1944 = vlaneseq
      %v1945 = vshrl.u32 %v1944, 7
      %v1946 = vsub.s32 %v1943, %v1945
      %v1947 = vrot.slane %v1622, %v1946
      %v1949 = vunpack.c.l.s4 1983009808
      %v1950 = vunpack.c.0.s8 %v1949
      %v1951 = vlaneseq
      %v1952 = vshrl.u32 %v1951, 7
      %v1953 = vsub.s32 %v1950, %v1952
      %v1954 = vrot.slane %v1940, %v1953
      %v1955 = vcombine.high %v1947, %v1947
      %v1956 = vcombine.high %v1954, %v1954
      %v1957 = vcombine.high %v1623, %v1623
      %v1959 = vunpack.c.l.s4 1983009808
      %v1960 = vunpack.c.0.s8 %v1959
      %v1961 = vlaneseq
      %v1962 = vshrl.u32 %v1961, 7
      %v1963 = vsub.s32 %v1960, %v1962
      %v1964 = vrot.slane %v1623, %v1963
      %v1966 = vunpack.c.l.s4 1983009808
      %v1967 = vunpack.c.0.s8 %v1966
      %v1968 = vlaneseq
      %v1969 = vshrl.u32 %v1968, 7
      %v1970 = vsub.s32 %v1967, %v1969
      %v1971 = vrot.slane %v1957, %v1970
      %v1972 = vcombine.high %v1964, %v1964
      %v1973 = vcombine.high %v1971, %v1971
      %v1974 = vcombine.high %v1624, %v1624
      %v1976 = vunpack.c.l.s4 1983009808
      %v1977 = vunpack.c.0.s8 %v1976
      %v1978 = vlaneseq
      %v1979 = vshrl.u32 %v1978, 7
      %v1980 = vsub.s32 %v1977, %v1979
      %v1981 = vrot.slane %v1624, %v1980
      %v1983 = vunpack.c.l.s4 1983009808
      %v1984 = vunpack.c.0.s8 %v1983
      %v1985 = vlaneseq
      %v1986 = vshrl.u32 %v1985, 7
      %v1987 = vsub.s32 %v1984, %v1986
      %v1988 = vrot.slane %v1974, %v1987
      %v1989 = vcombine.high %v1981, %v1981
      %v1990 = vcombine.high %v1988, %v1988
      %v1991 = vcombine.high %v1625, %v1625
      %v1993 = vunpack.c.l.s4 1983009808
      %v1994 = vunpack.c.0.s8 %v1993
      %v1995 = vlaneseq
      %v1996 = vshrl.u32 %v1995, 7
      %v1997 = vsub.s32 %v1994, %v1996
      %v1998 = vrot.slane %v1625, %v1997
      %v2000 = vunpack.c.l.s4 1983009808
      %v2001 = vunpack.c.0.s8 %v2000
      %v2002 = vlaneseq
      %v2003 = vshrl.u32 %v2002, 7
      %v2004 = vsub.s32 %v2001, %v2003
      %v2005 = vrot.slane %v1991, %v2004
      %v2006 = vcombine.high %v1998, %v1998
      %v2007 = vcombine.high %v2005, %v2005
      %v2008 = vcombine.high %v1626, %v1626
      %v2010 = vunpack.c.l.s4 1983009808
      %v2011 = vunpack.c.0.s8 %v2010
      %v2012 = vlaneseq
      %v2013 = vshrl.u32 %v2012, 7
      %v2014 = vsub.s32 %v2011, %v2013
      %v2015 = vrot.slane %v1626, %v2014
      %v2017 = vunpack.c.l.s4 1983009808
      %v2018 = vunpack.c.0.s8 %v2017
      %v2019 = vlaneseq
      %v2020 = vshrl.u32 %v2019, 7
      %v2021 = vsub.s32 %v2018, %v2020
      %v2022 = vrot.slane %v2008, %v2021
      %v2023 = vcombine.high %v2015, %v2015
      %v2024 = vcombine.high %v2022, %v2022
      %v2026 = vunpack.c.l.s4 1983009808
      %v2027 = vunpack.c.0.s8 %v2026
      %v2028 = vlaneseq
      %v2029 = vshrl.u32 %v2028, 7
      %v2030 = vsub.s32 %v2027, %v2029
      %v2031 = vrot.slane %v1627, %v2030
      %v2032 = vcombine.high %v2031, %v2031
      %s2033 = smul.u32 %s27, 8
      %s2034 = ssub.s32 %s2033, 1
      %v2035 = vstv %s2034
      %v2036 = vadd.s32 %v2035, 1
      %v2037 = vadd.s32 %v2035, 2
      %v2038 = vadd.s32 %v2035, 3
      %v2039 = vadd.s32 %v2035, 4
      %v2040 = vadd.s32 %v2035, 5
      %v2041 = vadd.s32 %v2035, 6
      %v2042 = vadd.s32 %v2035, 7
      %v2043 = vadd.s32 %v2035, 8
      %v2044 = vadd.s32 %v2035, 9
      %v2045 = vlaneseq
      %v2046 = vshrl.u32 %v2045, 7
      %v2047 = vadd.s32 %v2046, 8
      %v2048 = vadd.s32 %v2046, 16
      %vm2049 = vcmp.ge.s32.totalorder %v2035, 0
      %vm2050 = vcmp.ge.s32.totalorder %v2036, 0
      %vm2051 = vcmp.ge.s32.totalorder %v2037, 0
      %vm2052 = vcmp.ge.s32.totalorder %v2038, 0
      %vm2053 = vcmp.ge.s32.totalorder %v2039, 0
      %vm2054 = vcmp.ge.s32.totalorder %v2040, 0
      %vm2055 = vcmp.ge.s32.totalorder %v2041, 0
      %vm2056 = vcmp.ge.s32.totalorder %v2042, 0
      %vm2057 = vcmp.ge.s32.totalorder %v2043, 0
      %vm2058 = vcmp.ge.s32.totalorder %v2044, 0
      %vm2059 = vcmp.lt.s32.totalorder %v2035, 16
      %vm2060 = vcmp.lt.s32.totalorder %v2036, 16
      %vm2061 = vcmp.lt.s32.totalorder %v2037, 16
      %vm2062 = vcmp.lt.s32.totalorder %v2038, 16
      %vm2063 = vcmp.lt.s32.totalorder %v2039, 16
      %vm2064 = vcmp.lt.s32.totalorder %v2040, 16
      %vm2065 = vcmp.lt.s32.totalorder %v2041, 16
      %vm2066 = vcmp.lt.s32.totalorder %v2042, 16
      %vm2067 = vcmp.lt.s32.totalorder %v2043, 16
      %vm2068 = vcmp.lt.s32.totalorder %v2044, 16
      %vm2069 = vmand %vm2049, %vm2059
      %vm2070 = vmand %vm2050, %vm2060
      %vm2071 = vmand %vm2051, %vm2061
      %vm2072 = vmand %vm2052, %vm2062
      %vm2073 = vmand %vm2053, %vm2063
      %vm2074 = vmand %vm2054, %vm2064
      %vm2075 = vmand %vm2055, %vm2065
      %vm2076 = vmand %vm2056, %vm2066
      %vm2077 = vmand %vm2057, %vm2067
      %vm2078 = vmand %vm2058, %vm2068
      %vm2079 = vcmp.ge.s32.totalorder %v2046, 1
      %vm2080 = vcmp.ge.s32.totalorder %v2047, 1
      %vm2081 = vcmp.ge.s32.totalorder %v2048, 1
      %vm2082 = vmand %vm2069, %vm2079
      %vm2083 = vmand %vm2069, %vm2080
      %vm2084 = vmand %vm2069, %vm2081
      %vm2085 = vmand %vm2070, %vm2079
      %vm2086 = vmand %vm2070, %vm2080
      %vm2087 = vmand %vm2070, %vm2081
      %vm2088 = vmand %vm2071, %vm2079
      %vm2089 = vmand %vm2071, %vm2080
      %vm2090 = vmand %vm2071, %vm2081
      %vm2091 = vmand %vm2072, %vm2079
      %vm2092 = vmand %vm2072, %vm2080
      %vm2093 = vmand %vm2072, %vm2081
      %vm2094 = vmand %vm2073, %vm2079
      %vm2095 = vmand %vm2073, %vm2080
      %vm2096 = vmand %vm2073, %vm2081
      %vm2097 = vmand %vm2074, %vm2079
      %vm2098 = vmand %vm2074, %vm2080
      %vm2099 = vmand %vm2074, %vm2081
      %vm2100 = vmand %vm2075, %vm2079
      %vm2101 = vmand %vm2075, %vm2080
      %vm2102 = vmand %vm2075, %vm2081
      %vm2103 = vmand %vm2076, %vm2079
      %vm2104 = vmand %vm2076, %vm2080
      %vm2105 = vmand %vm2076, %vm2081
      %vm2106 = vmand %vm2077, %vm2079
      %vm2107 = vmand %vm2077, %vm2080
      %vm2108 = vmand %vm2077, %vm2081
      %vm2109 = vmand %vm2078, %vm2079
      %vm2110 = vmand %vm2078, %vm2080
      %vm2111 = vmand %vm2078, %vm2081
      %vm2112 = vcmp.lt.s32.totalorder %v2046, 17
      %vm2113 = vcmp.lt.s32.totalorder %v2047, 17
      %vm2114 = vcmp.lt.s32.totalorder %v2048, 17
      %vm2115 = vmand %vm2082, %vm2112
      %vm2116 = vmand %vm2083, %vm2113
      %vm2117 = vmand %vm2084, %vm2114
      %vm2118 = vmand %vm2085, %vm2112
      %vm2119 = vmand %vm2086, %vm2113
      %vm2120 = vmand %vm2087, %vm2114
      %vm2121 = vmand %vm2088, %vm2112
      %vm2122 = vmand %vm2089, %vm2113
      %vm2123 = vmand %vm2090, %vm2114
      %vm2124 = vmand %vm2091, %vm2112
      %vm2125 = vmand %vm2092, %vm2113
      %vm2126 = vmand %vm2093, %vm2114
      %vm2127 = vmand %vm2094, %vm2112
      %vm2128 = vmand %vm2095, %vm2113
      %vm2129 = vmand %vm2096, %vm2114
      %vm2130 = vmand %vm2097, %vm2112
      %vm2131 = vmand %vm2098, %vm2113
      %vm2132 = vmand %vm2099, %vm2114
      %vm2133 = vmand %vm2100, %vm2112
      %vm2134 = vmand %vm2101, %vm2113
      %vm2135 = vmand %vm2102, %vm2114
      %vm2136 = vmand %vm2103, %vm2112
      %vm2137 = vmand %vm2104, %vm2113
      %vm2138 = vmand %vm2105, %vm2114
      %vm2139 = vmand %vm2106, %vm2112
      %vm2140 = vmand %vm2107, %vm2113
      %vm2141 = vmand %vm2108, %vm2114
      %vm2142 = vmand %vm2109, %vm2112
      %vm2143 = vmand %vm2110, %vm2113
      %vm2144 = vmand %vm2111, %vm2114
      %v2145 = vcombine.low %v1658, %v1666
      %v2146 = vcombine.low %v1665, %v1667
      %v2148 = vunpack.c.l.s4 1983009808
      %v2149 = vunpack.c.0.s8 %v2148
      %v2150 = vlaneseq
      %v2151 = vshrl.u32 %v2150, 7
      %v2152 = vsub.s32 %v2149, %v2151
      %v2153 = vrot.slane %v2145, %v2152
      %v2155 = vunpack.c.l.s4 1983009808
      %v2156 = vunpack.c.0.s8 %v2155
      %v2157 = vlaneseq
      %v2158 = vshrl.u32 %v2157, 7
      %v2159 = vsub.s32 %v2156, %v2158
      %v2160 = vrot.slane %v2146, %v2159
      %v2161 = vcombine.low %v2153, %v2160
      %v2162 = vcombine.low %v1675, %v1683
      %v2163 = vcombine.low %v1682, %v1684
      %v2165 = vunpack.c.l.s4 1983009808
      %v2166 = vunpack.c.0.s8 %v2165
      %v2167 = vlaneseq
      %v2168 = vshrl.u32 %v2167, 7
      %v2169 = vsub.s32 %v2166, %v2168
      %v2170 = vrot.slane %v2162, %v2169
      %v2172 = vunpack.c.l.s4 1983009808
      %v2173 = vunpack.c.0.s8 %v2172
      %v2174 = vlaneseq
      %v2175 = vshrl.u32 %v2174, 7
      %v2176 = vsub.s32 %v2173, %v2175
      %v2177 = vrot.slane %v2163, %v2176
      %v2178 = vcombine.low %v2170, %v2177
      %v2180 = vunpack.c.l.s4 1983009808
      %v2181 = vunpack.c.0.s8 %v2180
      %v2182 = vlaneseq
      %v2183 = vshrl.u32 %v2182, 7
      %v2184 = vsub.s32 %v2181, %v2183
      %v2185 = vrot.slane %v1692, %v2184
      %v2186 = vcombine.low %v1700, %v1699
      %v2187 = vcombine.low %v1701, %v1709
      %v2189 = vunpack.c.l.s4 1983009808
      %v2190 = vunpack.c.0.s8 %v2189
      %v2191 = vlaneseq
      %v2192 = vshrl.u32 %v2191, 7
      %v2193 = vsub.s32 %v2190, %v2192
      %v2194 = vrot.slane %v2186, %v2193
      %v2196 = vunpack.c.l.s4 1983009808
      %v2197 = vunpack.c.0.s8 %v2196
      %v2198 = vlaneseq
      %v2199 = vshrl.u32 %v2198, 7
      %v2200 = vsub.s32 %v2197, %v2199
      %v2201 = vrot.slane %v2187, %v2200
      %v2202 = vcombine.low %v2194, %v2201
      %v2203 = vcombine.low %v1717, %v1716
      %v2204 = vcombine.low %v1718, %v1726
      %v2206 = vunpack.c.l.s4 1983009808
      %v2207 = vunpack.c.0.s8 %v2206
      %v2208 = vlaneseq
      %v2209 = vshrl.u32 %v2208, 7
      %v2210 = vsub.s32 %v2207, %v2209
      %v2211 = vrot.slane %v2203, %v2210
      %v2213 = vunpack.c.l.s4 1983009808
      %v2214 = vunpack.c.0.s8 %v2213
      %v2215 = vlaneseq
      %v2216 = vshrl.u32 %v2215, 7
      %v2217 = vsub.s32 %v2214, %v2216
      %v2218 = vrot.slane %v2204, %v2217
      %v2219 = vcombine.low %v2211, %v2218
      %v2221 = vunpack.c.l.s4 1983009808
      %v2222 = vunpack.c.0.s8 %v2221
      %v2223 = vlaneseq
      %v2224 = vshrl.u32 %v2223, 7
      %v2225 = vsub.s32 %v2222, %v2224
      %v2226 = vrot.slane %v1734, %v2225
      %v2227 = vcombine.low %v1733, %v1735
      %v2228 = vcombine.low %v1743, %v1751
      %v2230 = vunpack.c.l.s4 1983009808
      %v2231 = vunpack.c.0.s8 %v2230
      %v2232 = vlaneseq
      %v2233 = vshrl.u32 %v2232, 7
      %v2234 = vsub.s32 %v2231, %v2233
      %v2235 = vrot.slane %v2227, %v2234
      %v2237 = vunpack.c.l.s4 1983009808
      %v2238 = vunpack.c.0.s8 %v2237
      %v2239 = vlaneseq
      %v2240 = vshrl.u32 %v2239, 7
      %v2241 = vsub.s32 %v2238, %v2240
      %v2242 = vrot.slane %v2228, %v2241
      %v2243 = vcombine.low %v2235, %v2242
      %v2244 = vcombine.low %v1750, %v1752
      %v2245 = vcombine.low %v1760, %v1768
      %v2247 = vunpack.c.l.s4 1983009808
      %v2248 = vunpack.c.0.s8 %v2247
      %v2249 = vlaneseq
      %v2250 = vshrl.u32 %v2249, 7
      %v2251 = vsub.s32 %v2248, %v2250
      %v2252 = vrot.slane %v2244, %v2251
      %v2254 = vunpack.c.l.s4 1983009808
      %v2255 = vunpack.c.0.s8 %v2254
      %v2256 = vlaneseq
      %v2257 = vshrl.u32 %v2256, 7
      %v2258 = vsub.s32 %v2255, %v2257
      %v2259 = vrot.slane %v2245, %v2258
      %v2260 = vcombine.low %v2252, %v2259
      %v2262 = vunpack.c.l.s4 1983009808
      %v2263 = vunpack.c.0.s8 %v2262
      %v2264 = vlaneseq
      %v2265 = vshrl.u32 %v2264, 7
      %v2266 = vsub.s32 %v2263, %v2265
      %v2267 = vrot.slane %v1767, %v2266
      %v2268 = vcombine.low %v1769, %v1777
      %v2269 = vcombine.low %v1785, %v1784
      %v2271 = vunpack.c.l.s4 1983009808
      %v2272 = vunpack.c.0.s8 %v2271
      %v2273 = vlaneseq
      %v2274 = vshrl.u32 %v2273, 7
      %v2275 = vsub.s32 %v2272, %v2274
      %v2276 = vrot.slane %v2268, %v2275
      %v2278 = vunpack.c.l.s4 1983009808
      %v2279 = vunpack.c.0.s8 %v2278
      %v2280 = vlaneseq
      %v2281 = vshrl.u32 %v2280, 7
      %v2282 = vsub.s32 %v2279, %v2281
      %v2283 = vrot.slane %v2269, %v2282
      %v2284 = vcombine.low %v2276, %v2283
      %v2285 = vcombine.low %v1786, %v1794
      %v2286 = vcombine.low %v1802, %v1801
      %v2288 = vunpack.c.l.s4 1983009808
      %v2289 = vunpack.c.0.s8 %v2288
      %v2290 = vlaneseq
      %v2291 = vshrl.u32 %v2290, 7
      %v2292 = vsub.s32 %v2289, %v2291
      %v2293 = vrot.slane %v2285, %v2292
      %v2295 = vunpack.c.l.s4 1983009808
      %v2296 = vunpack.c.0.s8 %v2295
      %v2297 = vlaneseq
      %v2298 = vshrl.u32 %v2297, 7
      %v2299 = vsub.s32 %v2296, %v2298
      %v2300 = vrot.slane %v2286, %v2299
      %v2301 = vcombine.low %v2293, %v2300
      %v2303 = vunpack.c.l.s4 1983009808
      %v2304 = vunpack.c.0.s8 %v2303
      %v2305 = vlaneseq
      %v2306 = vshrl.u32 %v2305, 7
      %v2307 = vsub.s32 %v2304, %v2306
      %v2308 = vrot.slane %v1803, %v2307
      %v2309 = vcombine.low %v1811, %v1819
      %v2310 = vcombine.low %v1818, %v1820
      %v2312 = vunpack.c.l.s4 1983009808
      %v2313 = vunpack.c.0.s8 %v2312
      %v2314 = vlaneseq
      %v2315 = vshrl.u32 %v2314, 7
      %v2316 = vsub.s32 %v2313, %v2315
      %v2317 = vrot.slane %v2309, %v2316
      %v2319 = vunpack.c.l.s4 1983009808
      %v2320 = vunpack.c.0.s8 %v2319
      %v2321 = vlaneseq
      %v2322 = vshrl.u32 %v2321, 7
      %v2323 = vsub.s32 %v2320, %v2322
      %v2324 = vrot.slane %v2310, %v2323
      %v2325 = vcombine.low %v2317, %v2324
      %v2326 = vcombine.low %v1828, %v1836
      %v2327 = vcombine.low %v1835, %v1837
      %v2329 = vunpack.c.l.s4 1983009808
      %v2330 = vunpack.c.0.s8 %v2329
      %v2331 = vlaneseq
      %v2332 = vshrl.u32 %v2331, 7
      %v2333 = vsub.s32 %v2330, %v2332
      %v2334 = vrot.slane %v2326, %v2333
      %v2336 = vunpack.c.l.s4 1983009808
      %v2337 = vunpack.c.0.s8 %v2336
      %v2338 = vlaneseq
      %v2339 = vshrl.u32 %v2338, 7
      %v2340 = vsub.s32 %v2337, %v2339
      %v2341 = vrot.slane %v2327, %v2340
      %v2342 = vcombine.low %v2334, %v2341
      %v2344 = vunpack.c.l.s4 1983009808
      %v2345 = vunpack.c.0.s8 %v2344
      %v2346 = vlaneseq
      %v2347 = vshrl.u32 %v2346, 7
      %v2348 = vsub.s32 %v2345, %v2347
      %v2349 = vrot.slane %v1845, %v2348
      %v2350 = vcombine.low %v1853, %v1852
      %v2351 = vcombine.low %v1854, %v1862
      %v2353 = vunpack.c.l.s4 1983009808
      %v2354 = vunpack.c.0.s8 %v2353
      %v2355 = vlaneseq
      %v2356 = vshrl.u32 %v2355, 7
      %v2357 = vsub.s32 %v2354, %v2356
      %v2358 = vrot.slane %v2350, %v2357
      %v2360 = vunpack.c.l.s4 1983009808
      %v2361 = vunpack.c.0.s8 %v2360
      %v2362 = vlaneseq
      %v2363 = vshrl.u32 %v2362, 7
      %v2364 = vsub.s32 %v2361, %v2363
      %v2365 = vrot.slane %v2351, %v2364
      %v2366 = vcombine.low %v2358, %v2365
      %v2367 = vcombine.low %v1870, %v1869
      %v2368 = vcombine.low %v1871, %v1879
      %v2370 = vunpack.c.l.s4 1983009808
      %v2371 = vunpack.c.0.s8 %v2370
      %v2372 = vlaneseq
      %v2373 = vshrl.u32 %v2372, 7
      %v2374 = vsub.s32 %v2371, %v2373
      %v2375 = vrot.slane %v2367, %v2374
      %v2377 = vunpack.c.l.s4 1983009808
      %v2378 = vunpack.c.0.s8 %v2377
      %v2379 = vlaneseq
      %v2380 = vshrl.u32 %v2379, 7
      %v2381 = vsub.s32 %v2378, %v2380
      %v2382 = vrot.slane %v2368, %v2381
      %v2383 = vcombine.low %v2375, %v2382
      %v2385 = vunpack.c.l.s4 1983009808
      %v2386 = vunpack.c.0.s8 %v2385
      %v2387 = vlaneseq
      %v2388 = vshrl.u32 %v2387, 7
      %v2389 = vsub.s32 %v2386, %v2388
      %v2390 = vrot.slane %v1887, %v2389
      %v2391 = vcombine.low %v1886, %v1888
      %v2392 = vcombine.low %v1896, %v1904
      %v2394 = vunpack.c.l.s4 1983009808
      %v2395 = vunpack.c.0.s8 %v2394
      %v2396 = vlaneseq
      %v2397 = vshrl.u32 %v2396, 7
      %v2398 = vsub.s32 %v2395, %v2397
      %v2399 = vrot.slane %v2391, %v2398
      %v2401 = vunpack.c.l.s4 1983009808
      %v2402 = vunpack.c.0.s8 %v2401
      %v2403 = vlaneseq
      %v2404 = vshrl.u32 %v2403, 7
      %v2405 = vsub.s32 %v2402, %v2404
      %v2406 = vrot.slane %v2392, %v2405
      %v2407 = vcombine.low %v2399, %v2406
      %v2408 = vcombine.low %v1903, %v1905
      %v2409 = vcombine.low %v1913, %v1921
      %v2411 = vunpack.c.l.s4 1983009808
      %v2412 = vunpack.c.0.s8 %v2411
      %v2413 = vlaneseq
      %v2414 = vshrl.u32 %v2413, 7
      %v2415 = vsub.s32 %v2412, %v2414
      %v2416 = vrot.slane %v2408, %v2415
      %v2418 = vunpack.c.l.s4 1983009808
      %v2419 = vunpack.c.0.s8 %v2418
      %v2420 = vlaneseq
      %v2421 = vshrl.u32 %v2420, 7
      %v2422 = vsub.s32 %v2419, %v2421
      %v2423 = vrot.slane %v2409, %v2422
      %v2424 = vcombine.low %v2416, %v2423
      %v2426 = vunpack.c.l.s4 1983009808
      %v2427 = vunpack.c.0.s8 %v2426
      %v2428 = vlaneseq
      %v2429 = vshrl.u32 %v2428, 7
      %v2430 = vsub.s32 %v2427, %v2429
      %v2431 = vrot.slane %v1920, %v2430
      %v2432 = vcombine.low %v1922, %v1930
      %v2433 = vcombine.low %v1938, %v1937
      %v2435 = vunpack.c.l.s4 1983009808
      %v2436 = vunpack.c.0.s8 %v2435
      %v2437 = vlaneseq
      %v2438 = vshrl.u32 %v2437, 7
      %v2439 = vsub.s32 %v2436, %v2438
      %v2440 = vrot.slane %v2432, %v2439
      %v2442 = vunpack.c.l.s4 1983009808
      %v2443 = vunpack.c.0.s8 %v2442
      %v2444 = vlaneseq
      %v2445 = vshrl.u32 %v2444, 7
      %v2446 = vsub.s32 %v2443, %v2445
      %v2447 = vrot.slane %v2433, %v2446
      %v2448 = vcombine.low %v2440, %v2447
      %v2449 = vcombine.low %v1939, %v1947
      %v2450 = vcombine.low %v1955, %v1954
      %v2452 = vunpack.c.l.s4 1983009808
      %v2453 = vunpack.c.0.s8 %v2452
      %v2454 = vlaneseq
      %v2455 = vshrl.u32 %v2454, 7
      %v2456 = vsub.s32 %v2453, %v2455
      %v2457 = vrot.slane %v2449, %v2456
      %v2459 = vunpack.c.l.s4 1983009808
      %v2460 = vunpack.c.0.s8 %v2459
      %v2461 = vlaneseq
      %v2462 = vshrl.u32 %v2461, 7
      %v2463 = vsub.s32 %v2460, %v2462
      %v2464 = vrot.slane %v2450, %v2463
      %v2465 = vcombine.low %v2457, %v2464
      %v2467 = vunpack.c.l.s4 1983009808
      %v2468 = vunpack.c.0.s8 %v2467
      %v2469 = vlaneseq
      %v2470 = vshrl.u32 %v2469, 7
      %v2471 = vsub.s32 %v2468, %v2470
      %v2472 = vrot.slane %v1956, %v2471
      %v2473 = vcombine.low %v1964, %v1972
      %v2474 = vcombine.low %v1971, %v1973
      %v2476 = vunpack.c.l.s4 1983009808
      %v2477 = vunpack.c.0.s8 %v2476
      %v2478 = vlaneseq
      %v2479 = vshrl.u32 %v2478, 7
      %v2480 = vsub.s32 %v2477, %v2479
      %v2481 = vrot.slane %v2473, %v2480
      %v2483 = vunpack.c.l.s4 1983009808
      %v2484 = vunpack.c.0.s8 %v2483
      %v2485 = vlaneseq
      %v2486 = vshrl.u32 %v2485, 7
      %v2487 = vsub.s32 %v2484, %v2486
      %v2488 = vrot.slane %v2474, %v2487
      %v2489 = vcombine.low %v2481, %v2488
      %v2490 = vcombine.low %v1981, %v1989
      %v2491 = vcombine.low %v1988, %v1990
      %v2493 = vunpack.c.l.s4 1983009808
      %v2494 = vunpack.c.0.s8 %v2493
      %v2495 = vlaneseq
      %v2496 = vshrl.u32 %v2495, 7
      %v2497 = vsub.s32 %v2494, %v2496
      %v2498 = vrot.slane %v2490, %v2497
      %v2500 = vunpack.c.l.s4 1983009808
      %v2501 = vunpack.c.0.s8 %v2500
      %v2502 = vlaneseq
      %v2503 = vshrl.u32 %v2502, 7
      %v2504 = vsub.s32 %v2501, %v2503
      %v2505 = vrot.slane %v2491, %v2504
      %v2506 = vcombine.low %v2498, %v2505
      %v2508 = vunpack.c.l.s4 1983009808
      %v2509 = vunpack.c.0.s8 %v2508
      %v2510 = vlaneseq
      %v2511 = vshrl.u32 %v2510, 7
      %v2512 = vsub.s32 %v2509, %v2511
      %v2513 = vrot.slane %v1998, %v2512
      %v2514 = vcombine.low %v2006, %v2005
      %v2515 = vcombine.low %v2007, %v2015
      %v2517 = vunpack.c.l.s4 1983009808
      %v2518 = vunpack.c.0.s8 %v2517
      %v2519 = vlaneseq
      %v2520 = vshrl.u32 %v2519, 7
      %v2521 = vsub.s32 %v2518, %v2520
      %v2522 = vrot.slane %v2514, %v2521
      %v2524 = vunpack.c.l.s4 1983009808
      %v2525 = vunpack.c.0.s8 %v2524
      %v2526 = vlaneseq
      %v2527 = vshrl.u32 %v2526, 7
      %v2528 = vsub.s32 %v2525, %v2527
      %v2529 = vrot.slane %v2515, %v2528
      %v2530 = vcombine.low %v2522, %v2529
      %v2531 = vcombine.low %v2023, %v2022
      %v2532 = vcombine.low %v2024, %v2031
      %v2534 = vunpack.c.l.s4 1983009808
      %v2535 = vunpack.c.0.s8 %v2534
      %v2536 = vlaneseq
      %v2537 = vshrl.u32 %v2536, 7
      %v2538 = vsub.s32 %v2535, %v2537
      %v2539 = vrot.slane %v2531, %v2538
      %v2541 = vunpack.c.l.s4 1983009808
      %v2542 = vunpack.c.0.s8 %v2541
      %v2543 = vlaneseq
      %v2544 = vshrl.u32 %v2543, 7
      %v2545 = vsub.s32 %v2542, %v2544
      %v2546 = vrot.slane %v2532, %v2545
      %v2547 = vcombine.low %v2539, %v2546
      %v2549 = vunpack.c.l.s4 1983009808
      %v2550 = vunpack.c.0.s8 %v2549
      %v2551 = vlaneseq
      %v2552 = vshrl.u32 %v2551, 7
      %v2553 = vsub.s32 %v2550, %v2552
      %v2554 = vrot.slane %v2032, %v2553
      %v2585 = vsel %vm2115, %v2161, 0.0
      %v2586 = vsel %vm2116, %v2178, 0.0
      %v2587 = vsel %vm2117, %v2185, 0.0
      %v2588 = vsel %vm2118, %v2202, 0.0
      %v2589 = vsel %vm2119, %v2219, 0.0
      %v2590 = vsel %vm2120, %v2226, 0.0
      %v2591 = vsel %vm2121, %v2243, 0.0
      %v2592 = vsel %vm2122, %v2260, 0.0
      %v2593 = vsel %vm2123, %v2267, 0.0
      %v2594 = vsel %vm2124, %v2284, 0.0
      %v2595 = vsel %vm2125, %v2301, 0.0
      %v2596 = vsel %vm2126, %v2308, 0.0
      %v2597 = vsel %vm2127, %v2325, 0.0
      %v2598 = vsel %vm2128, %v2342, 0.0
      %v2599 = vsel %vm2129, %v2349, 0.0
      %v2600 = vsel %vm2130, %v2366, 0.0
      %v2601 = vsel %vm2131, %v2383, 0.0
      %v2602 = vsel %vm2132, %v2390, 0.0
      %v2603 = vsel %vm2133, %v2407, 0.0
      %v2604 = vsel %vm2134, %v2424, 0.0
      %v2605 = vsel %vm2135, %v2431, 0.0
      %v2606 = vsel %vm2136, %v2448, 0.0
      %v2607 = vsel %vm2137, %v2465, 0.0
      %v2608 = vsel %vm2138, %v2472, 0.0
      %v2609 = vsel %vm2139, %v2489, 0.0
      %v2610 = vsel %vm2140, %v2506, 0.0
      %v2611 = vsel %vm2141, %v2513, 0.0
      %v2612 = vsel %vm2142, %v2530, 0.0
      %v2613 = vsel %vm2143, %v2547, 0.0
      %v2614 = vsel %vm2144, %v2554, 0.0
      %v2615 = vpack.c.bf16 %v2586, %v2585
      %v2616 = vpack.c.bf16 %v2587, %v2587
      %v2617 = vpack.c.bf16 %v2589, %v2588
      %v2618 = vpack.c.bf16 %v2590, %v2590
      %v2619 = vpack.c.bf16 %v2592, %v2591
      %v2620 = vpack.c.bf16 %v2593, %v2593
      %v2621 = vpack.c.bf16 %v2595, %v2594
      %v2622 = vpack.c.bf16 %v2596, %v2596
      %v2623 = vpack.c.bf16 %v2598, %v2597
      %v2624 = vpack.c.bf16 %v2599, %v2599
      %v2625 = vpack.c.bf16 %v2601, %v2600
      %v2626 = vpack.c.bf16 %v2602, %v2602
      %v2627 = vpack.c.bf16 %v2604, %v2603
      %v2628 = vpack.c.bf16 %v2605, %v2605
      %v2629 = vpack.c.bf16 %v2607, %v2606
      %v2630 = vpack.c.bf16 %v2608, %v2608
      %v2631 = vpack.c.bf16 %v2610, %v2609
      %v2632 = vpack.c.bf16 %v2611, %v2611
      %v2633 = vpack.c.bf16 %v2613, %v2612
      %v2634 = vpack.c.bf16 %v2614, %v2614
      %v2655 = vunpack.c.l.b16 %v2615
      %v2656 = vunpack.c.h.b16 %v2615
      %v2657 = vunpack.c.l.b16 %v2616
      %v2658 = vunpack.c.l.b16 %v2617
      %v2659 = vunpack.c.h.b16 %v2617
      %v2660 = vunpack.c.l.b16 %v2618
      %v2661 = vunpack.c.l.b16 %v2619
      %v2662 = vunpack.c.h.b16 %v2619
      %v2663 = vunpack.c.l.b16 %v2620
      %v2664 = vunpack.c.l.b16 %v2621
      %v2665 = vunpack.c.h.b16 %v2621
      %v2666 = vunpack.c.l.b16 %v2622
      %v2667 = vunpack.c.l.b16 %v2623
      %v2668 = vunpack.c.h.b16 %v2623
      %v2669 = vunpack.c.l.b16 %v2624
      %v2670 = vunpack.c.l.b16 %v2625
      %v2671 = vunpack.c.h.b16 %v2625
      %v2672 = vunpack.c.l.b16 %v2626
      %v2673 = vunpack.c.l.b16 %v2627
      %v2674 = vunpack.c.h.b16 %v2627
      %v2675 = vunpack.c.l.b16 %v2628
      %v2676 = vunpack.c.l.b16 %v2629
      %v2677 = vunpack.c.h.b16 %v2629
      %v2678 = vunpack.c.l.b16 %v2630
      %v2679 = vunpack.c.l.b16 %v2631
      %v2680 = vunpack.c.h.b16 %v2631
      %v2681 = vunpack.c.l.b16 %v2632
      %v2682 = vunpack.c.l.b16 %v2633
      %v2683 = vunpack.c.h.b16 %v2633
      %v2684 = vunpack.c.l.b16 %v2634
      %v2685 = vpack.c.b16 %v2655, %v2655
      %v2686 = vpack.c.b16 %v2656, %v2656
      %v2687 = vpack.c.b16 %v2657, %v2657
      %v2688 = vpack.c.b16 %v2658, %v2658
      %v2689 = vpack.c.b16 %v2659, %v2659
      %v2690 = vpack.c.b16 %v2660, %v2660
      %v2691 = vpack.c.b16 %v2661, %v2661
      %v2692 = vpack.c.b16 %v2662, %v2662
      %v2693 = vpack.c.b16 %v2663, %v2663
      %v2694 = vpack.c.b16 %v2664, %v2664
      %v2695 = vpack.c.b16 %v2665, %v2665
      %v2696 = vpack.c.b16 %v2666, %v2666
      %v2697 = vpack.c.b16 %v2667, %v2667
      %v2698 = vpack.c.b16 %v2668, %v2668
      %v2699 = vpack.c.b16 %v2669, %v2669
      %v2700 = vpack.c.b16 %v2670, %v2670
      %v2701 = vpack.c.b16 %v2671, %v2671
      %v2702 = vpack.c.b16 %v2672, %v2672
      %v2703 = vpack.c.b16 %v2673, %v2673
      %v2704 = vpack.c.b16 %v2674, %v2674
      %v2705 = vpack.c.b16 %v2675, %v2675
      %v2706 = vpack.c.b16 %v2676, %v2676
      %v2707 = vpack.c.b16 %v2677, %v2677
      %v2708 = vpack.c.b16 %v2678, %v2678
      %v2709 = vpack.c.b16 %v2679, %v2679
      %v2710 = vpack.c.b16 %v2680, %v2680
      %v2711 = vpack.c.b16 %v2681, %v2681
      %v2712 = vpack.c.b16 %v2682, %v2682
      %v2713 = vpack.c.b16 %v2683, %v2683
      %v2714 = vpack.c.b16 %v2684, %v2684
      %2745 = vst [vmem:[#allocation2] sm:$0xf] %v2685
      %2746 = vst [vmem:[#allocation2 + $0x4] sm:$0xf] %v2686
      %2747 = vst [vmem:[#allocation2 + $0x8] sm:$0x1] %v2687
      %2748 = vst [vmem:[#allocation2 + $0xc] sm:$0xf] %v2688
      %2749 = vst [vmem:[#allocation2 + $0x10] sm:$0xf] %v2689
      %2750 = vst [vmem:[#allocation2 + $0x14] sm:$0x1] %v2690
      %2751 = vst [vmem:[#allocation2 + $0x18] sm:$0xf] %v2691
      %2752 = vst [vmem:[#allocation2 + $0x1c] sm:$0xf] %v2692
      %2753 = vst [vmem:[#allocation2 + $0x20] sm:$0x1] %v2693
      %2754 = vst [vmem:[#allocation2 + $0x24] sm:$0xf] %v2694
      %2755 = vst [vmem:[#allocation2 + $0x28] sm:$0xf] %v2695
      %2756 = vst [vmem:[#allocation2 + $0x2c] sm:$0x1] %v2696
      %2757 = vst [vmem:[#allocation2 + $0x30] sm:$0xf] %v2697
      %2758 = vst [vmem:[#allocation2 + $0x34] sm:$0xf] %v2698
      %2759 = vst [vmem:[#allocation2 + $0x38] sm:$0x1] %v2699
      %2760 = vst [vmem:[#allocation2 + $0x3c] sm:$0xf] %v2700
      %2761 = vst [vmem:[#allocation2 + $0x40] sm:$0xf] %v2701
      %2762 = vst [vmem:[#allocation2 + $0x44] sm:$0x1] %v2702
      %2763 = vst [vmem:[#allocation2 + $0x48] sm:$0xf] %v2703
      %2764 = vst [vmem:[#allocation2 + $0x4c] sm:$0xf] %v2704
      %2765 = vst [vmem:[#allocation2 + $0x50] sm:$0x1] %v2705
      %2766 = vst [vmem:[#allocation2 + $0x54] sm:$0xf] %v2706
      %2767 = vst [vmem:[#allocation2 + $0x58] sm:$0xf] %v2707
      %2768 = vst [vmem:[#allocation2 + $0x5c] sm:$0x1] %v2708
      %2769 = vst [vmem:[#allocation2 + $0x60] sm:$0xf] %v2709
      %2770 = vst [vmem:[#allocation2 + $0x64] sm:$0xf] %v2710
      %2771 = vst [vmem:[#allocation2 + $0x68] sm:$0x1] %v2711
      %2772 = vst [vmem:[#allocation2 + $0x6c] sm:$0xf] %v2712
      %2773 = vst [vmem:[#allocation2 + $0x70] sm:$0xf] %v2713
      %2774 = vst [vmem:[#allocation2 + $0x74] sm:$0x1] %v2714
      %v2775 = vld [vmem:[#allocation2] sm:$0xf]
      %v2776 = vld [vmem:[#allocation2 + $0x4] sm:$0xf]
      %v2777 = vld [vmem:[#allocation2 + $0xc] sm:$0xf]
      %v2778 = vld [vmem:[#allocation2 + $0x10] sm:$0xf]
      %v2779 = vld [vmem:[#allocation2 + $0x18] sm:$0xf]
      %v2780 = vld [vmem:[#allocation2 + $0x1c] sm:$0xf]
      %v2781 = vld [vmem:[#allocation2 + $0x24] sm:$0xf]
      %v2782 = vld [vmem:[#allocation2 + $0x28] sm:$0xf]
      %v2783 = vld [vmem:[#allocation2 + $0x30] sm:$0xf]
      %v2784 = vld [vmem:[#allocation2 + $0x34] sm:$0xf]
      %v2785 = vld [vmem:[#allocation2 + $0x3c] sm:$0xf]
      %v2786 = vld [vmem:[#allocation2 + $0x40] sm:$0xf]
      %v2787 = vld [vmem:[#allocation2 + $0x48] sm:$0xf]
      %v2788 = vld [vmem:[#allocation2 + $0x4c] sm:$0xf]
      %v2789 = vld [vmem:[#allocation2 + $0x54] sm:$0xf]
      %v2790 = vld [vmem:[#allocation2 + $0x58] sm:$0xf]
      %v2791 = vld [vmem:[%s5] sm:$0xf]
      %v2792 = vld [vmem:[%s5 + $0x4] sm:$0xf]
      %v2793 = vld [vmem:[%s5 + $0x8] sm:$0xf]
      %v2794 = vld [vmem:[%s5 + $0xc] sm:$0xf]
      %v2795 = vld [vmem:[%s5 + $0x10] sm:$0xf]
      %v2796 = vld [vmem:[%s5 + $0x14] sm:$0xf]
      %v2797 = vld [vmem:[%s5 + $0x18] sm:$0xf]
      %v2798 = vld [vmem:[%s5 + $0x1c] sm:$0xf]
      %v2799 = vld [vmem:[%s5 + $0x20] sm:$0xf]
      %v2800 = vld [vmem:[%s5 + $0x24] sm:$0xf]
      %v2801 = vld [vmem:[%s5 + $0x28] sm:$0xf]
      %v2802 = vld [vmem:[%s5 + $0x2c] sm:$0xf]
      %v2803 = vld [vmem:[%s5 + $0x30] sm:$0xf]
      %v2804 = vld [vmem:[%s5 + $0x34] sm:$0xf]
      %v2805 = vld [vmem:[%s5 + $0x38] sm:$0xf]
      %v2806 = vld [vmem:[%s5 + $0x3c] sm:$0xf]
      %v2807 = vld [vmem:[#allocation2 + $0x8] sm:$0x1]
      %v2808 = vld [vmem:[#allocation2 + $0x14] sm:$0x1]
      %v2809 = vld [vmem:[#allocation2 + $0x20] sm:$0x1]
      %v2810 = vld [vmem:[#allocation2 + $0x2c] sm:$0x1]
      %v2811 = vld [vmem:[#allocation2 + $0x38] sm:$0x1]
      %v2812 = vld [vmem:[#allocation2 + $0x44] sm:$0x1]
      %v2813 = vld [vmem:[#allocation2 + $0x50] sm:$0x1]
      %v2814 = vld [vmem:[#allocation2 + $0x5c] sm:$0x1]
      %vm2815 = vsmask.f32 3328
      %vm2816 = vsmask.f32 7440
      %vm2817 = vmor %vm2815, %vm2816
      %v2819 = vshrl.u32 %v2775, 16
      %v2821 = vrot.slane %v2819, 4
      %v2822 = vshll.u32 %v2775, 16
      %v2824 = vrot.slane %v2822, 5
      %v2825 = vor.u32 %v2821, %v2824
      %v2826 = vrot.slane %v2825, 4
      %v2828 = vshll.u32 %v2776, 16
      %v2830 = vrot.slane %v2828, 5
      %v2831 = vsel %vm2817, %v2826, %v2830
      %v2832 = vshrl.u32 %v2776, 16
      %v2834 = vrot.slane %v2832, 4
      %v2835 = vor.u32 %v2834, %v2830
      %v2836 = vrot.slane %v2835, 4
      %v2838 = vshll.u32 %v2807, 16
      %v2840 = vrot.slane %v2838, 5
      %v2841 = vsel %vm2817, %v2836, %v2840
      %v2843 = vshrl.u32 %v2777, 16
      %v2845 = vrot.slane %v2843, 4
      %v2846 = vshll.u32 %v2777, 16
      %v2848 = vrot.slane %v2846, 5
      %v2849 = vor.u32 %v2845, %v2848
      %v2850 = vrot.slane %v2849, 4
      %v2852 = vshll.u32 %v2778, 16
      %v2854 = vrot.slane %v2852, 5
      %v2855 = vsel %vm2817, %v2850, %v2854
      %v2856 = vshrl.u32 %v2778, 16
      %v2858 = vrot.slane %v2856, 4
      %v2859 = vor.u32 %v2858, %v2854
      %v2860 = vrot.slane %v2859, 4
      %v2862 = vshll.u32 %v2808, 16
      %v2864 = vrot.slane %v2862, 5
      %v2865 = vsel %vm2817, %v2860, %v2864
      %v2867 = vshrl.u32 %v2779, 16
      %v2869 = vrot.slane %v2867, 4
      %v2870 = vshll.u32 %v2779, 16
      %v2872 = vrot.slane %v2870, 5
      %v2873 = vor.u32 %v2869, %v2872
      %v2874 = vrot.slane %v2873, 4
      %v2876 = vshll.u32 %v2780, 16
      %v2878 = vrot.slane %v2876, 5
      %v2879 = vsel %vm2817, %v2874, %v2878
      %v2880 = vshrl.u32 %v2780, 16
      %v2882 = vrot.slane %v2880, 4
      %v2883 = vor.u32 %v2882, %v2878
      %v2884 = vrot.slane %v2883, 4
      %v2886 = vshll.u32 %v2809, 16
      %v2888 = vrot.slane %v2886, 5
      %v2889 = vsel %vm2817, %v2884, %v2888
      %v2891 = vshrl.u32 %v2781, 16
      %v2893 = vrot.slane %v2891, 4
      %v2894 = vshll.u32 %v2781, 16
      %v2896 = vrot.slane %v2894, 5
      %v2897 = vor.u32 %v2893, %v2896
      %v2898 = vrot.slane %v2897, 4
      %v2900 = vshll.u32 %v2782, 16
      %v2902 = vrot.slane %v2900, 5
      %v2903 = vsel %vm2817, %v2898, %v2902
      %v2904 = vshrl.u32 %v2782, 16
      %v2906 = vrot.slane %v2904, 4
      %v2907 = vor.u32 %v2906, %v2902
      %v2908 = vrot.slane %v2907, 4
      %v2910 = vshll.u32 %v2810, 16
      %v2912 = vrot.slane %v2910, 5
      %v2913 = vsel %vm2817, %v2908, %v2912
      %v2915 = vshrl.u32 %v2783, 16
      %v2917 = vrot.slane %v2915, 4
      %v2918 = vshll.u32 %v2783, 16
      %v2920 = vrot.slane %v2918, 5
      %v2921 = vor.u32 %v2917, %v2920
      %v2922 = vrot.slane %v2921, 4
      %v2924 = vshll.u32 %v2784, 16
      %v2926 = vrot.slane %v2924, 5
      %v2927 = vsel %vm2817, %v2922, %v2926
      %v2928 = vshrl.u32 %v2784, 16
      %v2930 = vrot.slane %v2928, 4
      %v2931 = vor.u32 %v2930, %v2926
      %v2932 = vrot.slane %v2931, 4
      %v2934 = vshll.u32 %v2811, 16
      %v2936 = vrot.slane %v2934, 5
      %v2937 = vsel %vm2817, %v2932, %v2936
      %v2939 = vshrl.u32 %v2785, 16
      %v2941 = vrot.slane %v2939, 4
      %v2942 = vshll.u32 %v2785, 16
      %v2944 = vrot.slane %v2942, 5
      %v2945 = vor.u32 %v2941, %v2944
      %v2946 = vrot.slane %v2945, 4
      %v2948 = vshll.u32 %v2786, 16
      %v2950 = vrot.slane %v2948, 5
      %v2951 = vsel %vm2817, %v2946, %v2950
      %v2952 = vshrl.u32 %v2786, 16
      %v2954 = vrot.slane %v2952, 4
      %v2955 = vor.u32 %v2954, %v2950
      %v2956 = vrot.slane %v2955, 4
      %v2958 = vshll.u32 %v2812, 16
      %v2960 = vrot.slane %v2958, 5
      %v2961 = vsel %vm2817, %v2956, %v2960
      %v2963 = vshrl.u32 %v2787, 16
      %v2965 = vrot.slane %v2963, 4
      %v2966 = vshll.u32 %v2787, 16
      %v2968 = vrot.slane %v2966, 5
      %v2969 = vor.u32 %v2965, %v2968
      %v2970 = vrot.slane %v2969, 4
      %v2972 = vshll.u32 %v2788, 16
      %v2974 = vrot.slane %v2972, 5
      %v2975 = vsel %vm2817, %v2970, %v2974
      %v2976 = vshrl.u32 %v2788, 16
      %v2978 = vrot.slane %v2976, 4
      %v2979 = vor.u32 %v2978, %v2974
      %v2980 = vrot.slane %v2979, 4
      %v2982 = vshll.u32 %v2813, 16
      %v2984 = vrot.slane %v2982, 5
      %v2985 = vsel %vm2817, %v2980, %v2984
      %v2987 = vshrl.u32 %v2789, 16
      %v2989 = vrot.slane %v2987, 4
      %v2990 = vshll.u32 %v2789, 16
      %v2992 = vrot.slane %v2990, 5
      %v2993 = vor.u32 %v2989, %v2992
      %v2994 = vrot.slane %v2993, 4
      %v2996 = vshll.u32 %v2790, 16
      %v2998 = vrot.slane %v2996, 5
      %v2999 = vsel %vm2817, %v2994, %v2998
      %v3000 = vshrl.u32 %v2790, 16
      %v3002 = vrot.slane %v3000, 4
      %v3003 = vor.u32 %v3002, %v2998
      %v3004 = vrot.slane %v3003, 4
      %v3006 = vshll.u32 %v2814, 16
      %v3008 = vrot.slane %v3006, 5
      %v3009 = vsel %vm2817, %v3004, %v3008
      %s3010 = scalar_lea.vmem %s5, 64
      %v3011 = vld [vmem:[%s3010] sm:$0xf]
      %v3012 = vld [vmem:[%s3010 + $0x4] sm:$0xf]
      %v3013 = vld [vmem:[%s3010 + $0x8] sm:$0xf]
      %v3014 = vld [vmem:[%s3010 + $0xc] sm:$0xf]
      %v3015 = vld [vmem:[%s3010 + $0x10] sm:$0xf]
      %v3016 = vld [vmem:[%s3010 + $0x14] sm:$0xf]
      %v3017 = vld [vmem:[%s3010 + $0x18] sm:$0xf]
      %v3018 = vld [vmem:[%s3010 + $0x1c] sm:$0xf]
      %v3019 = vld [vmem:[%s3010 + $0x20] sm:$0xf]
      %v3020 = vld [vmem:[%s3010 + $0x24] sm:$0xf]
      %v3021 = vld [vmem:[%s3010 + $0x28] sm:$0xf]
      %v3022 = vld [vmem:[%s3010 + $0x2c] sm:$0xf]
      %v3023 = vld [vmem:[%s3010 + $0x30] sm:$0xf]
      %v3024 = vld [vmem:[%s3010 + $0x34] sm:$0xf]
      %v3025 = vld [vmem:[%s3010 + $0x38] sm:$0xf]
      %v3026 = vld [vmem:[%s3010 + $0x3c] sm:$0xf]
      %v3027 = vunpack.c.l.b16 %v2831
      %v3028 = vunpack.c.l.b16 %v2841
      %v3029 = vunpack.c.l.b16 %v2855
      %v3030 = vunpack.c.l.b16 %v2865
      %v3031 = vunpack.c.l.b16 %v2879
      %v3032 = vunpack.c.l.b16 %v2889
      %v3033 = vunpack.c.l.b16 %v2903
      %v3034 = vunpack.c.l.b16 %v2913
      %v3035 = vunpack.c.l.b16 %v2927
      %v3036 = vunpack.c.l.b16 %v2937
      %v3037 = vunpack.c.l.b16 %v2951
      %v3038 = vunpack.c.l.b16 %v2961
      %v3039 = vunpack.c.l.b16 %v2975
      %v3040 = vunpack.c.l.b16 %v2985
      %v3041 = vunpack.c.l.b16 %v2999
      %v3042 = vunpack.c.l.b16 %v3009
      %v3043 = vpack.c.b16 %v3028, %v3027
      %v3044 = vpack.c.b16 %v3030, %v3029
      %v3045 = vpack.c.b16 %v3032, %v3031
      %v3046 = vpack.c.b16 %v3034, %v3033
      %v3047 = vpack.c.b16 %v3036, %v3035
      %v3048 = vpack.c.b16 %v3038, %v3037
      %v3049 = vpack.c.b16 %v3040, %v3039
      %v3050 = vpack.c.b16 %v3042, %v3041
      %v3075 = vunpack.c.l.b16 %v3011
      %v3076 = vunpack.c.l.b16 %v3012
      %v3077 = vunpack.c.l.b16 %v3013
      %v3078 = vunpack.c.l.b16 %v3014
      %v3079 = vunpack.c.l.b16 %v3015
      %v3080 = vunpack.c.l.b16 %v3016
      %v3081 = vunpack.c.l.b16 %v3017
      %v3082 = vunpack.c.l.b16 %v3018
      %v3083 = vunpack.c.l.b16 %v3019
      %v3084 = vunpack.c.l.b16 %v3020
      %v3085 = vunpack.c.l.b16 %v3021
      %v3086 = vunpack.c.l.b16 %v3022
      %v3087 = vunpack.c.l.b16 %v3023
      %v3088 = vunpack.c.l.b16 %v3024
      %v3089 = vunpack.c.l.b16 %v3025
      %v3090 = vunpack.c.l.b16 %v3026
      %v3091 = vpack.c.b16 %v3076, %v3075
      %v3092 = vpack.c.b16 %v3078, %v3077
      %v3093 = vpack.c.b16 %v3080, %v3079
      %v3094 = vpack.c.b16 %v3082, %v3081
      %v3095 = vpack.c.b16 %v3084, %v3083
      %v3096 = vpack.c.b16 %v3086, %v3085
      %v3097 = vpack.c.b16 %v3088, %v3087
      %v3098 = vpack.c.b16 %v3090, %v3089
      %3107 = vmatprep.subr.bf16.mxu0 0
      %3108 = vmatpush1.bf16.msra.mxu0 %v3098
      %3109 = vmatprep.subr.bf16.mxu0 0
      %3110 = vmatpush1.bf16.msra.mxu0 %v3097
      %3111 = vmatprep.subr.bf16.mxu0 0
      %3112 = vmatpush1.bf16.msra.mxu0 %v3096
      %3113 = vmatprep.subr.bf16.mxu0 0
      %3114 = vmatpush1.bf16.msra.mxu0 %v3095
      %3115 = vmatprep.subr.bf16.mxu0 0
      %3116 = vmatpush1.bf16.msra.mxu0 %v3094
      %3117 = vmatprep.subr.bf16.mxu0 0
      %3118 = vmatpush1.bf16.msra.mxu0 %v3093
      %3119 = vmatprep.subr.bf16.mxu0 0
      %3120 = vmatpush1.bf16.msra.mxu0 %v3092
      %3121 = vmatprep.subr.bf16.mxu0 0
      %3122 = vmatpush1.bf16.msra.mxu0 %v3091
      %3123 = vmatprep.subr.bf16.mxu0 0
      %3124 = vmatpush2.bf16.msra.mxu0 0
      %3125 = vmatprep.subr.bf16.mxu0 0
      %3126 = vmatpush2.bf16.msra.mxu0 0
      %3127 = vmatprep.subr.bf16.mxu0 0
      %3128 = vmatpush2.bf16.msra.mxu0 0
      %3129 = vmatprep.subr.bf16.mxu0 0
      %3130 = vmatpush2.bf16.msra.mxu0 0
      %3131 = vmatprep.subr.bf16.mxu0 0
      %3132 = vmatpush2.bf16.msra.mxu0 0
      %3133 = vmatprep.subr.bf16.mxu0 0
      %3134 = vmatpush2.bf16.msra.mxu0 0
      %3135 = vmatprep.subr.bf16.mxu0 0
      %3136 = vmatpush2.bf16.msra.mxu0 0
      %3137 = vmatprep.subr.bf16.mxu0 0
      %3138 = vmatpush2.bf16.msra.mxu0 0
      %3139 = vmatprep.mubr.bf16.mxu0 0
      %3140 = vmatmul.mubr.bf16.gmra.mxu0 %v3043
      %v3141 = vpop.f32.mrf.mxu0
      %v3142 = vadd.f32 0.0, %v3141
      %v3143 = vpop.f32.mrf.mxu0
      %v3144 = vpop.f32.mrf.mxu0
      %v3145 = vadd.f32 0.0, %v3144
      %v3146 = vpop.f32.mrf.mxu0
      %3147 = vmatprep.mubr.bf16.mxu0 0
      %3148 = vmatmul.mubr.bf16.gmra.mxu0 %v3044
      %v3149 = vpop.f32.mrf.mxu0
      %v3150 = vadd.f32 0.0, %v3149
      %v3151 = vpop.f32.mrf.mxu0
      %v3152 = vpop.f32.mrf.mxu0
      %v3153 = vadd.f32 0.0, %v3152
      %v3154 = vpop.f32.mrf.mxu0
      %3155 = vmatprep.mubr.bf16.mxu0 0
      %3156 = vmatmul.mubr.bf16.gmra.mxu0 %v3045
      %v3157 = vpop.f32.mrf.mxu0
      %v3158 = vadd.f32 0.0, %v3157
      %v3159 = vpop.f32.mrf.mxu0
      %v3160 = vpop.f32.mrf.mxu0
      %v3161 = vadd.f32 0.0, %v3160
      %v3162 = vpop.f32.mrf.mxu0
      %3163 = vmatprep.mubr.bf16.mxu0 0
      %3164 = vmatmul.mubr.bf16.gmra.mxu0 %v3046
      %v3165 = vpop.f32.mrf.mxu0
      %v3166 = vadd.f32 0.0, %v3165
      %v3167 = vpop.f32.mrf.mxu0
      %v3168 = vpop.f32.mrf.mxu0
      %v3169 = vadd.f32 0.0, %v3168
      %v3170 = vpop.f32.mrf.mxu0
      %3171 = vmatprep.mubr.bf16.mxu0 0
      %3172 = vmatmul.mubr.bf16.gmra.mxu0 %v3047
      %v3173 = vpop.f32.mrf.mxu0
      %v3174 = vadd.f32 0.0, %v3173
      %v3175 = vpop.f32.mrf.mxu0
      %v3176 = vpop.f32.mrf.mxu0
      %v3177 = vadd.f32 0.0, %v3176
      %v3178 = vpop.f32.mrf.mxu0
      %3179 = vmatprep.mubr.bf16.mxu0 0
      %3180 = vmatmul.mubr.bf16.gmra.mxu0 %v3048
      %v3181 = vpop.f32.mrf.mxu0
      %v3182 = vadd.f32 0.0, %v3181
      %v3183 = vpop.f32.mrf.mxu0
      %v3184 = vpop.f32.mrf.mxu0
      %v3185 = vadd.f32 0.0, %v3184
      %v3186 = vpop.f32.mrf.mxu0
      %3187 = vmatprep.mubr.bf16.mxu0 0
      %3188 = vmatmul.mubr.bf16.gmra.mxu0 %v3049
      %v3189 = vpop.f32.mrf.mxu0
      %v3190 = vadd.f32 0.0, %v3189
      %v3191 = vpop.f32.mrf.mxu0
      %v3192 = vpop.f32.mrf.mxu0
      %v3193 = vadd.f32 0.0, %v3192
      %v3194 = vpop.f32.mrf.mxu0
      %3195 = vmatprep.mubr.bf16.mxu0 0
      %3196 = vmatmul.mubr.bf16.gmra.mxu0 %v3050
      %v3197 = vpop.f32.mrf.mxu0
      %v3198 = vadd.f32 0.0, %v3197
      %v3199 = vpop.f32.mrf.mxu0
      %v3200 = vpop.f32.mrf.mxu0
      %v3201 = vadd.f32 0.0, %v3200
      %v3202 = vpop.f32.mrf.mxu0
      %3203 = vdwg.mxu0
      %v3220 = vunpack.c.l.b16 %v2775
      %v3221 = vunpack.c.l.b16 %v2776
      %v3222 = vunpack.c.l.b16 %v2777
      %v3223 = vunpack.c.l.b16 %v2778
      %v3224 = vunpack.c.l.b16 %v2779
      %v3225 = vunpack.c.l.b16 %v2780
      %v3226 = vunpack.c.l.b16 %v2781
      %v3227 = vunpack.c.l.b16 %v2782
      %v3228 = vunpack.c.l.b16 %v2783
      %v3229 = vunpack.c.l.b16 %v2784
      %v3230 = vunpack.c.l.b16 %v2785
      %v3231 = vunpack.c.l.b16 %v2786
      %v3232 = vunpack.c.l.b16 %v2787
      %v3233 = vunpack.c.l.b16 %v2788
      %v3234 = vunpack.c.l.b16 %v2789
      %v3235 = vunpack.c.l.b16 %v2790
      %v3236 = vpack.c.b16 %v3221, %v3220
      %v3237 = vpack.c.b16 %v3223, %v3222
      %v3238 = vpack.c.b16 %v3225, %v3224
      %v3239 = vpack.c.b16 %v3227, %v3226
      %v3240 = vpack.c.b16 %v3229, %v3228
      %v3241 = vpack.c.b16 %v3231, %v3230
      %v3242 = vpack.c.b16 %v3233, %v3232
      %v3243 = vpack.c.b16 %v3235, %v3234
      %v3268 = vunpack.c.l.b16 %v2791
      %v3269 = vunpack.c.l.b16 %v2792
      %v3270 = vunpack.c.l.b16 %v2793
      %v3271 = vunpack.c.l.b16 %v2794
      %v3272 = vunpack.c.l.b16 %v2795
      %v3273 = vunpack.c.l.b16 %v2796
      %v3274 = vunpack.c.l.b16 %v2797
      %v3275 = vunpack.c.l.b16 %v2798
      %v3276 = vunpack.c.l.b16 %v2799
      %v3277 = vunpack.c.l.b16 %v2800
      %v3278 = vunpack.c.l.b16 %v2801
      %v3279 = vunpack.c.l.b16 %v2802
      %v3280 = vunpack.c.l.b16 %v2803
      %v3281 = vunpack.c.l.b16 %v2804
      %v3282 = vunpack.c.l.b16 %v2805
      %v3283 = vunpack.c.l.b16 %v2806
      %v3284 = vpack.c.b16 %v3269, %v3268
      %v3285 = vpack.c.b16 %v3271, %v3270
      %v3286 = vpack.c.b16 %v3273, %v3272
      %v3287 = vpack.c.b16 %v3275, %v3274
      %v3288 = vpack.c.b16 %v3277, %v3276
      %v3289 = vpack.c.b16 %v3279, %v3278
      %v3290 = vpack.c.b16 %v3281, %v3280
      %v3291 = vpack.c.b16 %v3283, %v3282
      %3300 = vmatprep.subr.bf16.mxu0 0
      %3301 = vmatpush1.bf16.msra.mxu0 %v3291
      %3302 = vmatprep.subr.bf16.mxu0 0
      %3303 = vmatpush1.bf16.msra.mxu0 %v3290
      %3304 = vmatprep.subr.bf16.mxu0 0
      %3305 = vmatpush1.bf16.msra.mxu0 %v3289
      %3306 = vmatprep.subr.bf16.mxu0 0
      %3307 = vmatpush1.bf16.msra.mxu0 %v3288
      %3308 = vmatprep.subr.bf16.mxu0 0
      %3309 = vmatpush1.bf16.msra.mxu0 %v3287
      %3310 = vmatprep.subr.bf16.mxu0 0
      %3311 = vmatpush1.bf16.msra.mxu0 %v3286
      %3312 = vmatprep.subr.bf16.mxu0 0
      %3313 = vmatpush1.bf16.msra.mxu0 %v3285
      %3314 = vmatprep.subr.bf16.mxu0 0
      %3315 = vmatpush1.bf16.msra.mxu0 %v3284
      %3316 = vmatprep.subr.bf16.mxu0 0
      %3317 = vmatpush2.bf16.msra.mxu0 0
      %3318 = vmatprep.subr.bf16.mxu0 0
      %3319 = vmatpush2.bf16.msra.mxu0 0
      %3320 = vmatprep.subr.bf16.mxu0 0
      %3321 = vmatpush2.bf16.msra.mxu0 0
      %3322 = vmatprep.subr.bf16.mxu0 0
      %3323 = vmatpush2.bf16.msra.mxu0 0
      %3324 = vmatprep.subr.bf16.mxu0 0
      %3325 = vmatpush2.bf16.msra.mxu0 0
      %3326 = vmatprep.subr.bf16.mxu0 0
      %3327 = vmatpush2.bf16.msra.mxu0 0
      %3328 = vmatprep.subr.bf16.mxu0 0
      %3329 = vmatpush2.bf16.msra.mxu0 0
      %3330 = vmatprep.subr.bf16.mxu0 0
      %3331 = vmatpush2.bf16.msra.mxu0 0
      %3332 = vmatprep.mubr.bf16.mxu0 0
      %3333 = vmatmul.mubr.bf16.gmra.mxu0 %v3236
      %v3334 = vpop.f32.mrf.mxu0
      %v3335 = vadd.f32 %v3142, %v3334
      %v3336 = vpop.f32.mrf.mxu0
      %v3337 = vpop.f32.mrf.mxu0
      %v3338 = vadd.f32 %v3145, %v3337
      %v3339 = vpop.f32.mrf.mxu0
      %3340 = vmatprep.mubr.bf16.mxu0 0
      %3341 = vmatmul.mubr.bf16.gmra.mxu0 %v3237
      %v3342 = vpop.f32.mrf.mxu0
      %v3343 = vadd.f32 %v3150, %v3342
      %v3344 = vpop.f32.mrf.mxu0
      %v3345 = vpop.f32.mrf.mxu0
      %v3346 = vadd.f32 %v3153, %v3345
      %v3347 = vpop.f32.mrf.mxu0
      %3348 = vmatprep.mubr.bf16.mxu0 0
      %3349 = vmatmul.mubr.bf16.gmra.mxu0 %v3238
      %v3350 = vpop.f32.mrf.mxu0
      %v3351 = vadd.f32 %v3158, %v3350
      %v3352 = vpop.f32.mrf.mxu0
      %v3353 = vpop.f32.mrf.mxu0
      %v3354 = vadd.f32 %v3161, %v3353
      %v3355 = vpop.f32.mrf.mxu0
      %3356 = vmatprep.mubr.bf16.mxu0 0
      %3357 = vmatmul.mubr.bf16.gmra.mxu0 %v3239
      %v3358 = vpop.f32.mrf.mxu0
      %v3359 = vadd.f32 %v3166, %v3358
      %v3360 = vpop.f32.mrf.mxu0
      %v3361 = vpop.f32.mrf.mxu0
      %v3362 = vadd.f32 %v3169, %v3361
      %v3363 = vpop.f32.mrf.mxu0
      %3364 = vmatprep.mubr.bf16.mxu0 0
      %3365 = vmatmul.mubr.bf16.gmra.mxu0 %v3240
      %v3366 = vpop.f32.mrf.mxu0
      %v3367 = vadd.f32 %v3174, %v3366
      %v3368 = vpop.f32.mrf.mxu0
      %v3369 = vpop.f32.mrf.mxu0
      %v3370 = vadd.f32 %v3177, %v3369
      %v3371 = vpop.f32.mrf.mxu0
      %3372 = vmatprep.mubr.bf16.mxu0 0
      %3373 = vmatmul.mubr.bf16.gmra.mxu0 %v3241
      %v3374 = vpop.f32.mrf.mxu0
      %v3375 = vadd.f32 %v3182, %v3374
      %v3376 = vpop.f32.mrf.mxu0
      %v3377 = vpop.f32.mrf.mxu0
      %v3378 = vadd.f32 %v3185, %v3377
      %v3379 = vpop.f32.mrf.mxu0
      %3380 = vmatprep.mubr.bf16.mxu0 0
      %3381 = vmatmul.mubr.bf16.gmra.mxu0 %v3242
      %v3382 = vpop.f32.mrf.mxu0
      %v3383 = vadd.f32 %v3190, %v3382
      %v3384 = vpop.f32.mrf.mxu0
      %v3385 = vpop.f32.mrf.mxu0
      %v3386 = vadd.f32 %v3193, %v3385
      %v3387 = vpop.f32.mrf.mxu0
      %3388 = vmatprep.mubr.bf16.mxu0 0
      %3389 = vmatmul.mubr.bf16.gmra.mxu0 %v3243
      %v3390 = vpop.f32.mrf.mxu0
      %v3391 = vadd.f32 %v3198, %v3390
      %v3392 = vpop.f32.mrf.mxu0
      %v3393 = vpop.f32.mrf.mxu0
      %v3394 = vadd.f32 %v3201, %v3393
      %v3395 = vpop.f32.mrf.mxu0
      %3396 = vdwg.mxu0
      %v3397 = vld [vmem:[#allocation2] sm:$0xe]
      %v3398 = vld [vmem:[#allocation2 + $0xc] sm:$0xe]
      %v3399 = vld [vmem:[#allocation2 + $0x18] sm:$0xe]
      %v3400 = vld [vmem:[#allocation2 + $0x24] sm:$0xe]
      %v3401 = vld [vmem:[#allocation2 + $0x30] sm:$0xe]
      %v3402 = vld [vmem:[#allocation2 + $0x3c] sm:$0xe]
      %v3403 = vld [vmem:[#allocation2 + $0x48] sm:$0xe]
      %v3404 = vld [vmem:[#allocation2 + $0x54] sm:$0xe]
      %vm3421 = vcmask 1042432
      %vm3422 = vcmask 1046532
      %vm3423 = vmor %vm3421, %vm3422
      %v3424 = vrot.slane %v3397, 5
      %v3425 = vrot.slane %v3424, 4
      %v3426 = vrot.slane %v2776, 5
      %v3427 = vsel %vm3423, %v3425, %v3426
      %v3428 = vrot.slane %v3426, 4
      %v3429 = vrot.slane %v2807, 5
      %v3430 = vsel %vm3423, %v3428, %v3429
      %v3431 = vrot.slane %v3398, 5
      %v3432 = vrot.slane %v3431, 4
      %v3433 = vrot.slane %v2778, 5
      %v3434 = vsel %vm3423, %v3432, %v3433
      %v3435 = vrot.slane %v3433, 4
      %v3436 = vrot.slane %v2808, 5
      %v3437 = vsel %vm3423, %v3435, %v3436
      %v3438 = vrot.slane %v3399, 5
      %v3439 = vrot.slane %v3438, 4
      %v3440 = vrot.slane %v2780, 5
      %v3441 = vsel %vm3423, %v3439, %v3440
      %v3442 = vrot.slane %v3440, 4
      %v3443 = vrot.slane %v2809, 5
      %v3444 = vsel %vm3423, %v3442, %v3443
      %v3445 = vrot.slane %v3400, 5
      %v3446 = vrot.slane %v3445, 4
      %v3447 = vrot.slane %v2782, 5
      %v3448 = vsel %vm3423, %v3446, %v3447
      %v3449 = vrot.slane %v3447, 4
      %v3450 = vrot.slane %v2810, 5
      %v3451 = vsel %vm3423, %v3449, %v3450
      %v3452 = vrot.slane %v3401, 5
      %v3453 = vrot.slane %v3452, 4
      %v3454 = vrot.slane %v2784, 5
      %v3455 = vsel %vm3423, %v3453, %v3454
      %v3456 = vrot.slane %v3454, 4
      %v3457 = vrot.slane %v2811, 5
      %v3458 = vsel %vm3423, %v3456, %v3457
      %v3459 = vrot.slane %v3402, 5
      %v3460 = vrot.slane %v3459, 4
      %v3461 = vrot.slane %v2786, 5
      %v3462 = vsel %vm3423, %v3460, %v3461
      %v3463 = vrot.slane %v3461, 4
      %v3464 = vrot.slane %v2812, 5
      %v3465 = vsel %vm3423, %v3463, %v3464
      %v3466 = vrot.slane %v3403, 5
      %v3467 = vrot.slane %v3466, 4
      %v3468 = vrot.slane %v2788, 5
      %v3469 = vsel %vm3423, %v3467, %v3468
      %v3470 = vrot.slane %v3468, 4
      %v3471 = vrot.slane %v2813, 5
      %v3472 = vsel %vm3423, %v3470, %v3471
      %v3473 = vrot.slane %v3404, 5
      %v3474 = vrot.slane %v3473, 4
      %v3475 = vrot.slane %v2790, 5
      %v3476 = vsel %vm3423, %v3474, %v3475
      %v3477 = vrot.slane %v3475, 4
      %v3478 = vrot.slane %v2814, 5
      %v3479 = vsel %vm3423, %v3477, %v3478
      %s3480 = scalar_lea.vmem %s5, 128
      %v3481 = vld [vmem:[%s3480] sm:$0xf]
      %v3482 = vld [vmem:[%s3480 + $0x4] sm:$0xf]
      %v3483 = vld [vmem:[%s3480 + $0x8] sm:$0xf]
      %v3484 = vld [vmem:[%s3480 + $0xc] sm:$0xf]
      %v3485 = vld [vmem:[%s3480 + $0x10] sm:$0xf]
      %v3486 = vld [vmem:[%s3480 + $0x14] sm:$0xf]
      %v3487 = vld [vmem:[%s3480 + $0x18] sm:$0xf]
      %v3488 = vld [vmem:[%s3480 + $0x1c] sm:$0xf]
      %v3489 = vld [vmem:[%s3480 + $0x20] sm:$0xf]
      %v3490 = vld [vmem:[%s3480 + $0x24] sm:$0xf]
      %v3491 = vld [vmem:[%s3480 + $0x28] sm:$0xf]
      %v3492 = vld [vmem:[%s3480 + $0x2c] sm:$0xf]
      %v3493 = vld [vmem:[%s3480 + $0x30] sm:$0xf]
      %v3494 = vld [vmem:[%s3480 + $0x34] sm:$0xf]
      %v3495 = vld [vmem:[%s3480 + $0x38] sm:$0xf]
      %v3496 = vld [vmem:[%s3480 + $0x3c] sm:$0xf]
      %v3497 = vunpack.c.l.b16 %v3427
      %v3498 = vunpack.c.l.b16 %v3430
      %v3499 = vunpack.c.l.b16 %v3434
      %v3500 = vunpack.c.l.b16 %v3437
      %v3501 = vunpack.c.l.b16 %v3441
      %v3502 = vunpack.c.l.b16 %v3444
      %v3503 = vunpack.c.l.b16 %v3448
      %v3504 = vunpack.c.l.b16 %v3451
      %v3505 = vunpack.c.l.b16 %v3455
      %v3506 = vunpack.c.l.b16 %v3458
      %v3507 = vunpack.c.l.b16 %v3462
      %v3508 = vunpack.c.l.b16 %v3465
      %v3509 = vunpack.c.l.b16 %v3469
      %v3510 = vunpack.c.l.b16 %v3472
      %v3511 = vunpack.c.l.b16 %v3476
      %v3512 = vunpack.c.l.b16 %v3479
      %v3513 = vpack.c.b16 %v3498, %v3497
      %v3514 = vpack.c.b16 %v3500, %v3499
      %v3515 = vpack.c.b16 %v3502, %v3501
      %v3516 = vpack.c.b16 %v3504, %v3503
      %v3517 = vpack.c.b16 %v3506, %v3505
      %v3518 = vpack.c.b16 %v3508, %v3507
      %v3519 = vpack.c.b16 %v3510, %v3509
      %v3520 = vpack.c.b16 %v3512, %v3511
      %v3545 = vunpack.c.l.b16 %v3481
      %v3546 = vunpack.c.l.b16 %v3482
      %v3547 = vunpack.c.l.b16 %v3483
      %v3548 = vunpack.c.l.b16 %v3484
      %v3549 = vunpack.c.l.b16 %v3485
      %v3550 = vunpack.c.l.b16 %v3486
      %v3551 = vunpack.c.l.b16 %v3487
      %v3552 = vunpack.c.l.b16 %v3488
      %v3553 = vunpack.c.l.b16 %v3489
      %v3554 = vunpack.c.l.b16 %v3490
      %v3555 = vunpack.c.l.b16 %v3491
      %v3556 = vunpack.c.l.b16 %v3492
      %v3557 = vunpack.c.l.b16 %v3493
      %v3558 = vunpack.c.l.b16 %v3494
      %v3559 = vunpack.c.l.b16 %v3495
      %v3560 = vunpack.c.l.b16 %v3496
      %v3561 = vpack.c.b16 %v3546, %v3545
      %v3562 = vpack.c.b16 %v3548, %v3547
      %v3563 = vpack.c.b16 %v3550, %v3549
      %v3564 = vpack.c.b16 %v3552, %v3551
      %v3565 = vpack.c.b16 %v3554, %v3553
      %v3566 = vpack.c.b16 %v3556, %v3555
      %v3567 = vpack.c.b16 %v3558, %v3557
      %v3568 = vpack.c.b16 %v3560, %v3559
      %3577 = vmatprep.subr.bf16.mxu0 0
      %3578 = vmatpush1.bf16.msra.mxu0 %v3568
      %3579 = vmatprep.subr.bf16.mxu0 0
      %3580 = vmatpush1.bf16.msra.mxu0 %v3567
      %3581 = vmatprep.subr.bf16.mxu0 0
      %3582 = vmatpush1.bf16.msra.mxu0 %v3566
      %3583 = vmatprep.subr.bf16.mxu0 0
      %3584 = vmatpush1.bf16.msra.mxu0 %v3565
      %3585 = vmatprep.subr.bf16.mxu0 0
      %3586 = vmatpush1.bf16.msra.mxu0 %v3564
      %3587 = vmatprep.subr.bf16.mxu0 0
      %3588 = vmatpush1.bf16.msra.mxu0 %v3563
      %3589 = vmatprep.subr.bf16.mxu0 0
      %3590 = vmatpush1.bf16.msra.mxu0 %v3562
      %3591 = vmatprep.subr.bf16.mxu0 0
      %3592 = vmatpush1.bf16.msra.mxu0 %v3561
      %3593 = vmatprep.subr.bf16.mxu0 0
      %3594 = vmatpush2.bf16.msra.mxu0 0
      %3595 = vmatprep.subr.bf16.mxu0 0
      %3596 = vmatpush2.bf16.msra.mxu0 0
      %3597 = vmatprep.subr.bf16.mxu0 0
      %3598 = vmatpush2.bf16.msra.mxu0 0
      %3599 = vmatprep.subr.bf16.mxu0 0
      %3600 = vmatpush2.bf16.msra.mxu0 0
      %3601 = vmatprep.subr.bf16.mxu0 0
      %3602 = vmatpush2.bf16.msra.mxu0 0
      %3603 = vmatprep.subr.bf16.mxu0 0
      %3604 = vmatpush2.bf16.msra.mxu0 0
      %3605 = vmatprep.subr.bf16.mxu0 0
      %3606 = vmatpush2.bf16.msra.mxu0 0
      %3607 = vmatprep.subr.bf16.mxu0 0
      %3608 = vmatpush2.bf16.msra.mxu0 0
      %3609 = vmatprep.mubr.bf16.mxu0 0
      %3610 = vmatmul.mubr.bf16.gmra.mxu0 %v3513
      %v3611 = vpop.f32.mrf.mxu0
      %v3612 = vadd.f32 0.0, %v3611
      %v3613 = vpop.f32.mrf.mxu0
      %v3614 = vpop.f32.mrf.mxu0
      %v3615 = vadd.f32 0.0, %v3614
      %v3616 = vpop.f32.mrf.mxu0
      %3617 = vmatprep.mubr.bf16.mxu0 0
      %3618 = vmatmul.mubr.bf16.gmra.mxu0 %v3514
      %v3619 = vpop.f32.mrf.mxu0
      %v3620 = vadd.f32 0.0, %v3619
      %v3621 = vpop.f32.mrf.mxu0
      %v3622 = vpop.f32.mrf.mxu0
      %v3623 = vadd.f32 0.0, %v3622
      %v3624 = vpop.f32.mrf.mxu0
      %3625 = vmatprep.mubr.bf16.mxu0 0
      %3626 = vmatmul.mubr.bf16.gmra.mxu0 %v3515
      %v3627 = vpop.f32.mrf.mxu0
      %v3628 = vadd.f32 0.0, %v3627
      %v3629 = vpop.f32.mrf.mxu0
      %v3630 = vpop.f32.mrf.mxu0
      %v3631 = vadd.f32 0.0, %v3630
      %v3632 = vpop.f32.mrf.mxu0
      %3633 = vmatprep.mubr.bf16.mxu0 0
      %3634 = vmatmul.mubr.bf16.gmra.mxu0 %v3516
      %v3635 = vpop.f32.mrf.mxu0
      %v3636 = vadd.f32 0.0, %v3635
      %v3637 = vpop.f32.mrf.mxu0
      %v3638 = vpop.f32.mrf.mxu0
      %v3639 = vadd.f32 0.0, %v3638
      %v3640 = vpop.f32.mrf.mxu0
      %3641 = vmatprep.mubr.bf16.mxu0 0
      %3642 = vmatmul.mubr.bf16.gmra.mxu0 %v3517
      %v3643 = vpop.f32.mrf.mxu0
      %v3644 = vadd.f32 0.0, %v3643
      %v3645 = vpop.f32.mrf.mxu0
      %v3646 = vpop.f32.mrf.mxu0
      %v3647 = vadd.f32 0.0, %v3646
      %v3648 = vpop.f32.mrf.mxu0
      %3649 = vmatprep.mubr.bf16.mxu0 0
      %3650 = vmatmul.mubr.bf16.gmra.mxu0 %v3518
      %v3651 = vpop.f32.mrf.mxu0
      %v3652 = vadd.f32 0.0, %v3651
      %v3653 = vpop.f32.mrf.mxu0
      %v3654 = vpop.f32.mrf.mxu0
      %v3655 = vadd.f32 0.0, %v3654
      %v3656 = vpop.f32.mrf.mxu0
      %3657 = vmatprep.mubr.bf16.mxu0 0
      %3658 = vmatmul.mubr.bf16.gmra.mxu0 %v3519
      %v3659 = vpop.f32.mrf.mxu0
      %v3660 = vadd.f32 0.0, %v3659
      %v3661 = vpop.f32.mrf.mxu0
      %v3662 = vpop.f32.mrf.mxu0
      %v3663 = vadd.f32 0.0, %v3662
      %v3664 = vpop.f32.mrf.mxu0
      %3665 = vmatprep.mubr.bf16.mxu0 0
      %3666 = vmatmul.mubr.bf16.gmra.mxu0 %v3520
      %v3667 = vpop.f32.mrf.mxu0
      %v3668 = vadd.f32 0.0, %v3667
      %v3669 = vpop.f32.mrf.mxu0
      %v3670 = vpop.f32.mrf.mxu0
      %v3671 = vadd.f32 0.0, %v3670
      %v3672 = vpop.f32.mrf.mxu0
      %3673 = vdwg.mxu0
      %v3674 = vadd.f32 %v3335, %v3612
      %v3675 = vadd.f32 %v3338, %v3615
      %v3676 = vadd.f32 %v3343, %v3620
      %v3677 = vadd.f32 %v3346, %v3623
      %v3678 = vadd.f32 %v3351, %v3628
      %v3679 = vadd.f32 %v3354, %v3631
      %v3680 = vadd.f32 %v3359, %v3636
      %v3681 = vadd.f32 %v3362, %v3639
      %v3682 = vadd.f32 %v3367, %v3644
      %v3683 = vadd.f32 %v3370, %v3647
      %v3684 = vadd.f32 %v3375, %v3652
      %v3685 = vadd.f32 %v3378, %v3655
      %v3686 = vadd.f32 %v3383, %v3660
      %v3687 = vadd.f32 %v3386, %v3663
      %v3688 = vadd.f32 %v3391, %v3668
      %v3689 = vadd.f32 %v3394, %v3671
      %s3690 = scalar_lea.vmem [#allocation2], 12
      %v3691 = vld [vmem:[%s3690] sm:$0xf]
      %v3692 = vld [vmem:[%s3690 + $0x4] sm:$0xf]
      %v3693 = vld [vmem:[%s3690 + $0xc] sm:$0xf]
      %v3694 = vld [vmem:[%s3690 + $0x10] sm:$0xf]
      %v3695 = vld [vmem:[%s3690 + $0x18] sm:$0xf]
      %v3696 = vld [vmem:[%s3690 + $0x1c] sm:$0xf]
      %v3697 = vld [vmem:[%s3690 + $0x24] sm:$0xf]
      %v3698 = vld [vmem:[%s3690 + $0x28] sm:$0xf]
      %v3699 = vld [vmem:[%s3690 + $0x30] sm:$0xf]
      %v3700 = vld [vmem:[%s3690 + $0x34] sm:$0xf]
      %v3701 = vld [vmem:[%s3690 + $0x3c] sm:$0xf]
      %v3702 = vld [vmem:[%s3690 + $0x40] sm:$0xf]
      %v3703 = vld [vmem:[%s3690 + $0x48] sm:$0xf]
      %v3704 = vld [vmem:[%s3690 + $0x4c] sm:$0xf]
      %v3705 = vld [vmem:[%s3690 + $0x54] sm:$0xf]
      %v3706 = vld [vmem:[%s3690 + $0x58] sm:$0xf]
      %s3707 = scalar_lea.vmem %s5, 192
      %v3708 = vld [vmem:[%s3707] sm:$0xf]
      %v3709 = vld [vmem:[%s3707 + $0x4] sm:$0xf]
      %v3710 = vld [vmem:[%s3707 + $0x8] sm:$0xf]
      %v3711 = vld [vmem:[%s3707 + $0xc] sm:$0xf]
      %v3712 = vld [vmem:[%s3707 + $0x10] sm:$0xf]
      %v3713 = vld [vmem:[%s3707 + $0x14] sm:$0xf]
      %v3714 = vld [vmem:[%s3707 + $0x18] sm:$0xf]
      %v3715 = vld [vmem:[%s3707 + $0x1c] sm:$0xf]
      %v3716 = vld [vmem:[%s3707 + $0x20] sm:$0xf]
      %v3717 = vld [vmem:[%s3707 + $0x24] sm:$0xf]
      %v3718 = vld [vmem:[%s3707 + $0x28] sm:$0xf]
      %v3719 = vld [vmem:[%s3707 + $0x2c] sm:$0xf]
      %v3720 = vld [vmem:[%s3707 + $0x30] sm:$0xf]
      %v3721 = vld [vmem:[%s3707 + $0x34] sm:$0xf]
      %v3722 = vld [vmem:[%s3707 + $0x38] sm:$0xf]
      %v3723 = vld [vmem:[%s3707 + $0x3c] sm:$0xf]
      %v3740 = vunpack.c.l.b16 %v3691
      %v3741 = vunpack.c.l.b16 %v3692
      %v3742 = vunpack.c.l.b16 %v3693
      %v3743 = vunpack.c.l.b16 %v3694
      %v3744 = vunpack.c.l.b16 %v3695
      %v3745 = vunpack.c.l.b16 %v3696
      %v3746 = vunpack.c.l.b16 %v3697
      %v3747 = vunpack.c.l.b16 %v3698
      %v3748 = vunpack.c.l.b16 %v3699
      %v3749 = vunpack.c.l.b16 %v3700
      %v3750 = vunpack.c.l.b16 %v3701
      %v3751 = vunpack.c.l.b16 %v3702
      %v3752 = vunpack.c.l.b16 %v3703
      %v3753 = vunpack.c.l.b16 %v3704
      %v3754 = vunpack.c.l.b16 %v3705
      %v3755 = vunpack.c.l.b16 %v3706
      %v3756 = vpack.c.b16 %v3741, %v3740
      %v3757 = vpack.c.b16 %v3743, %v3742
      %v3758 = vpack.c.b16 %v3745, %v3744
      %v3759 = vpack.c.b16 %v3747, %v3746
      %v3760 = vpack.c.b16 %v3749, %v3748
      %v3761 = vpack.c.b16 %v3751, %v3750
      %v3762 = vpack.c.b16 %v3753, %v3752
      %v3763 = vpack.c.b16 %v3755, %v3754
      %v3788 = vunpack.c.l.b16 %v3708
      %v3789 = vunpack.c.l.b16 %v3709
      %v3790 = vunpack.c.l.b16 %v3710
      %v3791 = vunpack.c.l.b16 %v3711
      %v3792 = vunpack.c.l.b16 %v3712
      %v3793 = vunpack.c.l.b16 %v3713
      %v3794 = vunpack.c.l.b16 %v3714
      %v3795 = vunpack.c.l.b16 %v3715
      %v3796 = vunpack.c.l.b16 %v3716
      %v3797 = vunpack.c.l.b16 %v3717
      %v3798 = vunpack.c.l.b16 %v3718
      %v3799 = vunpack.c.l.b16 %v3719
      %v3800 = vunpack.c.l.b16 %v3720
      %v3801 = vunpack.c.l.b16 %v3721
      %v3802 = vunpack.c.l.b16 %v3722
      %v3803 = vunpack.c.l.b16 %v3723
      %v3804 = vpack.c.b16 %v3789, %v3788
      %v3805 = vpack.c.b16 %v3791, %v3790
      %v3806 = vpack.c.b16 %v3793, %v3792
      %v3807 = vpack.c.b16 %v3795, %v3794
      %v3808 = vpack.c.b16 %v3797, %v3796
      %v3809 = vpack.c.b16 %v3799, %v3798
      %v3810 = vpack.c.b16 %v3801, %v3800
      %v3811 = vpack.c.b16 %v3803, %v3802
      %3820 = vmatprep.subr.bf16.mxu0 0
      %3821 = vmatpush1.bf16.msra.mxu0 %v3811
      %3822 = vmatprep.subr.bf16.mxu0 0
      %3823 = vmatpush1.bf16.msra.mxu0 %v3810
      %3824 = vmatprep.subr.bf16.mxu0 0
      %3825 = vmatpush1.bf16.msra.mxu0 %v3809
      %3826 = vmatprep.subr.bf16.mxu0 0
      %3827 = vmatpush1.bf16.msra.mxu0 %v3808
      %3828 = vmatprep.subr.bf16.mxu0 0
      %3829 = vmatpush1.bf16.msra.mxu0 %v3807
      %3830 = vmatprep.subr.bf16.mxu0 0
      %3831 = vmatpush1.bf16.msra.mxu0 %v3806
      %3832 = vmatprep.subr.bf16.mxu0 0
      %3833 = vmatpush1.bf16.msra.mxu0 %v3805
      %3834 = vmatprep.subr.bf16.mxu0 0
      %3835 = vmatpush1.bf16.msra.mxu0 %v3804
      %3836 = vmatprep.subr.bf16.mxu0 0
      %3837 = vmatpush2.bf16.msra.mxu0 0
      %3838 = vmatprep.subr.bf16.mxu0 0
      %3839 = vmatpush2.bf16.msra.mxu0 0
      %3840 = vmatprep.subr.bf16.mxu0 0
      %3841 = vmatpush2.bf16.msra.mxu0 0
      %3842 = vmatprep.subr.bf16.mxu0 0
      %3843 = vmatpush2.bf16.msra.mxu0 0
      %3844 = vmatprep.subr.bf16.mxu0 0
      %3845 = vmatpush2.bf16.msra.mxu0 0
      %3846 = vmatprep.subr.bf16.mxu0 0
      %3847 = vmatpush2.bf16.msra.mxu0 0
      %3848 = vmatprep.subr.bf16.mxu0 0
      %3849 = vmatpush2.bf16.msra.mxu0 0
      %3850 = vmatprep.subr.bf16.mxu0 0
      %3851 = vmatpush2.bf16.msra.mxu0 0
      %3852 = vmatprep.mubr.bf16.mxu0 0
      %3853 = vmatmul.mubr.bf16.gmra.mxu0 %v3756
      %v3854 = vpop.f32.mrf.mxu0
      %v3855 = vadd.f32 0.0, %v3854
      %v3856 = vpop.f32.mrf.mxu0
      %v3857 = vpop.f32.mrf.mxu0
      %v3858 = vadd.f32 0.0, %v3857
      %v3859 = vpop.f32.mrf.mxu0
      %3860 = vmatprep.mubr.bf16.mxu0 0
      %3861 = vmatmul.mubr.bf16.gmra.mxu0 %v3757
      %v3862 = vpop.f32.mrf.mxu0
      %v3863 = vadd.f32 0.0, %v3862
      %v3864 = vpop.f32.mrf.mxu0
      %v3865 = vpop.f32.mrf.mxu0
      %v3866 = vadd.f32 0.0, %v3865
      %v3867 = vpop.f32.mrf.mxu0
      %3868 = vmatprep.mubr.bf16.mxu0 0
      %3869 = vmatmul.mubr.bf16.gmra.mxu0 %v3758
      %v3870 = vpop.f32.mrf.mxu0
      %v3871 = vadd.f32 0.0, %v3870
      %v3872 = vpop.f32.mrf.mxu0
      %v3873 = vpop.f32.mrf.mxu0
      %v3874 = vadd.f32 0.0, %v3873
      %v3875 = vpop.f32.mrf.mxu0
      %3876 = vmatprep.mubr.bf16.mxu0 0
      %3877 = vmatmul.mubr.bf16.gmra.mxu0 %v3759
      %v3878 = vpop.f32.mrf.mxu0
      %v3879 = vadd.f32 0.0, %v3878
      %v3880 = vpop.f32.mrf.mxu0
      %v3881 = vpop.f32.mrf.mxu0
      %v3882 = vadd.f32 0.0, %v3881
      %v3883 = vpop.f32.mrf.mxu0
      %3884 = vmatprep.mubr.bf16.mxu0 0
      %3885 = vmatmul.mubr.bf16.gmra.mxu0 %v3760
      %v3886 = vpop.f32.mrf.mxu0
      %v3887 = vadd.f32 0.0, %v3886
      %v3888 = vpop.f32.mrf.mxu0
      %v3889 = vpop.f32.mrf.mxu0
      %v3890 = vadd.f32 0.0, %v3889
      %v3891 = vpop.f32.mrf.mxu0
      %3892 = vmatprep.mubr.bf16.mxu0 0
      %3893 = vmatmul.mubr.bf16.gmra.mxu0 %v3761
      %v3894 = vpop.f32.mrf.mxu0
      %v3895 = vadd.f32 0.0, %v3894
      %v3896 = vpop.f32.mrf.mxu0
      %v3897 = vpop.f32.mrf.mxu0
      %v3898 = vadd.f32 0.0, %v3897
      %v3899 = vpop.f32.mrf.mxu0
      %3900 = vmatprep.mubr.bf16.mxu0 0
      %3901 = vmatmul.mubr.bf16.gmra.mxu0 %v3762
      %v3902 = vpop.f32.mrf.mxu0
      %v3903 = vadd.f32 0.0, %v3902
      %v3904 = vpop.f32.mrf.mxu0
      %v3905 = vpop.f32.mrf.mxu0
      %v3906 = vadd.f32 0.0, %v3905
      %v3907 = vpop.f32.mrf.mxu0
      %3908 = vmatprep.mubr.bf16.mxu0 0
      %3909 = vmatmul.mubr.bf16.gmra.mxu0 %v3763
      %v3910 = vpop.f32.mrf.mxu0
      %v3911 = vadd.f32 0.0, %v3910
      %v3912 = vpop.f32.mrf.mxu0
      %v3913 = vpop.f32.mrf.mxu0
      %v3914 = vadd.f32 0.0, %v3913
      %v3915 = vpop.f32.mrf.mxu0
      %3916 = vdwg.mxu0
      %v3917 = vadd.f32 %v3674, %v3855
      %v3918 = vadd.f32 %v3675, %v3858
      %v3919 = vadd.f32 %v3676, %v3863
      %v3920 = vadd.f32 %v3677, %v3866
      %v3921 = vadd.f32 %v3678, %v3871
      %v3922 = vadd.f32 %v3679, %v3874
      %v3923 = vadd.f32 %v3680, %v3879
      %v3924 = vadd.f32 %v3681, %v3882
      %v3925 = vadd.f32 %v3682, %v3887
      %v3926 = vadd.f32 %v3683, %v3890
      %v3927 = vadd.f32 %v3684, %v3895
      %v3928 = vadd.f32 %v3685, %v3898
      %v3929 = vadd.f32 %v3686, %v3903
      %v3930 = vadd.f32 %v3687, %v3906
      %v3931 = vadd.f32 %v3688, %v3911
      %v3932 = vadd.f32 %v3689, %v3914
      %v3933 = vld [vmem:[%s3690] sm:$0xf]
      %v3934 = vld [vmem:[%s3690 + $0x4] sm:$0xf]
      %v3935 = vld [vmem:[%s3690 + $0x8] sm:$0x1]
      %v3936 = vld [vmem:[%s3690 + $0xc] sm:$0xf]
      %v3937 = vld [vmem:[%s3690 + $0x10] sm:$0xf]
      %v3938 = vld [vmem:[%s3690 + $0x14] sm:$0x1]
      %v3939 = vld [vmem:[%s3690 + $0x18] sm:$0xf]
      %v3940 = vld [vmem:[%s3690 + $0x1c] sm:$0xf]
      %v3941 = vld [vmem:[%s3690 + $0x20] sm:$0x1]
      %v3942 = vld [vmem:[%s3690 + $0x24] sm:$0xf]
      %v3943 = vld [vmem:[%s3690 + $0x28] sm:$0xf]
      %v3944 = vld [vmem:[%s3690 + $0x2c] sm:$0x1]
      %v3945 = vld [vmem:[%s3690 + $0x30] sm:$0xf]
      %v3946 = vld [vmem:[%s3690 + $0x34] sm:$0xf]
      %v3947 = vld [vmem:[%s3690 + $0x38] sm:$0x1]
      %v3948 = vld [vmem:[%s3690 + $0x3c] sm:$0xf]
      %v3949 = vld [vmem:[%s3690 + $0x40] sm:$0xf]
      %v3950 = vld [vmem:[%s3690 + $0x44] sm:$0x1]
      %v3951 = vld [vmem:[%s3690 + $0x48] sm:$0xf]
      %v3952 = vld [vmem:[%s3690 + $0x4c] sm:$0xf]
      %v3953 = vld [vmem:[%s3690 + $0x50] sm:$0x1]
      %v3954 = vld [vmem:[%s3690 + $0x54] sm:$0xf]
      %v3955 = vld [vmem:[%s3690 + $0x58] sm:$0xf]
      %v3956 = vld [vmem:[%s3690 + $0x5c] sm:$0x1]
      %v3958 = vshrl.u32 %v3933, 16
      %v3960 = vrot.slane %v3958, 4
      %v3961 = vshll.u32 %v3933, 16
      %v3963 = vrot.slane %v3961, 5
      %v3964 = vor.u32 %v3960, %v3963
      %v3965 = vrot.slane %v3964, 4
      %v3967 = vshll.u32 %v3934, 16
      %v3969 = vrot.slane %v3967, 5
      %v3970 = vsel %vm2817, %v3965, %v3969
      %v3971 = vshrl.u32 %v3934, 16
      %v3973 = vrot.slane %v3971, 4
      %v3974 = vor.u32 %v3973, %v3969
      %v3975 = vrot.slane %v3974, 4
      %v3977 = vshll.u32 %v3935, 16
      %v3979 = vrot.slane %v3977, 5
      %v3980 = vsel %vm2817, %v3975, %v3979
      %v3982 = vshrl.u32 %v3936, 16
      %v3984 = vrot.slane %v3982, 4
      %v3985 = vshll.u32 %v3936, 16
      %v3987 = vrot.slane %v3985, 5
      %v3988 = vor.u32 %v3984, %v3987
      %v3989 = vrot.slane %v3988, 4
      %v3991 = vshll.u32 %v3937, 16
      %v3993 = vrot.slane %v3991, 5
      %v3994 = vsel %vm2817, %v3989, %v3993
      %v3995 = vshrl.u32 %v3937, 16
      %v3997 = vrot.slane %v3995, 4
      %v3998 = vor.u32 %v3997, %v3993
      %v3999 = vrot.slane %v3998, 4
      %v4001 = vshll.u32 %v3938, 16
      %v4003 = vrot.slane %v4001, 5
      %v4004 = vsel %vm2817, %v3999, %v4003
      %v4006 = vshrl.u32 %v3939, 16
      %v4008 = vrot.slane %v4006, 4
      %v4009 = vshll.u32 %v3939, 16
      %v4011 = vrot.slane %v4009, 5
      %v4012 = vor.u32 %v4008, %v4011
      %v4013 = vrot.slane %v4012, 4
      %v4015 = vshll.u32 %v3940, 16
      %v4017 = vrot.slane %v4015, 5
      %v4018 = vsel %vm2817, %v4013, %v4017
      %v4019 = vshrl.u32 %v3940, 16
      %v4021 = vrot.slane %v4019, 4
      %v4022 = vor.u32 %v4021, %v4017
      %v4023 = vrot.slane %v4022, 4
      %v4025 = vshll.u32 %v3941, 16
      %v4027 = vrot.slane %v4025, 5
      %v4028 = vsel %vm2817, %v4023, %v4027
      %v4030 = vshrl.u32 %v3942, 16
      %v4032 = vrot.slane %v4030, 4
      %v4033 = vshll.u32 %v3942, 16
      %v4035 = vrot.slane %v4033, 5
      %v4036 = vor.u32 %v4032, %v4035
      %v4037 = vrot.slane %v4036, 4
      %v4039 = vshll.u32 %v3943, 16
      %v4041 = vrot.slane %v4039, 5
      %v4042 = vsel %vm2817, %v4037, %v4041
      %v4043 = vshrl.u32 %v3943, 16
      %v4045 = vrot.slane %v4043, 4
      %v4046 = vor.u32 %v4045, %v4041
      %v4047 = vrot.slane %v4046, 4
      %v4049 = vshll.u32 %v3944, 16
      %v4051 = vrot.slane %v4049, 5
      %v4052 = vsel %vm2817, %v4047, %v4051
      %v4054 = vshrl.u32 %v3945, 16
      %v4056 = vrot.slane %v4054, 4
      %v4057 = vshll.u32 %v3945, 16
      %v4059 = vrot.slane %v4057, 5
      %v4060 = vor.u32 %v4056, %v4059
      %v4061 = vrot.slane %v4060, 4
      %v4063 = vshll.u32 %v3946, 16
      %v4065 = vrot.slane %v4063, 5
      %v4066 = vsel %vm2817, %v4061, %v4065
      %v4067 = vshrl.u32 %v3946, 16
      %v4069 = vrot.slane %v4067, 4
      %v4070 = vor.u32 %v4069, %v4065
      %v4071 = vrot.slane %v4070, 4
      %v4073 = vshll.u32 %v3947, 16
      %v4075 = vrot.slane %v4073, 5
      %v4076 = vsel %vm2817, %v4071, %v4075
      %v4078 = vshrl.u32 %v3948, 16
      %v4080 = vrot.slane %v4078, 4
      %v4081 = vshll.u32 %v3948, 16
      %v4083 = vrot.slane %v4081, 5
      %v4084 = vor.u32 %v4080, %v4083
      %v4085 = vrot.slane %v4084, 4
      %v4087 = vshll.u32 %v3949, 16
      %v4089 = vrot.slane %v4087, 5
      %v4090 = vsel %vm2817, %v4085, %v4089
      %v4091 = vshrl.u32 %v3949, 16
      %v4093 = vrot.slane %v4091, 4
      %v4094 = vor.u32 %v4093, %v4089
      %v4095 = vrot.slane %v4094, 4
      %v4097 = vshll.u32 %v3950, 16
      %v4099 = vrot.slane %v4097, 5
      %v4100 = vsel %vm2817, %v4095, %v4099
      %v4102 = vshrl.u32 %v3951, 16
      %v4104 = vrot.slane %v4102, 4
      %v4105 = vshll.u32 %v3951, 16
      %v4107 = vrot.slane %v4105, 5
      %v4108 = vor.u32 %v4104, %v4107
      %v4109 = vrot.slane %v4108, 4
      %v4111 = vshll.u32 %v3952, 16
      %v4113 = vrot.slane %v4111, 5
      %v4114 = vsel %vm2817, %v4109, %v4113
      %v4115 = vshrl.u32 %v3952, 16
      %v4117 = vrot.slane %v4115, 4
      %v4118 = vor.u32 %v4117, %v4113
      %v4119 = vrot.slane %v4118, 4
      %v4121 = vshll.u32 %v3953, 16
      %v4123 = vrot.slane %v4121, 5
      %v4124 = vsel %vm2817, %v4119, %v4123
      %v4126 = vshrl.u32 %v3954, 16
      %v4128 = vrot.slane %v4126, 4
      %v4129 = vshll.u32 %v3954, 16
      %v4131 = vrot.slane %v4129, 5
      %v4132 = vor.u32 %v4128, %v4131
      %v4133 = vrot.slane %v4132, 4
      %v4135 = vshll.u32 %v3955, 16
      %v4137 = vrot.slane %v4135, 5
      %v4138 = vsel %vm2817, %v4133, %v4137
      %v4139 = vshrl.u32 %v3955, 16
      %v4141 = vrot.slane %v4139, 4
      %v4142 = vor.u32 %v4141, %v4137
      %v4143 = vrot.slane %v4142, 4
      %v4145 = vshll.u32 %v3956, 16
      %v4147 = vrot.slane %v4145, 5
      %v4148 = vsel %vm2817, %v4143, %v4147
      %s4149 = scalar_lea.vmem %s5, 256
      %v4150 = vld [vmem:[%s4149] sm:$0xf]
      %v4151 = vld [vmem:[%s4149 + $0x4] sm:$0xf]
      %v4152 = vld [vmem:[%s4149 + $0x8] sm:$0xf]
      %v4153 = vld [vmem:[%s4149 + $0xc] sm:$0xf]
      %v4154 = vld [vmem:[%s4149 + $0x10] sm:$0xf]
      %v4155 = vld [vmem:[%s4149 + $0x14] sm:$0xf]
      %v4156 = vld [vmem:[%s4149 + $0x18] sm:$0xf]
      %v4157 = vld [vmem:[%s4149 + $0x1c] sm:$0xf]
      %v4158 = vld [vmem:[%s4149 + $0x20] sm:$0xf]
      %v4159 = vld [vmem:[%s4149 + $0x24] sm:$0xf]
      %v4160 = vld [vmem:[%s4149 + $0x28] sm:$0xf]
      %v4161 = vld [vmem:[%s4149 + $0x2c] sm:$0xf]
      %v4162 = vld [vmem:[%s4149 + $0x30] sm:$0xf]
      %v4163 = vld [vmem:[%s4149 + $0x34] sm:$0xf]
      %v4164 = vld [vmem:[%s4149 + $0x38] sm:$0xf]
      %v4165 = vld [vmem:[%s4149 + $0x3c] sm:$0xf]
      %v4166 = vunpack.c.l.b16 %v3970
      %v4167 = vunpack.c.l.b16 %v3980
      %v4168 = vunpack.c.l.b16 %v3994
      %v4169 = vunpack.c.l.b16 %v4004
      %v4170 = vunpack.c.l.b16 %v4018
      %v4171 = vunpack.c.l.b16 %v4028
      %v4172 = vunpack.c.l.b16 %v4042
      %v4173 = vunpack.c.l.b16 %v4052
      %v4174 = vunpack.c.l.b16 %v4066
      %v4175 = vunpack.c.l.b16 %v4076
      %v4176 = vunpack.c.l.b16 %v4090
      %v4177 = vunpack.c.l.b16 %v4100
      %v4178 = vunpack.c.l.b16 %v4114
      %v4179 = vunpack.c.l.b16 %v4124
      %v4180 = vunpack.c.l.b16 %v4138
      %v4181 = vunpack.c.l.b16 %v4148
      %v4182 = vpack.c.b16 %v4167, %v4166
      %v4183 = vpack.c.b16 %v4169, %v4168
      %v4184 = vpack.c.b16 %v4171, %v4170
      %v4185 = vpack.c.b16 %v4173, %v4172
      %v4186 = vpack.c.b16 %v4175, %v4174
      %v4187 = vpack.c.b16 %v4177, %v4176
      %v4188 = vpack.c.b16 %v4179, %v4178
      %v4189 = vpack.c.b16 %v4181, %v4180
      %v4214 = vunpack.c.l.b16 %v4150
      %v4215 = vunpack.c.l.b16 %v4151
      %v4216 = vunpack.c.l.b16 %v4152
      %v4217 = vunpack.c.l.b16 %v4153
      %v4218 = vunpack.c.l.b16 %v4154
      %v4219 = vunpack.c.l.b16 %v4155
      %v4220 = vunpack.c.l.b16 %v4156
      %v4221 = vunpack.c.l.b16 %v4157
      %v4222 = vunpack.c.l.b16 %v4158
      %v4223 = vunpack.c.l.b16 %v4159
      %v4224 = vunpack.c.l.b16 %v4160
      %v4225 = vunpack.c.l.b16 %v4161
      %v4226 = vunpack.c.l.b16 %v4162
      %v4227 = vunpack.c.l.b16 %v4163
      %v4228 = vunpack.c.l.b16 %v4164
      %v4229 = vunpack.c.l.b16 %v4165
      %v4230 = vpack.c.b16 %v4215, %v4214
      %v4231 = vpack.c.b16 %v4217, %v4216
      %v4232 = vpack.c.b16 %v4219, %v4218
      %v4233 = vpack.c.b16 %v4221, %v4220
      %v4234 = vpack.c.b16 %v4223, %v4222
      %v4235 = vpack.c.b16 %v4225, %v4224
      %v4236 = vpack.c.b16 %v4227, %v4226
      %v4237 = vpack.c.b16 %v4229, %v4228
      %4246 = vmatprep.subr.bf16.mxu0 0
      %4247 = vmatpush1.bf16.msra.mxu0 %v4237
      %4248 = vmatprep.subr.bf16.mxu0 0
      %4249 = vmatpush1.bf16.msra.mxu0 %v4236
      %4250 = vmatprep.subr.bf16.mxu0 0
      %4251 = vmatpush1.bf16.msra.mxu0 %v4235
      %4252 = vmatprep.subr.bf16.mxu0 0
      %4253 = vmatpush1.bf16.msra.mxu0 %v4234
      %4254 = vmatprep.subr.bf16.mxu0 0
      %4255 = vmatpush1.bf16.msra.mxu0 %v4233
      %4256 = vmatprep.subr.bf16.mxu0 0
      %4257 = vmatpush1.bf16.msra.mxu0 %v4232
      %4258 = vmatprep.subr.bf16.mxu0 0
      %4259 = vmatpush1.bf16.msra.mxu0 %v4231
      %4260 = vmatprep.subr.bf16.mxu0 0
      %4261 = vmatpush1.bf16.msra.mxu0 %v4230
      %4262 = vmatprep.subr.bf16.mxu0 0
      %4263 = vmatpush2.bf16.msra.mxu0 0
      %4264 = vmatprep.subr.bf16.mxu0 0
      %4265 = vmatpush2.bf16.msra.mxu0 0
      %4266 = vmatprep.subr.bf16.mxu0 0
      %4267 = vmatpush2.bf16.msra.mxu0 0
      %4268 = vmatprep.subr.bf16.mxu0 0
      %4269 = vmatpush2.bf16.msra.mxu0 0
      %4270 = vmatprep.subr.bf16.mxu0 0
      %4271 = vmatpush2.bf16.msra.mxu0 0
      %4272 = vmatprep.subr.bf16.mxu0 0
      %4273 = vmatpush2.bf16.msra.mxu0 0
      %4274 = vmatprep.subr.bf16.mxu0 0
      %4275 = vmatpush2.bf16.msra.mxu0 0
      %4276 = vmatprep.subr.bf16.mxu0 0
      %4277 = vmatpush2.bf16.msra.mxu0 0
      %4278 = vmatprep.mubr.bf16.mxu0 0
      %4279 = vmatmul.mubr.bf16.gmra.mxu0 %v4182
      %v4280 = vpop.f32.mrf.mxu0
      %v4281 = vadd.f32 0.0, %v4280
      %v4282 = vpop.f32.mrf.mxu0
      %v4283 = vpop.f32.mrf.mxu0
      %v4284 = vadd.f32 0.0, %v4283
      %v4285 = vpop.f32.mrf.mxu0
      %4286 = vmatprep.mubr.bf16.mxu0 0
      %4287 = vmatmul.mubr.bf16.gmra.mxu0 %v4183
      %v4288 = vpop.f32.mrf.mxu0
      %v4289 = vadd.f32 0.0, %v4288
      %v4290 = vpop.f32.mrf.mxu0
      %v4291 = vpop.f32.mrf.mxu0
      %v4292 = vadd.f32 0.0, %v4291
      %v4293 = vpop.f32.mrf.mxu0
      %4294 = vmatprep.mubr.bf16.mxu0 0
      %4295 = vmatmul.mubr.bf16.gmra.mxu0 %v4184
      %v4296 = vpop.f32.mrf.mxu0
      %v4297 = vadd.f32 0.0, %v4296
      %v4298 = vpop.f32.mrf.mxu0
      %v4299 = vpop.f32.mrf.mxu0
      %v4300 = vadd.f32 0.0, %v4299
      %v4301 = vpop.f32.mrf.mxu0
      %4302 = vmatprep.mubr.bf16.mxu0 0
      %4303 = vmatmul.mubr.bf16.gmra.mxu0 %v4185
      %v4304 = vpop.f32.mrf.mxu0
      %v4305 = vadd.f32 0.0, %v4304
      %v4306 = vpop.f32.mrf.mxu0
      %v4307 = vpop.f32.mrf.mxu0
      %v4308 = vadd.f32 0.0, %v4307
      %v4309 = vpop.f32.mrf.mxu0
      %4310 = vmatprep.mubr.bf16.mxu0 0
      %4311 = vmatmul.mubr.bf16.gmra.mxu0 %v4186
      %v4312 = vpop.f32.mrf.mxu0
      %v4313 = vadd.f32 0.0, %v4312
      %v4314 = vpop.f32.mrf.mxu0
      %v4315 = vpop.f32.mrf.mxu0
      %v4316 = vadd.f32 0.0, %v4315
      %v4317 = vpop.f32.mrf.mxu0
      %4318 = vmatprep.mubr.bf16.mxu0 0
      %4319 = vmatmul.mubr.bf16.gmra.mxu0 %v4187
      %v4320 = vpop.f32.mrf.mxu0
      %v4321 = vadd.f32 0.0, %v4320
      %v4322 = vpop.f32.mrf.mxu0
      %v4323 = vpop.f32.mrf.mxu0
      %v4324 = vadd.f32 0.0, %v4323
      %v4325 = vpop.f32.mrf.mxu0
      %4326 = vmatprep.mubr.bf16.mxu0 0
      %4327 = vmatmul.mubr.bf16.gmra.mxu0 %v4188
      %v4328 = vpop.f32.mrf.mxu0
      %v4329 = vadd.f32 0.0, %v4328
      %v4330 = vpop.f32.mrf.mxu0
      %v4331 = vpop.f32.mrf.mxu0
      %v4332 = vadd.f32 0.0, %v4331
      %v4333 = vpop.f32.mrf.mxu0
      %4334 = vmatprep.mubr.bf16.mxu0 0
      %4335 = vmatmul.mubr.bf16.gmra.mxu0 %v4189
      %v4336 = vpop.f32.mrf.mxu0
      %v4337 = vadd.f32 0.0, %v4336
      %v4338 = vpop.f32.mrf.mxu0
      %v4339 = vpop.f32.mrf.mxu0
      %v4340 = vadd.f32 0.0, %v4339
      %v4341 = vpop.f32.mrf.mxu0
      %4342 = vdwg.mxu0
      %v4343 = vadd.f32 %v3917, %v4281
      %v4344 = vadd.f32 %v3918, %v4284
      %v4345 = vadd.f32 %v3919, %v4289
      %v4346 = vadd.f32 %v3920, %v4292
      %v4347 = vadd.f32 %v3921, %v4297
      %v4348 = vadd.f32 %v3922, %v4300
      %v4349 = vadd.f32 %v3923, %v4305
      %v4350 = vadd.f32 %v3924, %v4308
      %v4351 = vadd.f32 %v3925, %v4313
      %v4352 = vadd.f32 %v3926, %v4316
      %v4353 = vadd.f32 %v3927, %v4321
      %v4354 = vadd.f32 %v3928, %v4324
      %v4355 = vadd.f32 %v3929, %v4329
      %v4356 = vadd.f32 %v3930, %v4332
      %v4357 = vadd.f32 %v3931, %v4337
      %v4358 = vadd.f32 %v3932, %v4340
      %v4359 = vld [vmem:[%s3690] sm:$0xe]
      %v4360 = vld [vmem:[%s3690 + $0xc] sm:$0xe]
      %v4361 = vld [vmem:[%s3690 + $0x18] sm:$0xe]
      %v4362 = vld [vmem:[%s3690 + $0x24] sm:$0xe]
      %v4363 = vld [vmem:[%s3690 + $0x30] sm:$0xe]
      %v4364 = vld [vmem:[%s3690 + $0x3c] sm:$0xe]
      %v4365 = vld [vmem:[%s3690 + $0x48] sm:$0xe]
      %v4366 = vld [vmem:[%s3690 + $0x54] sm:$0xe]
      %v4391 = vrot.slane %v4359, 5
      %v4392 = vrot.slane %v4391, 4
      %v4393 = vrot.slane %v3934, 5
      %v4394 = vsel %vm3423, %v4392, %v4393
      %v4395 = vrot.slane %v4393, 4
      %v4396 = vrot.slane %v3935, 5
      %v4397 = vsel %vm3423, %v4395, %v4396
      %v4398 = vrot.slane %v4360, 5
      %v4399 = vrot.slane %v4398, 4
      %v4400 = vrot.slane %v3937, 5
      %v4401 = vsel %vm3423, %v4399, %v4400
      %v4402 = vrot.slane %v4400, 4
      %v4403 = vrot.slane %v3938, 5
      %v4404 = vsel %vm3423, %v4402, %v4403
      %v4405 = vrot.slane %v4361, 5
      %v4406 = vrot.slane %v4405, 4
      %v4407 = vrot.slane %v3940, 5
      %v4408 = vsel %vm3423, %v4406, %v4407
      %v4409 = vrot.slane %v4407, 4
      %v4410 = vrot.slane %v3941, 5
      %v4411 = vsel %vm3423, %v4409, %v4410
      %v4412 = vrot.slane %v4362, 5
      %v4413 = vrot.slane %v4412, 4
      %v4414 = vrot.slane %v3943, 5
      %v4415 = vsel %vm3423, %v4413, %v4414
      %v4416 = vrot.slane %v4414, 4
      %v4417 = vrot.slane %v3944, 5
      %v4418 = vsel %vm3423, %v4416, %v4417
      %v4419 = vrot.slane %v4363, 5
      %v4420 = vrot.slane %v4419, 4
      %v4421 = vrot.slane %v3946, 5
      %v4422 = vsel %vm3423, %v4420, %v4421
      %v4423 = vrot.slane %v4421, 4
      %v4424 = vrot.slane %v3947, 5
      %v4425 = vsel %vm3423, %v4423, %v4424
      %v4426 = vrot.slane %v4364, 5
      %v4427 = vrot.slane %v4426, 4
      %v4428 = vrot.slane %v3949, 5
      %v4429 = vsel %vm3423, %v4427, %v4428
      %v4430 = vrot.slane %v4428, 4
      %v4431 = vrot.slane %v3950, 5
      %v4432 = vsel %vm3423, %v4430, %v4431
      %v4433 = vrot.slane %v4365, 5
      %v4434 = vrot.slane %v4433, 4
      %v4435 = vrot.slane %v3952, 5
      %v4436 = vsel %vm3423, %v4434, %v4435
      %v4437 = vrot.slane %v4435, 4
      %v4438 = vrot.slane %v3953, 5
      %v4439 = vsel %vm3423, %v4437, %v4438
      %v4440 = vrot.slane %v4366, 5
      %v4441 = vrot.slane %v4440, 4
      %v4442 = vrot.slane %v3955, 5
      %v4443 = vsel %vm3423, %v4441, %v4442
      %v4444 = vrot.slane %v4442, 4
      %v4445 = vrot.slane %v3956, 5
      %v4446 = vsel %vm3423, %v4444, %v4445
      %s4447 = scalar_lea.vmem %s5, 320
      %v4448 = vld [vmem:[%s4447] sm:$0xf]
      %v4449 = vld [vmem:[%s4447 + $0x4] sm:$0xf]
      %v4450 = vld [vmem:[%s4447 + $0x8] sm:$0xf]
      %v4451 = vld [vmem:[%s4447 + $0xc] sm:$0xf]
      %v4452 = vld [vmem:[%s4447 + $0x10] sm:$0xf]
      %v4453 = vld [vmem:[%s4447 + $0x14] sm:$0xf]
      %v4454 = vld [vmem:[%s4447 + $0x18] sm:$0xf]
      %v4455 = vld [vmem:[%s4447 + $0x1c] sm:$0xf]
      %v4456 = vld [vmem:[%s4447 + $0x20] sm:$0xf]
      %v4457 = vld [vmem:[%s4447 + $0x24] sm:$0xf]
      %v4458 = vld [vmem:[%s4447 + $0x28] sm:$0xf]
      %v4459 = vld [vmem:[%s4447 + $0x2c] sm:$0xf]
      %v4460 = vld [vmem:[%s4447 + $0x30] sm:$0xf]
      %v4461 = vld [vmem:[%s4447 + $0x34] sm:$0xf]
      %v4462 = vld [vmem:[%s4447 + $0x38] sm:$0xf]
      %v4463 = vld [vmem:[%s4447 + $0x3c] sm:$0xf]
      %v4464 = vunpack.c.l.b16 %v4394
      %v4465 = vunpack.c.l.b16 %v4397
      %v4466 = vunpack.c.l.b16 %v4401
      %v4467 = vunpack.c.l.b16 %v4404
      %v4468 = vunpack.c.l.b16 %v4408
      %v4469 = vunpack.c.l.b16 %v4411
      %v4470 = vunpack.c.l.b16 %v4415
      %v4471 = vunpack.c.l.b16 %v4418
      %v4472 = vunpack.c.l.b16 %v4422
      %v4473 = vunpack.c.l.b16 %v4425
      %v4474 = vunpack.c.l.b16 %v4429
      %v4475 = vunpack.c.l.b16 %v4432
      %v4476 = vunpack.c.l.b16 %v4436
      %v4477 = vunpack.c.l.b16 %v4439
      %v4478 = vunpack.c.l.b16 %v4443
      %v4479 = vunpack.c.l.b16 %v4446
      %v4480 = vpack.c.b16 %v4465, %v4464
      %v4481 = vpack.c.b16 %v4467, %v4466
      %v4482 = vpack.c.b16 %v4469, %v4468
      %v4483 = vpack.c.b16 %v4471, %v4470
      %v4484 = vpack.c.b16 %v4473, %v4472
      %v4485 = vpack.c.b16 %v4475, %v4474
      %v4486 = vpack.c.b16 %v4477, %v4476
      %v4487 = vpack.c.b16 %v4479, %v4478
      %v4512 = vunpack.c.l.b16 %v4448
      %v4513 = vunpack.c.l.b16 %v4449
      %v4514 = vunpack.c.l.b16 %v4450
      %v4515 = vunpack.c.l.b16 %v4451
      %v4516 = vunpack.c.l.b16 %v4452
      %v4517 = vunpack.c.l.b16 %v4453
      %v4518 = vunpack.c.l.b16 %v4454
      %v4519 = vunpack.c.l.b16 %v4455
      %v4520 = vunpack.c.l.b16 %v4456
      %v4521 = vunpack.c.l.b16 %v4457
      %v4522 = vunpack.c.l.b16 %v4458
      %v4523 = vunpack.c.l.b16 %v4459
      %v4524 = vunpack.c.l.b16 %v4460
      %v4525 = vunpack.c.l.b16 %v4461
      %v4526 = vunpack.c.l.b16 %v4462
      %v4527 = vunpack.c.l.b16 %v4463
      %v4528 = vpack.c.b16 %v4513, %v4512
      %v4529 = vpack.c.b16 %v4515, %v4514
      %v4530 = vpack.c.b16 %v4517, %v4516
      %v4531 = vpack.c.b16 %v4519, %v4518
      %v4532 = vpack.c.b16 %v4521, %v4520
      %v4533 = vpack.c.b16 %v4523, %v4522
      %v4534 = vpack.c.b16 %v4525, %v4524
      %v4535 = vpack.c.b16 %v4527, %v4526
      %4544 = vmatprep.subr.bf16.mxu0 0
      %4545 = vmatpush1.bf16.msra.mxu0 %v4535
      %4546 = vmatprep.subr.bf16.mxu0 0
      %4547 = vmatpush1.bf16.msra.mxu0 %v4534
      %4548 = vmatprep.subr.bf16.mxu0 0
      %4549 = vmatpush1.bf16.msra.mxu0 %v4533
      %4550 = vmatprep.subr.bf16.mxu0 0
      %4551 = vmatpush1.bf16.msra.mxu0 %v4532
      %4552 = vmatprep.subr.bf16.mxu0 0
      %4553 = vmatpush1.bf16.msra.mxu0 %v4531
      %4554 = vmatprep.subr.bf16.mxu0 0
      %4555 = vmatpush1.bf16.msra.mxu0 %v4530
      %4556 = vmatprep.subr.bf16.mxu0 0
      %4557 = vmatpush1.bf16.msra.mxu0 %v4529
      %4558 = vmatprep.subr.bf16.mxu0 0
      %4559 = vmatpush1.bf16.msra.mxu0 %v4528
      %4560 = vmatprep.subr.bf16.mxu0 0
      %4561 = vmatpush2.bf16.msra.mxu0 0
      %4562 = vmatprep.subr.bf16.mxu0 0
      %4563 = vmatpush2.bf16.msra.mxu0 0
      %4564 = vmatprep.subr.bf16.mxu0 0
      %4565 = vmatpush2.bf16.msra.mxu0 0
      %4566 = vmatprep.subr.bf16.mxu0 0
      %4567 = vmatpush2.bf16.msra.mxu0 0
      %4568 = vmatprep.subr.bf16.mxu0 0
      %4569 = vmatpush2.bf16.msra.mxu0 0
      %4570 = vmatprep.subr.bf16.mxu0 0
      %4571 = vmatpush2.bf16.msra.mxu0 0
      %4572 = vmatprep.subr.bf16.mxu0 0
      %4573 = vmatpush2.bf16.msra.mxu0 0
      %4574 = vmatprep.subr.bf16.mxu0 0
      %4575 = vmatpush2.bf16.msra.mxu0 0
      %4576 = vmatprep.mubr.bf16.mxu0 0
      %4577 = vmatmul.mubr.bf16.gmra.mxu0 %v4480
      %v4578 = vpop.f32.mrf.mxu0
      %v4579 = vadd.f32 0.0, %v4578
      %v4580 = vpop.f32.mrf.mxu0
      %v4581 = vpop.f32.mrf.mxu0
      %v4582 = vadd.f32 0.0, %v4581
      %v4583 = vpop.f32.mrf.mxu0
      %4584 = vmatprep.mubr.bf16.mxu0 0
      %4585 = vmatmul.mubr.bf16.gmra.mxu0 %v4481
      %v4586 = vpop.f32.mrf.mxu0
      %v4587 = vadd.f32 0.0, %v4586
      %v4588 = vpop.f32.mrf.mxu0
      %v4589 = vpop.f32.mrf.mxu0
      %v4590 = vadd.f32 0.0, %v4589
      %v4591 = vpop.f32.mrf.mxu0
      %4592 = vmatprep.mubr.bf16.mxu0 0
      %4593 = vmatmul.mubr.bf16.gmra.mxu0 %v4482
      %v4594 = vpop.f32.mrf.mxu0
      %v4595 = vadd.f32 0.0, %v4594
      %v4596 = vpop.f32.mrf.mxu0
      %v4597 = vpop.f32.mrf.mxu0
      %v4598 = vadd.f32 0.0, %v4597
      %v4599 = vpop.f32.mrf.mxu0
      %4600 = vmatprep.mubr.bf16.mxu0 0
      %4601 = vmatmul.mubr.bf16.gmra.mxu0 %v4483
      %v4602 = vpop.f32.mrf.mxu0
      %v4603 = vadd.f32 0.0, %v4602
      %v4604 = vpop.f32.mrf.mxu0
      %v4605 = vpop.f32.mrf.mxu0
      %v4606 = vadd.f32 0.0, %v4605
      %v4607 = vpop.f32.mrf.mxu0
      %4608 = vmatprep.mubr.bf16.mxu0 0
      %4609 = vmatmul.mubr.bf16.gmra.mxu0 %v4484
      %v4610 = vpop.f32.mrf.mxu0
      %v4611 = vadd.f32 0.0, %v4610
      %v4612 = vpop.f32.mrf.mxu0
      %v4613 = vpop.f32.mrf.mxu0
      %v4614 = vadd.f32 0.0, %v4613
      %v4615 = vpop.f32.mrf.mxu0
      %4616 = vmatprep.mubr.bf16.mxu0 0
      %4617 = vmatmul.mubr.bf16.gmra.mxu0 %v4485
      %v4618 = vpop.f32.mrf.mxu0
      %v4619 = vadd.f32 0.0, %v4618
      %v4620 = vpop.f32.mrf.mxu0
      %v4621 = vpop.f32.mrf.mxu0
      %v4622 = vadd.f32 0.0, %v4621
      %v4623 = vpop.f32.mrf.mxu0
      %4624 = vmatprep.mubr.bf16.mxu0 0
      %4625 = vmatmul.mubr.bf16.gmra.mxu0 %v4486
      %v4626 = vpop.f32.mrf.mxu0
      %v4627 = vadd.f32 0.0, %v4626
      %v4628 = vpop.f32.mrf.mxu0
      %v4629 = vpop.f32.mrf.mxu0
      %v4630 = vadd.f32 0.0, %v4629
      %v4631 = vpop.f32.mrf.mxu0
      %4632 = vmatprep.mubr.bf16.mxu0 0
      %4633 = vmatmul.mubr.bf16.gmra.mxu0 %v4487
      %v4634 = vpop.f32.mrf.mxu0
      %v4635 = vadd.f32 0.0, %v4634
      %v4636 = vpop.f32.mrf.mxu0
      %v4637 = vpop.f32.mrf.mxu0
      %v4638 = vadd.f32 0.0, %v4637
      %v4639 = vpop.f32.mrf.mxu0
      %4640 = vdwg.mxu0
      %v4641 = vadd.f32 %v4343, %v4579
      %v4642 = vadd.f32 %v4344, %v4582
      %v4643 = vadd.f32 %v4345, %v4587
      %v4644 = vadd.f32 %v4346, %v4590
      %v4645 = vadd.f32 %v4347, %v4595
      %v4646 = vadd.f32 %v4348, %v4598
      %v4647 = vadd.f32 %v4349, %v4603
      %v4648 = vadd.f32 %v4350, %v4606
      %v4649 = vadd.f32 %v4351, %v4611
      %v4650 = vadd.f32 %v4352, %v4614
      %v4651 = vadd.f32 %v4353, %v4619
      %v4652 = vadd.f32 %v4354, %v4622
      %v4653 = vadd.f32 %v4355, %v4627
      %v4654 = vadd.f32 %v4356, %v4630
      %v4655 = vadd.f32 %v4357, %v4635
      %v4656 = vadd.f32 %v4358, %v4638
      %s4657 = scalar_lea.vmem [#allocation2], 24
      %v4658 = vld [vmem:[%s4657] sm:$0xf]
      %v4659 = vld [vmem:[%s4657 + $0x4] sm:$0xf]
      %v4660 = vld [vmem:[%s4657 + $0xc] sm:$0xf]
      %v4661 = vld [vmem:[%s4657 + $0x10] sm:$0xf]
      %v4662 = vld [vmem:[%s4657 + $0x18] sm:$0xf]
      %v4663 = vld [vmem:[%s4657 + $0x1c] sm:$0xf]
      %v4664 = vld [vmem:[%s4657 + $0x24] sm:$0xf]
      %v4665 = vld [vmem:[%s4657 + $0x28] sm:$0xf]
      %v4666 = vld [vmem:[%s4657 + $0x30] sm:$0xf]
      %v4667 = vld [vmem:[%s4657 + $0x34] sm:$0xf]
      %v4668 = vld [vmem:[%s4657 + $0x3c] sm:$0xf]
      %v4669 = vld [vmem:[%s4657 + $0x40] sm:$0xf]
      %v4670 = vld [vmem:[%s4657 + $0x48] sm:$0xf]
      %v4671 = vld [vmem:[%s4657 + $0x4c] sm:$0xf]
      %v4672 = vld [vmem:[%s4657 + $0x54] sm:$0xf]
      %v4673 = vld [vmem:[%s4657 + $0x58] sm:$0xf]
      %s4674 = scalar_lea.vmem %s5, 384
      %v4675 = vld [vmem:[%s4674] sm:$0xf]
      %v4676 = vld [vmem:[%s4674 + $0x4] sm:$0xf]
      %v4677 = vld [vmem:[%s4674 + $0x8] sm:$0xf]
      %v4678 = vld [vmem:[%s4674 + $0xc] sm:$0xf]
      %v4679 = vld [vmem:[%s4674 + $0x10] sm:$0xf]
      %v4680 = vld [vmem:[%s4674 + $0x14] sm:$0xf]
      %v4681 = vld [vmem:[%s4674 + $0x18] sm:$0xf]
      %v4682 = vld [vmem:[%s4674 + $0x1c] sm:$0xf]
      %v4683 = vld [vmem:[%s4674 + $0x20] sm:$0xf]
      %v4684 = vld [vmem:[%s4674 + $0x24] sm:$0xf]
      %v4685 = vld [vmem:[%s4674 + $0x28] sm:$0xf]
      %v4686 = vld [vmem:[%s4674 + $0x2c] sm:$0xf]
      %v4687 = vld [vmem:[%s4674 + $0x30] sm:$0xf]
      %v4688 = vld [vmem:[%s4674 + $0x34] sm:$0xf]
      %v4689 = vld [vmem:[%s4674 + $0x38] sm:$0xf]
      %v4690 = vld [vmem:[%s4674 + $0x3c] sm:$0xf]
      %v4707 = vunpack.c.l.b16 %v4658
      %v4708 = vunpack.c.l.b16 %v4659
      %v4709 = vunpack.c.l.b16 %v4660
      %v4710 = vunpack.c.l.b16 %v4661
      %v4711 = vunpack.c.l.b16 %v4662
      %v4712 = vunpack.c.l.b16 %v4663
      %v4713 = vunpack.c.l.b16 %v4664
      %v4714 = vunpack.c.l.b16 %v4665
      %v4715 = vunpack.c.l.b16 %v4666
      %v4716 = vunpack.c.l.b16 %v4667
      %v4717 = vunpack.c.l.b16 %v4668
      %v4718 = vunpack.c.l.b16 %v4669
      %v4719 = vunpack.c.l.b16 %v4670
      %v4720 = vunpack.c.l.b16 %v4671
      %v4721 = vunpack.c.l.b16 %v4672
      %v4722 = vunpack.c.l.b16 %v4673
      %v4723 = vpack.c.b16 %v4708, %v4707
      %v4724 = vpack.c.b16 %v4710, %v4709
      %v4725 = vpack.c.b16 %v4712, %v4711
      %v4726 = vpack.c.b16 %v4714, %v4713
      %v4727 = vpack.c.b16 %v4716, %v4715
      %v4728 = vpack.c.b16 %v4718, %v4717
      %v4729 = vpack.c.b16 %v4720, %v4719
      %v4730 = vpack.c.b16 %v4722, %v4721
      %v4755 = vunpack.c.l.b16 %v4675
      %v4756 = vunpack.c.l.b16 %v4676
      %v4757 = vunpack.c.l.b16 %v4677
      %v4758 = vunpack.c.l.b16 %v4678
      %v4759 = vunpack.c.l.b16 %v4679
      %v4760 = vunpack.c.l.b16 %v4680
      %v4761 = vunpack.c.l.b16 %v4681
      %v4762 = vunpack.c.l.b16 %v4682
      %v4763 = vunpack.c.l.b16 %v4683
      %v4764 = vunpack.c.l.b16 %v4684
      %v4765 = vunpack.c.l.b16 %v4685
      %v4766 = vunpack.c.l.b16 %v4686
      %v4767 = vunpack.c.l.b16 %v4687
      %v4768 = vunpack.c.l.b16 %v4688
      %v4769 = vunpack.c.l.b16 %v4689
      %v4770 = vunpack.c.l.b16 %v4690
      %v4771 = vpack.c.b16 %v4756, %v4755
      %v4772 = vpack.c.b16 %v4758, %v4757
      %v4773 = vpack.c.b16 %v4760, %v4759
      %v4774 = vpack.c.b16 %v4762, %v4761
      %v4775 = vpack.c.b16 %v4764, %v4763
      %v4776 = vpack.c.b16 %v4766, %v4765
      %v4777 = vpack.c.b16 %v4768, %v4767
      %v4778 = vpack.c.b16 %v4770, %v4769
      %4787 = vmatprep.subr.bf16.mxu0 0
      %4788 = vmatpush1.bf16.msra.mxu0 %v4778
      %4789 = vmatprep.subr.bf16.mxu0 0
      %4790 = vmatpush1.bf16.msra.mxu0 %v4777
      %4791 = vmatprep.subr.bf16.mxu0 0
      %4792 = vmatpush1.bf16.msra.mxu0 %v4776
      %4793 = vmatprep.subr.bf16.mxu0 0
      %4794 = vmatpush1.bf16.msra.mxu0 %v4775
      %4795 = vmatprep.subr.bf16.mxu0 0
      %4796 = vmatpush1.bf16.msra.mxu0 %v4774
      %4797 = vmatprep.subr.bf16.mxu0 0
      %4798 = vmatpush1.bf16.msra.mxu0 %v4773
      %4799 = vmatprep.subr.bf16.mxu0 0
      %4800 = vmatpush1.bf16.msra.mxu0 %v4772
      %4801 = vmatprep.subr.bf16.mxu0 0
      %4802 = vmatpush1.bf16.msra.mxu0 %v4771
      %4803 = vmatprep.subr.bf16.mxu0 0
      %4804 = vmatpush2.bf16.msra.mxu0 0
      %4805 = vmatprep.subr.bf16.mxu0 0
      %4806 = vmatpush2.bf16.msra.mxu0 0
      %4807 = vmatprep.subr.bf16.mxu0 0
      %4808 = vmatpush2.bf16.msra.mxu0 0
      %4809 = vmatprep.subr.bf16.mxu0 0
      %4810 = vmatpush2.bf16.msra.mxu0 0
      %4811 = vmatprep.subr.bf16.mxu0 0
      %4812 = vmatpush2.bf16.msra.mxu0 0
      %4813 = vmatprep.subr.bf16.mxu0 0
      %4814 = vmatpush2.bf16.msra.mxu0 0
      %4815 = vmatprep.subr.bf16.mxu0 0
      %4816 = vmatpush2.bf16.msra.mxu0 0
      %4817 = vmatprep.subr.bf16.mxu0 0
      %4818 = vmatpush2.bf16.msra.mxu0 0
      %4819 = vmatprep.mubr.bf16.mxu0 0
      %4820 = vmatmul.mubr.bf16.gmra.mxu0 %v4723
      %v4821 = vpop.f32.mrf.mxu0
      %v4822 = vadd.f32 0.0, %v4821
      %v4823 = vpop.f32.mrf.mxu0
      %v4824 = vpop.f32.mrf.mxu0
      %v4825 = vadd.f32 0.0, %v4824
      %v4826 = vpop.f32.mrf.mxu0
      %4827 = vmatprep.mubr.bf16.mxu0 0
      %4828 = vmatmul.mubr.bf16.gmra.mxu0 %v4724
      %v4829 = vpop.f32.mrf.mxu0
      %v4830 = vadd.f32 0.0, %v4829
      %v4831 = vpop.f32.mrf.mxu0
      %v4832 = vpop.f32.mrf.mxu0
      %v4833 = vadd.f32 0.0, %v4832
      %v4834 = vpop.f32.mrf.mxu0
      %4835 = vmatprep.mubr.bf16.mxu0 0
      %4836 = vmatmul.mubr.bf16.gmra.mxu0 %v4725
      %v4837 = vpop.f32.mrf.mxu0
      %v4838 = vadd.f32 0.0, %v4837
      %v4839 = vpop.f32.mrf.mxu0
      %v4840 = vpop.f32.mrf.mxu0
      %v4841 = vadd.f32 0.0, %v4840
      %v4842 = vpop.f32.mrf.mxu0
      %4843 = vmatprep.mubr.bf16.mxu0 0
      %4844 = vmatmul.mubr.bf16.gmra.mxu0 %v4726
      %v4845 = vpop.f32.mrf.mxu0
      %v4846 = vadd.f32 0.0, %v4845
      %v4847 = vpop.f32.mrf.mxu0
      %v4848 = vpop.f32.mrf.mxu0
      %v4849 = vadd.f32 0.0, %v4848
      %v4850 = vpop.f32.mrf.mxu0
      %4851 = vmatprep.mubr.bf16.mxu0 0
      %4852 = vmatmul.mubr.bf16.gmra.mxu0 %v4727
      %v4853 = vpop.f32.mrf.mxu0
      %v4854 = vadd.f32 0.0, %v4853
      %v4855 = vpop.f32.mrf.mxu0
      %v4856 = vpop.f32.mrf.mxu0
      %v4857 = vadd.f32 0.0, %v4856
      %v4858 = vpop.f32.mrf.mxu0
      %4859 = vmatprep.mubr.bf16.mxu0 0
      %4860 = vmatmul.mubr.bf16.gmra.mxu0 %v4728
      %v4861 = vpop.f32.mrf.mxu0
      %v4862 = vadd.f32 0.0, %v4861
      %v4863 = vpop.f32.mrf.mxu0
      %v4864 = vpop.f32.mrf.mxu0
      %v4865 = vadd.f32 0.0, %v4864
      %v4866 = vpop.f32.mrf.mxu0
      %4867 = vmatprep.mubr.bf16.mxu0 0
      %4868 = vmatmul.mubr.bf16.gmra.mxu0 %v4729
      %v4869 = vpop.f32.mrf.mxu0
      %v4870 = vadd.f32 0.0, %v4869
      %v4871 = vpop.f32.mrf.mxu0
      %v4872 = vpop.f32.mrf.mxu0
      %v4873 = vadd.f32 0.0, %v4872
      %v4874 = vpop.f32.mrf.mxu0
      %4875 = vmatprep.mubr.bf16.mxu0 0
      %4876 = vmatmul.mubr.bf16.gmra.mxu0 %v4730
      %v4877 = vpop.f32.mrf.mxu0
      %v4878 = vadd.f32 0.0, %v4877
      %v4879 = vpop.f32.mrf.mxu0
      %v4880 = vpop.f32.mrf.mxu0
      %v4881 = vadd.f32 0.0, %v4880
      %v4882 = vpop.f32.mrf.mxu0
      %4883 = vdwg.mxu0
      %v4884 = vadd.f32 %v4641, %v4822
      %v4885 = vadd.f32 %v4642, %v4825
      %v4886 = vadd.f32 %v4643, %v4830
      %v4887 = vadd.f32 %v4644, %v4833
      %v4888 = vadd.f32 %v4645, %v4838
      %v4889 = vadd.f32 %v4646, %v4841
      %v4890 = vadd.f32 %v4647, %v4846
      %v4891 = vadd.f32 %v4648, %v4849
      %v4892 = vadd.f32 %v4649, %v4854
      %v4893 = vadd.f32 %v4650, %v4857
      %v4894 = vadd.f32 %v4651, %v4862
      %v4895 = vadd.f32 %v4652, %v4865
      %v4896 = vadd.f32 %v4653, %v4870
      %v4897 = vadd.f32 %v4654, %v4873
      %v4898 = vadd.f32 %v4655, %v4878
      %v4899 = vadd.f32 %v4656, %v4881
      %v4900 = vld [vmem:[%s4657] sm:$0xf]
      %v4901 = vld [vmem:[%s4657 + $0x4] sm:$0xf]
      %v4902 = vld [vmem:[%s4657 + $0x8] sm:$0x1]
      %v4903 = vld [vmem:[%s4657 + $0xc] sm:$0xf]
      %v4904 = vld [vmem:[%s4657 + $0x10] sm:$0xf]
      %v4905 = vld [vmem:[%s4657 + $0x14] sm:$0x1]
      %v4906 = vld [vmem:[%s4657 + $0x18] sm:$0xf]
      %v4907 = vld [vmem:[%s4657 + $0x1c] sm:$0xf]
      %v4908 = vld [vmem:[%s4657 + $0x20] sm:$0x1]
      %v4909 = vld [vmem:[%s4657 + $0x24] sm:$0xf]
      %v4910 = vld [vmem:[%s4657 + $0x28] sm:$0xf]
      %v4911 = vld [vmem:[%s4657 + $0x2c] sm:$0x1]
      %v4912 = vld [vmem:[%s4657 + $0x30] sm:$0xf]
      %v4913 = vld [vmem:[%s4657 + $0x34] sm:$0xf]
      %v4914 = vld [vmem:[%s4657 + $0x38] sm:$0x1]
      %v4915 = vld [vmem:[%s4657 + $0x3c] sm:$0xf]
      %v4916 = vld [vmem:[%s4657 + $0x40] sm:$0xf]
      %v4917 = vld [vmem:[%s4657 + $0x44] sm:$0x1]
      %v4918 = vld [vmem:[%s4657 + $0x48] sm:$0xf]
      %v4919 = vld [vmem:[%s4657 + $0x4c] sm:$0xf]
      %v4920 = vld [vmem:[%s4657 + $0x50] sm:$0x1]
      %v4921 = vld [vmem:[%s4657 + $0x54] sm:$0xf]
      %v4922 = vld [vmem:[%s4657 + $0x58] sm:$0xf]
      %v4923 = vld [vmem:[%s4657 + $0x5c] sm:$0x1]
      %v4925 = vshrl.u32 %v4900, 16
      %v4927 = vrot.slane %v4925, 4
      %v4928 = vshll.u32 %v4900, 16
      %v4930 = vrot.slane %v4928, 5
      %v4931 = vor.u32 %v4927, %v4930
      %v4932 = vrot.slane %v4931, 4
      %v4934 = vshll.u32 %v4901, 16
      %v4936 = vrot.slane %v4934, 5
      %v4937 = vsel %vm2817, %v4932, %v4936
      %v4938 = vshrl.u32 %v4901, 16
      %v4940 = vrot.slane %v4938, 4
      %v4941 = vor.u32 %v4940, %v4936
      %v4942 = vrot.slane %v4941, 4
      %v4944 = vshll.u32 %v4902, 16
      %v4946 = vrot.slane %v4944, 5
      %v4947 = vsel %vm2817, %v4942, %v4946
      %v4949 = vshrl.u32 %v4903, 16
      %v4951 = vrot.slane %v4949, 4
      %v4952 = vshll.u32 %v4903, 16
      %v4954 = vrot.slane %v4952, 5
      %v4955 = vor.u32 %v4951, %v4954
      %v4956 = vrot.slane %v4955, 4
      %v4958 = vshll.u32 %v4904, 16
      %v4960 = vrot.slane %v4958, 5
      %v4961 = vsel %vm2817, %v4956, %v4960
      %v4962 = vshrl.u32 %v4904, 16
      %v4964 = vrot.slane %v4962, 4
      %v4965 = vor.u32 %v4964, %v4960
      %v4966 = vrot.slane %v4965, 4
      %v4968 = vshll.u32 %v4905, 16
      %v4970 = vrot.slane %v4968, 5
      %v4971 = vsel %vm2817, %v4966, %v4970
      %v4973 = vshrl.u32 %v4906, 16
      %v4975 = vrot.slane %v4973, 4
      %v4976 = vshll.u32 %v4906, 16
      %v4978 = vrot.slane %v4976, 5
      %v4979 = vor.u32 %v4975, %v4978
      %v4980 = vrot.slane %v4979, 4
      %v4982 = vshll.u32 %v4907, 16
      %v4984 = vrot.slane %v4982, 5
      %v4985 = vsel %vm2817, %v4980, %v4984
      %v4986 = vshrl.u32 %v4907, 16
      %v4988 = vrot.slane %v4986, 4
      %v4989 = vor.u32 %v4988, %v4984
      %v4990 = vrot.slane %v4989, 4
      %v4992 = vshll.u32 %v4908, 16
      %v4994 = vrot.slane %v4992, 5
      %v4995 = vsel %vm2817, %v4990, %v4994
      %v4997 = vshrl.u32 %v4909, 16
      %v4999 = vrot.slane %v4997, 4
      %v5000 = vshll.u32 %v4909, 16
      %v5002 = vrot.slane %v5000, 5
      %v5003 = vor.u32 %v4999, %v5002
      %v5004 = vrot.slane %v5003, 4
      %v5006 = vshll.u32 %v4910, 16
      %v5008 = vrot.slane %v5006, 5
      %v5009 = vsel %vm2817, %v5004, %v5008
      %v5010 = vshrl.u32 %v4910, 16
      %v5012 = vrot.slane %v5010, 4
      %v5013 = vor.u32 %v5012, %v5008
      %v5014 = vrot.slane %v5013, 4
      %v5016 = vshll.u32 %v4911, 16
      %v5018 = vrot.slane %v5016, 5
      %v5019 = vsel %vm2817, %v5014, %v5018
      %v5021 = vshrl.u32 %v4912, 16
      %v5023 = vrot.slane %v5021, 4
      %v5024 = vshll.u32 %v4912, 16
      %v5026 = vrot.slane %v5024, 5
      %v5027 = vor.u32 %v5023, %v5026
      %v5028 = vrot.slane %v5027, 4
      %v5030 = vshll.u32 %v4913, 16
      %v5032 = vrot.slane %v5030, 5
      %v5033 = vsel %vm2817, %v5028, %v5032
      %v5034 = vshrl.u32 %v4913, 16
      %v5036 = vrot.slane %v5034, 4
      %v5037 = vor.u32 %v5036, %v5032
      %v5038 = vrot.slane %v5037, 4
      %v5040 = vshll.u32 %v4914, 16
      %v5042 = vrot.slane %v5040, 5
      %v5043 = vsel %vm2817, %v5038, %v5042
      %v5045 = vshrl.u32 %v4915, 16
      %v5047 = vrot.slane %v5045, 4
      %v5048 = vshll.u32 %v4915, 16
      %v5050 = vrot.slane %v5048, 5
      %v5051 = vor.u32 %v5047, %v5050
      %v5052 = vrot.slane %v5051, 4
      %v5054 = vshll.u32 %v4916, 16
      %v5056 = vrot.slane %v5054, 5
      %v5057 = vsel %vm2817, %v5052, %v5056
      %v5058 = vshrl.u32 %v4916, 16
      %v5060 = vrot.slane %v5058, 4
      %v5061 = vor.u32 %v5060, %v5056
      %v5062 = vrot.slane %v5061, 4
      %v5064 = vshll.u32 %v4917, 16
      %v5066 = vrot.slane %v5064, 5
      %v5067 = vsel %vm2817, %v5062, %v5066
      %v5069 = vshrl.u32 %v4918, 16
      %v5071 = vrot.slane %v5069, 4
      %v5072 = vshll.u32 %v4918, 16
      %v5074 = vrot.slane %v5072, 5
      %v5075 = vor.u32 %v5071, %v5074
      %v5076 = vrot.slane %v5075, 4
      %v5078 = vshll.u32 %v4919, 16
      %v5080 = vrot.slane %v5078, 5
      %v5081 = vsel %vm2817, %v5076, %v5080
      %v5082 = vshrl.u32 %v4919, 16
      %v5084 = vrot.slane %v5082, 4
      %v5085 = vor.u32 %v5084, %v5080
      %v5086 = vrot.slane %v5085, 4
      %v5088 = vshll.u32 %v4920, 16
      %v5090 = vrot.slane %v5088, 5
      %v5091 = vsel %vm2817, %v5086, %v5090
      %v5093 = vshrl.u32 %v4921, 16
      %v5095 = vrot.slane %v5093, 4
      %v5096 = vshll.u32 %v4921, 16
      %v5098 = vrot.slane %v5096, 5
      %v5099 = vor.u32 %v5095, %v5098
      %v5100 = vrot.slane %v5099, 4
      %v5102 = vshll.u32 %v4922, 16
      %v5104 = vrot.slane %v5102, 5
      %v5105 = vsel %vm2817, %v5100, %v5104
      %v5106 = vshrl.u32 %v4922, 16
      %v5108 = vrot.slane %v5106, 4
      %v5109 = vor.u32 %v5108, %v5104
      %v5110 = vrot.slane %v5109, 4
      %v5112 = vshll.u32 %v4923, 16
      %v5114 = vrot.slane %v5112, 5
      %v5115 = vsel %vm2817, %v5110, %v5114
      %s5116 = scalar_lea.vmem %s5, 448
      %v5117 = vld [vmem:[%s5116] sm:$0xf]
      %v5118 = vld [vmem:[%s5116 + $0x4] sm:$0xf]
      %v5119 = vld [vmem:[%s5116 + $0x8] sm:$0xf]
      %v5120 = vld [vmem:[%s5116 + $0xc] sm:$0xf]
      %v5121 = vld [vmem:[%s5116 + $0x10] sm:$0xf]
      %v5122 = vld [vmem:[%s5116 + $0x14] sm:$0xf]
      %v5123 = vld [vmem:[%s5116 + $0x18] sm:$0xf]
      %v5124 = vld [vmem:[%s5116 + $0x1c] sm:$0xf]
      %v5125 = vld [vmem:[%s5116 + $0x20] sm:$0xf]
      %v5126 = vld [vmem:[%s5116 + $0x24] sm:$0xf]
      %v5127 = vld [vmem:[%s5116 + $0x28] sm:$0xf]
      %v5128 = vld [vmem:[%s5116 + $0x2c] sm:$0xf]
      %v5129 = vld [vmem:[%s5116 + $0x30] sm:$0xf]
      %v5130 = vld [vmem:[%s5116 + $0x34] sm:$0xf]
      %v5131 = vld [vmem:[%s5116 + $0x38] sm:$0xf]
      %v5132 = vld [vmem:[%s5116 + $0x3c] sm:$0xf]
      %v5133 = vunpack.c.l.b16 %v4937
      %v5134 = vunpack.c.l.b16 %v4947
      %v5135 = vunpack.c.l.b16 %v4961
      %v5136 = vunpack.c.l.b16 %v4971
      %v5137 = vunpack.c.l.b16 %v4985
      %v5138 = vunpack.c.l.b16 %v4995
      %v5139 = vunpack.c.l.b16 %v5009
      %v5140 = vunpack.c.l.b16 %v5019
      %v5141 = vunpack.c.l.b16 %v5033
      %v5142 = vunpack.c.l.b16 %v5043
      %v5143 = vunpack.c.l.b16 %v5057
      %v5144 = vunpack.c.l.b16 %v5067
      %v5145 = vunpack.c.l.b16 %v5081
      %v5146 = vunpack.c.l.b16 %v5091
      %v5147 = vunpack.c.l.b16 %v5105
      %v5148 = vunpack.c.l.b16 %v5115
      %v5149 = vpack.c.b16 %v5134, %v5133
      %v5150 = vpack.c.b16 %v5136, %v5135
      %v5151 = vpack.c.b16 %v5138, %v5137
      %v5152 = vpack.c.b16 %v5140, %v5139
      %v5153 = vpack.c.b16 %v5142, %v5141
      %v5154 = vpack.c.b16 %v5144, %v5143
      %v5155 = vpack.c.b16 %v5146, %v5145
      %v5156 = vpack.c.b16 %v5148, %v5147
      %v5181 = vunpack.c.l.b16 %v5117
      %v5182 = vunpack.c.l.b16 %v5118
      %v5183 = vunpack.c.l.b16 %v5119
      %v5184 = vunpack.c.l.b16 %v5120
      %v5185 = vunpack.c.l.b16 %v5121
      %v5186 = vunpack.c.l.b16 %v5122
      %v5187 = vunpack.c.l.b16 %v5123
      %v5188 = vunpack.c.l.b16 %v5124
      %v5189 = vunpack.c.l.b16 %v5125
      %v5190 = vunpack.c.l.b16 %v5126
      %v5191 = vunpack.c.l.b16 %v5127
      %v5192 = vunpack.c.l.b16 %v5128
      %v5193 = vunpack.c.l.b16 %v5129
      %v5194 = vunpack.c.l.b16 %v5130
      %v5195 = vunpack.c.l.b16 %v5131
      %v5196 = vunpack.c.l.b16 %v5132
      %v5197 = vpack.c.b16 %v5182, %v5181
      %v5198 = vpack.c.b16 %v5184, %v5183
      %v5199 = vpack.c.b16 %v5186, %v5185
      %v5200 = vpack.c.b16 %v5188, %v5187
      %v5201 = vpack.c.b16 %v5190, %v5189
      %v5202 = vpack.c.b16 %v5192, %v5191
      %v5203 = vpack.c.b16 %v5194, %v5193
      %v5204 = vpack.c.b16 %v5196, %v5195
      %5213 = vmatprep.subr.bf16.mxu0 0
      %5214 = vmatpush1.bf16.msra.mxu0 %v5204
      %5215 = vmatprep.subr.bf16.mxu0 0
      %5216 = vmatpush1.bf16.msra.mxu0 %v5203
      %5217 = vmatprep.subr.bf16.mxu0 0
      %5218 = vmatpush1.bf16.msra.mxu0 %v5202
      %5219 = vmatprep.subr.bf16.mxu0 0
      %5220 = vmatpush1.bf16.msra.mxu0 %v5201
      %5221 = vmatprep.subr.bf16.mxu0 0
      %5222 = vmatpush1.bf16.msra.mxu0 %v5200
      %5223 = vmatprep.subr.bf16.mxu0 0
      %5224 = vmatpush1.bf16.msra.mxu0 %v5199
      %5225 = vmatprep.subr.bf16.mxu0 0
      %5226 = vmatpush1.bf16.msra.mxu0 %v5198
      %5227 = vmatprep.subr.bf16.mxu0 0
      %5228 = vmatpush1.bf16.msra.mxu0 %v5197
      %5229 = vmatprep.subr.bf16.mxu0 0
      %5230 = vmatpush2.bf16.msra.mxu0 0
      %5231 = vmatprep.subr.bf16.mxu0 0
      %5232 = vmatpush2.bf16.msra.mxu0 0
      %5233 = vmatprep.subr.bf16.mxu0 0
      %5234 = vmatpush2.bf16.msra.mxu0 0
      %5235 = vmatprep.subr.bf16.mxu0 0
      %5236 = vmatpush2.bf16.msra.mxu0 0
      %5237 = vmatprep.subr.bf16.mxu0 0
      %5238 = vmatpush2.bf16.msra.mxu0 0
      %5239 = vmatprep.subr.bf16.mxu0 0
      %5240 = vmatpush2.bf16.msra.mxu0 0
      %5241 = vmatprep.subr.bf16.mxu0 0
      %5242 = vmatpush2.bf16.msra.mxu0 0
      %5243 = vmatprep.subr.bf16.mxu0 0
      %5244 = vmatpush2.bf16.msra.mxu0 0
      %5245 = vmatprep.mubr.bf16.mxu0 0
      %5246 = vmatmul.mubr.bf16.gmra.mxu0 %v5149
      %v5247 = vpop.f32.mrf.mxu0
      %v5248 = vadd.f32 0.0, %v5247
      %v5249 = vpop.f32.mrf.mxu0
      %v5250 = vpop.f32.mrf.mxu0
      %v5251 = vadd.f32 0.0, %v5250
      %v5252 = vpop.f32.mrf.mxu0
      %5253 = vmatprep.mubr.bf16.mxu0 0
      %5254 = vmatmul.mubr.bf16.gmra.mxu0 %v5150
      %v5255 = vpop.f32.mrf.mxu0
      %v5256 = vadd.f32 0.0, %v5255
      %v5257 = vpop.f32.mrf.mxu0
      %v5258 = vpop.f32.mrf.mxu0
      %v5259 = vadd.f32 0.0, %v5258
      %v5260 = vpop.f32.mrf.mxu0
      %5261 = vmatprep.mubr.bf16.mxu0 0
      %5262 = vmatmul.mubr.bf16.gmra.mxu0 %v5151
      %v5263 = vpop.f32.mrf.mxu0
      %v5264 = vadd.f32 0.0, %v5263
      %v5265 = vpop.f32.mrf.mxu0
      %v5266 = vpop.f32.mrf.mxu0
      %v5267 = vadd.f32 0.0, %v5266
      %v5268 = vpop.f32.mrf.mxu0
      %5269 = vmatprep.mubr.bf16.mxu0 0
      %5270 = vmatmul.mubr.bf16.gmra.mxu0 %v5152
      %v5271 = vpop.f32.mrf.mxu0
      %v5272 = vadd.f32 0.0, %v5271
      %v5273 = vpop.f32.mrf.mxu0
      %v5274 = vpop.f32.mrf.mxu0
      %v5275 = vadd.f32 0.0, %v5274
      %v5276 = vpop.f32.mrf.mxu0
      %5277 = vmatprep.mubr.bf16.mxu0 0
      %5278 = vmatmul.mubr.bf16.gmra.mxu0 %v5153
      %v5279 = vpop.f32.mrf.mxu0
      %v5280 = vadd.f32 0.0, %v5279
      %v5281 = vpop.f32.mrf.mxu0
      %v5282 = vpop.f32.mrf.mxu0
      %v5283 = vadd.f32 0.0, %v5282
      %v5284 = vpop.f32.mrf.mxu0
      %5285 = vmatprep.mubr.bf16.mxu0 0
      %5286 = vmatmul.mubr.bf16.gmra.mxu0 %v5154
      %v5287 = vpop.f32.mrf.mxu0
      %v5288 = vadd.f32 0.0, %v5287
      %v5289 = vpop.f32.mrf.mxu0
      %v5290 = vpop.f32.mrf.mxu0
      %v5291 = vadd.f32 0.0, %v5290
      %v5292 = vpop.f32.mrf.mxu0
      %5293 = vmatprep.mubr.bf16.mxu0 0
      %5294 = vmatmul.mubr.bf16.gmra.mxu0 %v5155
      %v5295 = vpop.f32.mrf.mxu0
      %v5296 = vadd.f32 0.0, %v5295
      %v5297 = vpop.f32.mrf.mxu0
      %v5298 = vpop.f32.mrf.mxu0
      %v5299 = vadd.f32 0.0, %v5298
      %v5300 = vpop.f32.mrf.mxu0
      %5301 = vmatprep.mubr.bf16.mxu0 0
      %5302 = vmatmul.mubr.bf16.gmra.mxu0 %v5156
      %v5303 = vpop.f32.mrf.mxu0
      %v5304 = vadd.f32 0.0, %v5303
      %v5305 = vpop.f32.mrf.mxu0
      %v5306 = vpop.f32.mrf.mxu0
      %v5307 = vadd.f32 0.0, %v5306
      %v5308 = vpop.f32.mrf.mxu0
      %5309 = vdwg.mxu0
      %v5310 = vadd.f32 %v4884, %v5248
      %v5311 = vadd.f32 %v4885, %v5251
      %v5312 = vadd.f32 %v4886, %v5256
      %v5313 = vadd.f32 %v4887, %v5259
      %v5314 = vadd.f32 %v4888, %v5264
      %v5315 = vadd.f32 %v4889, %v5267
      %v5316 = vadd.f32 %v4890, %v5272
      %v5317 = vadd.f32 %v4891, %v5275
      %v5318 = vadd.f32 %v4892, %v5280
      %v5319 = vadd.f32 %v4893, %v5283
      %v5320 = vadd.f32 %v4894, %v5288
      %v5321 = vadd.f32 %v4895, %v5291
      %v5322 = vadd.f32 %v4896, %v5296
      %v5323 = vadd.f32 %v4897, %v5299
      %v5324 = vadd.f32 %v4898, %v5304
      %v5325 = vadd.f32 %v4899, %v5307
      %v5326 = vld [vmem:[%s4657] sm:$0xe]
      %v5327 = vld [vmem:[%s4657 + $0xc] sm:$0xe]
      %v5328 = vld [vmem:[%s4657 + $0x18] sm:$0xe]
      %v5329 = vld [vmem:[%s4657 + $0x24] sm:$0xe]
      %v5330 = vld [vmem:[%s4657 + $0x30] sm:$0xe]
      %v5331 = vld [vmem:[%s4657 + $0x3c] sm:$0xe]
      %v5332 = vld [vmem:[%s4657 + $0x48] sm:$0xe]
      %v5333 = vld [vmem:[%s4657 + $0x54] sm:$0xe]
      %v5358 = vrot.slane %v5326, 5
      %v5359 = vrot.slane %v5358, 4
      %v5360 = vrot.slane %v4901, 5
      %v5361 = vsel %vm3423, %v5359, %v5360
      %v5362 = vrot.slane %v5360, 4
      %v5363 = vrot.slane %v4902, 5
      %v5364 = vsel %vm3423, %v5362, %v5363
      %v5365 = vrot.slane %v5327, 5
      %v5366 = vrot.slane %v5365, 4
      %v5367 = vrot.slane %v4904, 5
      %v5368 = vsel %vm3423, %v5366, %v5367
      %v5369 = vrot.slane %v5367, 4
      %v5370 = vrot.slane %v4905, 5
      %v5371 = vsel %vm3423, %v5369, %v5370
      %v5372 = vrot.slane %v5328, 5
      %v5373 = vrot.slane %v5372, 4
      %v5374 = vrot.slane %v4907, 5
      %v5375 = vsel %vm3423, %v5373, %v5374
      %v5376 = vrot.slane %v5374, 4
      %v5377 = vrot.slane %v4908, 5
      %v5378 = vsel %vm3423, %v5376, %v5377
      %v5379 = vrot.slane %v5329, 5
      %v5380 = vrot.slane %v5379, 4
      %v5381 = vrot.slane %v4910, 5
      %v5382 = vsel %vm3423, %v5380, %v5381
      %v5383 = vrot.slane %v5381, 4
      %v5384 = vrot.slane %v4911, 5
      %v5385 = vsel %vm3423, %v5383, %v5384
      %v5386 = vrot.slane %v5330, 5
      %v5387 = vrot.slane %v5386, 4
      %v5388 = vrot.slane %v4913, 5
      %v5389 = vsel %vm3423, %v5387, %v5388
      %v5390 = vrot.slane %v5388, 4
      %v5391 = vrot.slane %v4914, 5
      %v5392 = vsel %vm3423, %v5390, %v5391
      %v5393 = vrot.slane %v5331, 5
      %v5394 = vrot.slane %v5393, 4
      %v5395 = vrot.slane %v4916, 5
      %v5396 = vsel %vm3423, %v5394, %v5395
      %v5397 = vrot.slane %v5395, 4
      %v5398 = vrot.slane %v4917, 5
      %v5399 = vsel %vm3423, %v5397, %v5398
      %v5400 = vrot.slane %v5332, 5
      %v5401 = vrot.slane %v5400, 4
      %v5402 = vrot.slane %v4919, 5
      %v5403 = vsel %vm3423, %v5401, %v5402
      %v5404 = vrot.slane %v5402, 4
      %v5405 = vrot.slane %v4920, 5
      %v5406 = vsel %vm3423, %v5404, %v5405
      %v5407 = vrot.slane %v5333, 5
      %v5408 = vrot.slane %v5407, 4
      %v5409 = vrot.slane %v4922, 5
      %v5410 = vsel %vm3423, %v5408, %v5409
      %v5411 = vrot.slane %v5409, 4
      %v5412 = vrot.slane %v4923, 5
      %v5413 = vsel %vm3423, %v5411, %v5412
      %s5414 = scalar_lea.vmem %s5, 512
      %v5415 = vld [vmem:[%s5414] sm:$0xf]
      %v5416 = vld [vmem:[%s5414 + $0x4] sm:$0xf]
      %v5417 = vld [vmem:[%s5414 + $0x8] sm:$0xf]
      %v5418 = vld [vmem:[%s5414 + $0xc] sm:$0xf]
      %v5419 = vld [vmem:[%s5414 + $0x10] sm:$0xf]
      %v5420 = vld [vmem:[%s5414 + $0x14] sm:$0xf]
      %v5421 = vld [vmem:[%s5414 + $0x18] sm:$0xf]
      %v5422 = vld [vmem:[%s5414 + $0x1c] sm:$0xf]
      %v5423 = vld [vmem:[%s5414 + $0x20] sm:$0xf]
      %v5424 = vld [vmem:[%s5414 + $0x24] sm:$0xf]
      %v5425 = vld [vmem:[%s5414 + $0x28] sm:$0xf]
      %v5426 = vld [vmem:[%s5414 + $0x2c] sm:$0xf]
      %v5427 = vld [vmem:[%s5414 + $0x30] sm:$0xf]
      %v5428 = vld [vmem:[%s5414 + $0x34] sm:$0xf]
      %v5429 = vld [vmem:[%s5414 + $0x38] sm:$0xf]
      %v5430 = vld [vmem:[%s5414 + $0x3c] sm:$0xf]
      %v5431 = vunpack.c.l.b16 %v5361
      %v5432 = vunpack.c.l.b16 %v5364
      %v5433 = vunpack.c.l.b16 %v5368
      %v5434 = vunpack.c.l.b16 %v5371
      %v5435 = vunpack.c.l.b16 %v5375
      %v5436 = vunpack.c.l.b16 %v5378
      %v5437 = vunpack.c.l.b16 %v5382
      %v5438 = vunpack.c.l.b16 %v5385
      %v5439 = vunpack.c.l.b16 %v5389
      %v5440 = vunpack.c.l.b16 %v5392
      %v5441 = vunpack.c.l.b16 %v5396
      %v5442 = vunpack.c.l.b16 %v5399
      %v5443 = vunpack.c.l.b16 %v5403
      %v5444 = vunpack.c.l.b16 %v5406
      %v5445 = vunpack.c.l.b16 %v5410
      %v5446 = vunpack.c.l.b16 %v5413
      %v5447 = vpack.c.b16 %v5432, %v5431
      %v5448 = vpack.c.b16 %v5434, %v5433
      %v5449 = vpack.c.b16 %v5436, %v5435
      %v5450 = vpack.c.b16 %v5438, %v5437
      %v5451 = vpack.c.b16 %v5440, %v5439
      %v5452 = vpack.c.b16 %v5442, %v5441
      %v5453 = vpack.c.b16 %v5444, %v5443
      %v5454 = vpack.c.b16 %v5446, %v5445
      %v5479 = vunpack.c.l.b16 %v5415
      %v5480 = vunpack.c.l.b16 %v5416
      %v5481 = vunpack.c.l.b16 %v5417
      %v5482 = vunpack.c.l.b16 %v5418
      %v5483 = vunpack.c.l.b16 %v5419
      %v5484 = vunpack.c.l.b16 %v5420
      %v5485 = vunpack.c.l.b16 %v5421
      %v5486 = vunpack.c.l.b16 %v5422
      %v5487 = vunpack.c.l.b16 %v5423
      %v5488 = vunpack.c.l.b16 %v5424
      %v5489 = vunpack.c.l.b16 %v5425
      %v5490 = vunpack.c.l.b16 %v5426
      %v5491 = vunpack.c.l.b16 %v5427
      %v5492 = vunpack.c.l.b16 %v5428
      %v5493 = vunpack.c.l.b16 %v5429
      %v5494 = vunpack.c.l.b16 %v5430
      %v5495 = vpack.c.b16 %v5480, %v5479
      %v5496 = vpack.c.b16 %v5482, %v5481
      %v5497 = vpack.c.b16 %v5484, %v5483
      %v5498 = vpack.c.b16 %v5486, %v5485
      %v5499 = vpack.c.b16 %v5488, %v5487
      %v5500 = vpack.c.b16 %v5490, %v5489
      %v5501 = vpack.c.b16 %v5492, %v5491
      %v5502 = vpack.c.b16 %v5494, %v5493
      %5511 = vmatprep.subr.bf16.mxu0 0
      %5512 = vmatpush1.bf16.msra.mxu0 %v5502
      %5513 = vmatprep.subr.bf16.mxu0 0
      %5514 = vmatpush1.bf16.msra.mxu0 %v5501
      %5515 = vmatprep.subr.bf16.mxu0 0
      %5516 = vmatpush1.bf16.msra.mxu0 %v5500
      %5517 = vmatprep.subr.bf16.mxu0 0
      %5518 = vmatpush1.bf16.msra.mxu0 %v5499
      %5519 = vmatprep.subr.bf16.mxu0 0
      %5520 = vmatpush1.bf16.msra.mxu0 %v5498
      %5521 = vmatprep.subr.bf16.mxu0 0
      %5522 = vmatpush1.bf16.msra.mxu0 %v5497
      %5523 = vmatprep.subr.bf16.mxu0 0
      %5524 = vmatpush1.bf16.msra.mxu0 %v5496
      %5525 = vmatprep.subr.bf16.mxu0 0
      %5526 = vmatpush1.bf16.msra.mxu0 %v5495
      %5527 = vmatprep.subr.bf16.mxu0 0
      %5528 = vmatpush2.bf16.msra.mxu0 0
      %5529 = vmatprep.subr.bf16.mxu0 0
      %5530 = vmatpush2.bf16.msra.mxu0 0
      %5531 = vmatprep.subr.bf16.mxu0 0
      %5532 = vmatpush2.bf16.msra.mxu0 0
      %5533 = vmatprep.subr.bf16.mxu0 0
      %5534 = vmatpush2.bf16.msra.mxu0 0
      %5535 = vmatprep.subr.bf16.mxu0 0
      %5536 = vmatpush2.bf16.msra.mxu0 0
      %5537 = vmatprep.subr.bf16.mxu0 0
      %5538 = vmatpush2.bf16.msra.mxu0 0
      %5539 = vmatprep.subr.bf16.mxu0 0
      %5540 = vmatpush2.bf16.msra.mxu0 0
      %5541 = vmatprep.subr.bf16.mxu0 0
      %5542 = vmatpush2.bf16.msra.mxu0 0
      %5543 = vmatprep.mubr.bf16.mxu0 0
      %5544 = vmatmul.mubr.bf16.gmra.mxu0 %v5447
      %v5545 = vpop.f32.mrf.mxu0
      %v5546 = vadd.f32 0.0, %v5545
      %v5547 = vpop.f32.mrf.mxu0
      %v5548 = vpop.f32.mrf.mxu0
      %v5549 = vadd.f32 0.0, %v5548
      %v5550 = vpop.f32.mrf.mxu0
      %5551 = vmatprep.mubr.bf16.mxu0 0
      %5552 = vmatmul.mubr.bf16.gmra.mxu0 %v5448
      %v5553 = vpop.f32.mrf.mxu0
      %v5554 = vadd.f32 0.0, %v5553
      %v5555 = vpop.f32.mrf.mxu0
      %v5556 = vpop.f32.mrf.mxu0
      %v5557 = vadd.f32 0.0, %v5556
      %v5558 = vpop.f32.mrf.mxu0
      %5559 = vmatprep.mubr.bf16.mxu0 0
      %5560 = vmatmul.mubr.bf16.gmra.mxu0 %v5449
      %v5561 = vpop.f32.mrf.mxu0
      %v5562 = vadd.f32 0.0, %v5561
      %v5563 = vpop.f32.mrf.mxu0
      %v5564 = vpop.f32.mrf.mxu0
      %v5565 = vadd.f32 0.0, %v5564
      %v5566 = vpop.f32.mrf.mxu0
      %5567 = vmatprep.mubr.bf16.mxu0 0
      %5568 = vmatmul.mubr.bf16.gmra.mxu0 %v5450
      %v5569 = vpop.f32.mrf.mxu0
      %v5570 = vadd.f32 0.0, %v5569
      %v5571 = vpop.f32.mrf.mxu0
      %v5572 = vpop.f32.mrf.mxu0
      %v5573 = vadd.f32 0.0, %v5572
      %v5574 = vpop.f32.mrf.mxu0
      %5575 = vmatprep.mubr.bf16.mxu0 0
      %5576 = vmatmul.mubr.bf16.gmra.mxu0 %v5451
      %v5577 = vpop.f32.mrf.mxu0
      %v5578 = vadd.f32 0.0, %v5577
      %v5579 = vpop.f32.mrf.mxu0
      %v5580 = vpop.f32.mrf.mxu0
      %v5581 = vadd.f32 0.0, %v5580
      %v5582 = vpop.f32.mrf.mxu0
      %5583 = vmatprep.mubr.bf16.mxu0 0
      %5584 = vmatmul.mubr.bf16.gmra.mxu0 %v5452
      %v5585 = vpop.f32.mrf.mxu0
      %v5586 = vadd.f32 0.0, %v5585
      %v5587 = vpop.f32.mrf.mxu0
      %v5588 = vpop.f32.mrf.mxu0
      %v5589 = vadd.f32 0.0, %v5588
      %v5590 = vpop.f32.mrf.mxu0
      %5591 = vmatprep.mubr.bf16.mxu0 0
      %5592 = vmatmul.mubr.bf16.gmra.mxu0 %v5453
      %v5593 = vpop.f32.mrf.mxu0
      %v5594 = vadd.f32 0.0, %v5593
      %v5595 = vpop.f32.mrf.mxu0
      %v5596 = vpop.f32.mrf.mxu0
      %v5597 = vadd.f32 0.0, %v5596
      %v5598 = vpop.f32.mrf.mxu0
      %5599 = vmatprep.mubr.bf16.mxu0 0
      %5600 = vmatmul.mubr.bf16.gmra.mxu0 %v5454
      %v5601 = vpop.f32.mrf.mxu0
      %v5602 = vadd.f32 0.0, %v5601
      %v5603 = vpop.f32.mrf.mxu0
      %v5604 = vpop.f32.mrf.mxu0
      %v5605 = vadd.f32 0.0, %v5604
      %v5606 = vpop.f32.mrf.mxu0
      %5607 = vdwg.mxu0
      %v5608 = vadd.f32 %v5310, %v5546
      %v5609 = vadd.f32 %v5311, %v5549
      %v5610 = vadd.f32 %v5312, %v5554
      %v5611 = vadd.f32 %v5313, %v5557
      %v5612 = vadd.f32 %v5314, %v5562
      %v5613 = vadd.f32 %v5315, %v5565
      %v5614 = vadd.f32 %v5316, %v5570
      %v5615 = vadd.f32 %v5317, %v5573
      %v5616 = vadd.f32 %v5318, %v5578
      %v5617 = vadd.f32 %v5319, %v5581
      %v5618 = vadd.f32 %v5320, %v5586
      %v5619 = vadd.f32 %v5321, %v5589
      %v5620 = vadd.f32 %v5322, %v5594
      %v5621 = vadd.f32 %v5323, %v5597
      %v5622 = vadd.f32 %v5324, %v5602
      %v5623 = vadd.f32 %v5325, %v5605
      %v5624 = vld [vmem:[%s6] sm:$0x1]
      %v5626 = vlaneseq
      %v5627 = vshrl.u32 %v5626, 7
      %v5628 = vsub.s32 0, %v5627
      %v5629 = vrot.slane %v5624, %v5628
      %v5631 = vmul.f32 %v5608, %v5629
      %v5632 = vmul.f32 %v5609, %v5629
      %v5633 = vmul.f32 %v5610, %v5629
      %v5634 = vmul.f32 %v5611, %v5629
      %v5635 = vmul.f32 %v5612, %v5629
      %v5636 = vmul.f32 %v5613, %v5629
      %v5637 = vmul.f32 %v5614, %v5629
      %v5638 = vmul.f32 %v5615, %v5629
      %v5639 = vmul.f32 %v5616, %v5629
      %v5640 = vmul.f32 %v5617, %v5629
      %v5641 = vmul.f32 %v5618, %v5629
      %v5642 = vmul.f32 %v5619, %v5629
      %v5643 = vmul.f32 %v5620, %v5629
      %v5644 = vmul.f32 %v5621, %v5629
      %v5645 = vmul.f32 %v5622, %v5629
      %v5646 = vmul.f32 %v5623, %v5629
      %v5647 = vld [vmem:[%s7] sm:$0x1]
      %v5649 = vlaneseq
      %v5650 = vshrl.u32 %v5649, 7
      %v5651 = vsub.s32 0, %v5650
      %v5652 = vrot.slane %v5647, %v5651
      %v5654 = vadd.f32 %v5631, %v5652
      %v5655 = vadd.f32 %v5632, %v5652
      %v5656 = vadd.f32 %v5633, %v5652
      %v5657 = vadd.f32 %v5634, %v5652
      %v5658 = vadd.f32 %v5635, %v5652
      %v5659 = vadd.f32 %v5636, %v5652
      %v5660 = vadd.f32 %v5637, %v5652
      %v5661 = vadd.f32 %v5638, %v5652
      %v5662 = vadd.f32 %v5639, %v5652
      %v5663 = vadd.f32 %v5640, %v5652
      %v5664 = vadd.f32 %v5641, %v5652
      %v5665 = vadd.f32 %v5642, %v5652
      %v5666 = vadd.f32 %v5643, %v5652
      %v5667 = vadd.f32 %v5644, %v5652
      %v5668 = vadd.f32 %v5645, %v5652
      %v5669 = vadd.f32 %v5646, %v5652
      %v5670 = vmax.f32 %v5654, 0.0
      %v5671 = vmax.f32 %v5655, 0.0
      %v5672 = vmax.f32 %v5656, 0.0
      %v5673 = vmax.f32 %v5657, 0.0
      %v5674 = vmax.f32 %v5658, 0.0
      %v5675 = vmax.f32 %v5659, 0.0
      %v5676 = vmax.f32 %v5660, 0.0
      %v5677 = vmax.f32 %v5661, 0.0
      %v5678 = vmax.f32 %v5662, 0.0
      %v5679 = vmax.f32 %v5663, 0.0
      %v5680 = vmax.f32 %v5664, 0.0
      %v5681 = vmax.f32 %v5665, 0.0
      %v5682 = vmax.f32 %v5666, 0.0
      %v5683 = vmax.f32 %v5667, 0.0
      %v5684 = vmax.f32 %v5668, 0.0
      %v5685 = vmax.f32 %v5669, 0.0
      %v5686 = vpack.c.bf16 %v5671, %v5670
      %v5687 = vpack.c.bf16 %v5673, %v5672
      %v5688 = vpack.c.bf16 %v5675, %v5674
      %v5689 = vpack.c.bf16 %v5677, %v5676
      %v5690 = vpack.c.bf16 %v5679, %v5678
      %v5691 = vpack.c.bf16 %v5681, %v5680
      %v5692 = vpack.c.bf16 %v5683, %v5682
      %v5693 = vpack.c.bf16 %v5685, %v5684
      %v5694 = vld [vmem:[%s8] sm:$0xf]
      %v5695 = vld [vmem:[%s8 + $0x4] sm:$0xf]
      %v5696 = vld [vmem:[%s8 + $0x8] sm:$0xf]
      %v5697 = vld [vmem:[%s8 + $0xc] sm:$0xf]
      %v5698 = vld [vmem:[%s8 + $0x10] sm:$0xf]
      %v5699 = vld [vmem:[%s8 + $0x14] sm:$0xf]
      %v5700 = vld [vmem:[%s8 + $0x18] sm:$0xf]
      %v5701 = vld [vmem:[%s8 + $0x1c] sm:$0xf]
      %v5702 = vld [vmem:[%s8 + $0x20] sm:$0xf]
      %v5703 = vld [vmem:[%s8 + $0x24] sm:$0xf]
      %v5704 = vld [vmem:[%s8 + $0x28] sm:$0xf]
      %v5705 = vld [vmem:[%s8 + $0x2c] sm:$0xf]
      %v5706 = vld [vmem:[%s8 + $0x30] sm:$0xf]
      %v5707 = vld [vmem:[%s8 + $0x34] sm:$0xf]
      %v5708 = vld [vmem:[%s8 + $0x38] sm:$0xf]
      %v5709 = vld [vmem:[%s8 + $0x3c] sm:$0xf]
      %v5726 = vunpack.c.l.b16 %v5694
      %v5727 = vunpack.c.l.b16 %v5695
      %v5728 = vunpack.c.l.b16 %v5696
      %v5729 = vunpack.c.l.b16 %v5697
      %v5730 = vunpack.c.l.b16 %v5698
      %v5731 = vunpack.c.l.b16 %v5699
      %v5732 = vunpack.c.l.b16 %v5700
      %v5733 = vunpack.c.l.b16 %v5701
      %v5734 = vunpack.c.l.b16 %v5702
      %v5735 = vunpack.c.l.b16 %v5703
      %v5736 = vunpack.c.l.b16 %v5704
      %v5737 = vunpack.c.l.b16 %v5705
      %v5738 = vunpack.c.l.b16 %v5706
      %v5739 = vunpack.c.l.b16 %v5707
      %v5740 = vunpack.c.l.b16 %v5708
      %v5741 = vunpack.c.l.b16 %v5709
      %v5742 = vpack.c.b16 %v5727, %v5726
      %v5743 = vpack.c.b16 %v5729, %v5728
      %v5744 = vpack.c.b16 %v5731, %v5730
      %v5745 = vpack.c.b16 %v5733, %v5732
      %v5746 = vpack.c.b16 %v5735, %v5734
      %v5747 = vpack.c.b16 %v5737, %v5736
      %v5748 = vpack.c.b16 %v5739, %v5738
      %v5749 = vpack.c.b16 %v5741, %v5740
      %5758 = vmatprep.subr.bf16.mxu0 0
      %5759 = vmatpush1.bf16.msra.mxu0 %v5749
      %5760 = vmatprep.subr.bf16.mxu0 0
      %5761 = vmatpush1.bf16.msra.mxu0 %v5748
      %5762 = vmatprep.subr.bf16.mxu0 0
      %5763 = vmatpush1.bf16.msra.mxu0 %v5747
      %5764 = vmatprep.subr.bf16.mxu0 0
      %5765 = vmatpush1.bf16.msra.mxu0 %v5746
      %5766 = vmatprep.subr.bf16.mxu0 0
      %5767 = vmatpush1.bf16.msra.mxu0 %v5745
      %5768 = vmatprep.subr.bf16.mxu0 0
      %5769 = vmatpush1.bf16.msra.mxu0 %v5744
      %5770 = vmatprep.subr.bf16.mxu0 0
      %5771 = vmatpush1.bf16.msra.mxu0 %v5743
      %5772 = vmatprep.subr.bf16.mxu0 0
      %5773 = vmatpush1.bf16.msra.mxu0 %v5742
      %5774 = vmatprep.subr.bf16.mxu0 0
      %5775 = vmatpush2.bf16.msra.mxu0 0
      %5776 = vmatprep.subr.bf16.mxu0 0
      %5777 = vmatpush2.bf16.msra.mxu0 0
      %5778 = vmatprep.subr.bf16.mxu0 0
      %5779 = vmatpush2.bf16.msra.mxu0 0
      %5780 = vmatprep.subr.bf16.mxu0 0
      %5781 = vmatpush2.bf16.msra.mxu0 0
      %5782 = vmatprep.subr.bf16.mxu0 0
      %5783 = vmatpush2.bf16.msra.mxu0 0
      %5784 = vmatprep.subr.bf16.mxu0 0
      %5785 = vmatpush2.bf16.msra.mxu0 0
      %5786 = vmatprep.subr.bf16.mxu0 0
      %5787 = vmatpush2.bf16.msra.mxu0 0
      %5788 = vmatprep.subr.bf16.mxu0 0
      %5789 = vmatpush2.bf16.msra.mxu0 0
      %5790 = vmatprep.mubr.bf16.mxu0 0
      %5791 = vmatmul.mubr.bf16.gmra.mxu0 %v5686
      %v5792 = vpop.f32.mrf.mxu0
      %v5793 = vadd.f32 0.0, %v5792
      %v5794 = vpop.f32.mrf.mxu0
      %v5795 = vpop.f32.mrf.mxu0
      %v5796 = vadd.f32 0.0, %v5795
      %v5797 = vpop.f32.mrf.mxu0
      %5798 = vmatprep.mubr.bf16.mxu0 0
      %5799 = vmatmul.mubr.bf16.gmra.mxu0 %v5687
      %v5800 = vpop.f32.mrf.mxu0
      %v5801 = vadd.f32 0.0, %v5800
      %v5802 = vpop.f32.mrf.mxu0
      %v5803 = vpop.f32.mrf.mxu0
      %v5804 = vadd.f32 0.0, %v5803
      %v5805 = vpop.f32.mrf.mxu0
      %5806 = vmatprep.mubr.bf16.mxu0 0
      %5807 = vmatmul.mubr.bf16.gmra.mxu0 %v5688
      %v5808 = vpop.f32.mrf.mxu0
      %v5809 = vadd.f32 0.0, %v5808
      %v5810 = vpop.f32.mrf.mxu0
      %v5811 = vpop.f32.mrf.mxu0
      %v5812 = vadd.f32 0.0, %v5811
      %v5813 = vpop.f32.mrf.mxu0
      %5814 = vmatprep.mubr.bf16.mxu0 0
      %5815 = vmatmul.mubr.bf16.gmra.mxu0 %v5689
      %v5816 = vpop.f32.mrf.mxu0
      %v5817 = vadd.f32 0.0, %v5816
      %v5818 = vpop.f32.mrf.mxu0
      %v5819 = vpop.f32.mrf.mxu0
      %v5820 = vadd.f32 0.0, %v5819
      %v5821 = vpop.f32.mrf.mxu0
      %5822 = vmatprep.mubr.bf16.mxu0 0
      %5823 = vmatmul.mubr.bf16.gmra.mxu0 %v5690
      %v5824 = vpop.f32.mrf.mxu0
      %v5825 = vadd.f32 0.0, %v5824
      %v5826 = vpop.f32.mrf.mxu0
      %v5827 = vpop.f32.mrf.mxu0
      %v5828 = vadd.f32 0.0, %v5827
      %v5829 = vpop.f32.mrf.mxu0
      %5830 = vmatprep.mubr.bf16.mxu0 0
      %5831 = vmatmul.mubr.bf16.gmra.mxu0 %v5691
      %v5832 = vpop.f32.mrf.mxu0
      %v5833 = vadd.f32 0.0, %v5832
      %v5834 = vpop.f32.mrf.mxu0
      %v5835 = vpop.f32.mrf.mxu0
      %v5836 = vadd.f32 0.0, %v5835
      %v5837 = vpop.f32.mrf.mxu0
      %5838 = vmatprep.mubr.bf16.mxu0 0
      %5839 = vmatmul.mubr.bf16.gmra.mxu0 %v5692
      %v5840 = vpop.f32.mrf.mxu0
      %v5841 = vadd.f32 0.0, %v5840
      %v5842 = vpop.f32.mrf.mxu0
      %v5843 = vpop.f32.mrf.mxu0
      %v5844 = vadd.f32 0.0, %v5843
      %v5845 = vpop.f32.mrf.mxu0
      %5846 = vmatprep.mubr.bf16.mxu0 0
      %5847 = vmatmul.mubr.bf16.gmra.mxu0 %v5693
      %v5848 = vpop.f32.mrf.mxu0
      %v5849 = vadd.f32 0.0, %v5848
      %v5850 = vpop.f32.mrf.mxu0
      %v5851 = vpop.f32.mrf.mxu0
      %v5852 = vadd.f32 0.0, %v5851
      %v5853 = vpop.f32.mrf.mxu0
      %5854 = vdwg.mxu0
      %v5855 = vld [vmem:[%s9] sm:$0x1]
      %v5857 = vlaneseq
      %v5858 = vshrl.u32 %v5857, 7
      %v5859 = vsub.s32 0, %v5858
      %v5860 = vrot.slane %v5855, %v5859
      %v5862 = vmul.f32 %v5793, %v5860
      %v5863 = vmul.f32 %v5796, %v5860
      %v5864 = vmul.f32 %v5801, %v5860
      %v5865 = vmul.f32 %v5804, %v5860
      %v5866 = vmul.f32 %v5809, %v5860
      %v5867 = vmul.f32 %v5812, %v5860
      %v5868 = vmul.f32 %v5817, %v5860
      %v5869 = vmul.f32 %v5820, %v5860
      %v5870 = vmul.f32 %v5825, %v5860
      %v5871 = vmul.f32 %v5828, %v5860
      %v5872 = vmul.f32 %v5833, %v5860
      %v5873 = vmul.f32 %v5836, %v5860
      %v5874 = vmul.f32 %v5841, %v5860
      %v5875 = vmul.f32 %v5844, %v5860
      %v5876 = vmul.f32 %v5849, %v5860
      %v5877 = vmul.f32 %v5852, %v5860
      %v5878 = vld [vmem:[%s10] sm:$0x1]
      %v5880 = vlaneseq
      %v5881 = vshrl.u32 %v5880, 7
      %v5882 = vsub.s32 0, %v5881
      %v5883 = vrot.slane %v5878, %v5882
      %v5885 = vadd.f32 %v5862, %v5883
      %v5886 = vadd.f32 %v5863, %v5883
      %v5887 = vadd.f32 %v5864, %v5883
      %v5888 = vadd.f32 %v5865, %v5883
      %v5889 = vadd.f32 %v5866, %v5883
      %v5890 = vadd.f32 %v5867, %v5883
      %v5891 = vadd.f32 %v5868, %v5883
      %v5892 = vadd.f32 %v5869, %v5883
      %v5893 = vadd.f32 %v5870, %v5883
      %v5894 = vadd.f32 %v5871, %v5883
      %v5895 = vadd.f32 %v5872, %v5883
      %v5896 = vadd.f32 %v5873, %v5883
      %v5897 = vadd.f32 %v5874, %v5883
      %v5898 = vadd.f32 %v5875, %v5883
      %v5899 = vadd.f32 %v5876, %v5883
      %v5900 = vadd.f32 %v5877, %v5883
      %v5901 = vld [vmem:[%s443] sm:$0xff]
      %v5902 = vld [vmem:[%s443 + $0x8] sm:$0xff]
      %v5903 = vld [vmem:[%s443 + $0x10] sm:$0x3]
      %v5904 = vld [vmem:[%s443 + $0x18] sm:$0xff]
      %v5905 = vld [vmem:[%s443 + $0x20] sm:$0xff]
      %v5906 = vld [vmem:[%s443 + $0x28] sm:$0x3]
      %v5907 = vld [vmem:[%s443 + $0x30] sm:$0xff]
      %v5908 = vld [vmem:[%s443 + $0x38] sm:$0xff]
      %v5909 = vld [vmem:[%s443 + $0x40] sm:$0x3]
      %v5910 = vld [vmem:[%s443 + $0x48] sm:$0xff]
      %v5911 = vld [vmem:[%s443 + $0x50] sm:$0xff]
      %v5912 = vld [vmem:[%s443 + $0x58] sm:$0x3]
      %v5913 = vld [vmem:[%s443 + $0x60] sm:$0xff]
      %v5914 = vld [vmem:[%s443 + $0x68] sm:$0xff]
      %v5915 = vld [vmem:[%s443 + $0x70] sm:$0x3]
      %v5916 = vld [vmem:[%s443 + $0x78] sm:$0xff]
      %v5917 = vld [vmem:[%s443 + $0x80] sm:$0xff]
      %v5918 = vld [vmem:[%s443 + $0x88] sm:$0x3]
      %v5919 = vld [vmem:[%s443 + $0x90] sm:$0xff]
      %v5920 = vld [vmem:[%s443 + $0x98] sm:$0xff]
      %v5921 = vld [vmem:[%s443 + $0xa0] sm:$0x3]
      %v5922 = vld [vmem:[%s443 + $0xa8] sm:$0xff]
      %v5923 = vld [vmem:[%s443 + $0xb0] sm:$0xff]
      %v5924 = vld [vmem:[%s443 + $0xb8] sm:$0x3]
      %vm5949 = vcmask 1046528
      %v5950 = vrot.slane %v5901, 1
      %v5951 = vrot.slane %v5902, 1
      %v5952 = vsel %vm5949, %v5950, %v5951
      %v5953 = vrot.slane %v5903, 1
      %v5954 = vsel %vm5949, %v5951, %v5953
      %v5955 = vrot.slane %v5904, 1
      %v5956 = vrot.slane %v5905, 1
      %v5957 = vsel %vm5949, %v5955, %v5956
      %v5958 = vrot.slane %v5906, 1
      %v5959 = vsel %vm5949, %v5956, %v5958
      %v5960 = vrot.slane %v5907, 1
      %v5961 = vrot.slane %v5908, 1
      %v5962 = vsel %vm5949, %v5960, %v5961
      %v5963 = vrot.slane %v5909, 1
      %v5964 = vsel %vm5949, %v5961, %v5963
      %v5965 = vrot.slane %v5910, 1
      %v5966 = vrot.slane %v5911, 1
      %v5967 = vsel %vm5949, %v5965, %v5966
      %v5968 = vrot.slane %v5912, 1
      %v5969 = vsel %vm5949, %v5966, %v5968
      %v5970 = vrot.slane %v5913, 1
      %v5971 = vrot.slane %v5914, 1
      %v5972 = vsel %vm5949, %v5970, %v5971
      %v5973 = vrot.slane %v5915, 1
      %v5974 = vsel %vm5949, %v5971, %v5973
      %v5975 = vrot.slane %v5916, 1
      %v5976 = vrot.slane %v5917, 1
      %v5977 = vsel %vm5949, %v5975, %v5976
      %v5978 = vrot.slane %v5918, 1
      %v5979 = vsel %vm5949, %v5976, %v5978
      %v5980 = vrot.slane %v5919, 1
      %v5981 = vrot.slane %v5920, 1
      %v5982 = vsel %vm5949, %v5980, %v5981
      %v5983 = vrot.slane %v5921, 1
      %v5984 = vsel %vm5949, %v5981, %v5983
      %v5985 = vrot.slane %v5922, 1
      %v5986 = vrot.slane %v5923, 1
      %v5987 = vsel %vm5949, %v5985, %v5986
      %v5988 = vrot.slane %v5924, 1
      %v5989 = vsel %vm5949, %v5986, %v5988
      %v6006 = vadd.f32 %v5885, %v5952
      %v6007 = vadd.f32 %v5886, %v5954
      %v6008 = vadd.f32 %v5887, %v5957
      %v6009 = vadd.f32 %v5888, %v5959
      %v6010 = vadd.f32 %v5889, %v5962
      %v6011 = vadd.f32 %v5890, %v5964
      %v6012 = vadd.f32 %v5891, %v5967
      %v6013 = vadd.f32 %v5892, %v5969
      %v6014 = vadd.f32 %v5893, %v5972
      %v6015 = vadd.f32 %v5894, %v5974
      %v6016 = vadd.f32 %v5895, %v5977
      %v6017 = vadd.f32 %v5896, %v5979
      %v6018 = vadd.f32 %v5897, %v5982
      %v6019 = vadd.f32 %v5898, %v5984
      %v6020 = vadd.f32 %v5899, %v5987
      %v6021 = vadd.f32 %v5900, %v5989
      %v6022 = vmax.f32 %v6006, 0.0
      %v6023 = vmax.f32 %v6007, 0.0
      %v6024 = vmax.f32 %v6008, 0.0
      %v6025 = vmax.f32 %v6009, 0.0
      %v6026 = vmax.f32 %v6010, 0.0
      %v6027 = vmax.f32 %v6011, 0.0
      %v6028 = vmax.f32 %v6012, 0.0
      %v6029 = vmax.f32 %v6013, 0.0
      %v6030 = vmax.f32 %v6014, 0.0
      %v6031 = vmax.f32 %v6015, 0.0
      %v6032 = vmax.f32 %v6016, 0.0
      %v6033 = vmax.f32 %v6017, 0.0
      %v6034 = vmax.f32 %v6018, 0.0
      %v6035 = vmax.f32 %v6019, 0.0
      %v6036 = vmax.f32 %v6020, 0.0
      %v6037 = vmax.f32 %v6021, 0.0
      %6038 = vst [vmem:[%s463] sm:$0xff] %v6022
      %6039 = vst [vmem:[%s463 + $0x8] sm:$0xff] %v6023
      %6040 = vst [vmem:[%s463 + $0x10] sm:$0xff] %v6024
      %6041 = vst [vmem:[%s463 + $0x18] sm:$0xff] %v6025
      %6042 = vst [vmem:[%s463 + $0x20] sm:$0xff] %v6026
      %6043 = vst [vmem:[%s463 + $0x28] sm:$0xff] %v6027
      %6044 = vst [vmem:[%s463 + $0x30] sm:$0xff] %v6028
      %6045 = vst [vmem:[%s463 + $0x38] sm:$0xff] %v6029
      %6046 = vst [vmem:[%s463 + $0x40] sm:$0xff] %v6030
      %6047 = vst [vmem:[%s463 + $0x48] sm:$0xff] %v6031
      %6048 = vst [vmem:[%s463 + $0x50] sm:$0xff] %v6032
      %6049 = vst [vmem:[%s463 + $0x58] sm:$0xff] %v6033
      %6050 = vst [vmem:[%s463 + $0x60] sm:$0xff] %v6034
      %6051 = vst [vmem:[%s463 + $0x68] sm:$0xff] %v6035
      %6052 = vst [vmem:[%s463 + $0x70] sm:$0xff] %v6036
      %6053 = vst [vmem:[%s463 + $0x78] sm:$0xff] %v6037
      %s6054 = smul.u32 8, %s27
      %p6055 = scmp.lt.s32.totalorder %s26, 1
      %s6056 = scalar_select %p6055, %s26, 1
      %p6057 = scmp.lt.s32.totalorder %s6054, 15
      %s6058 = scalar_select %p6057, %s6054, 15
      %s6059 = smul.addr %s6058, 2
      %s6060 = smul.addr %s6056, 32
      %s6061 = sadd.s32 %s6059, %s6060
      %s6062 = smul.addr %s6061, 8
      %s6063 = scalar_lea.vmem %s11, %s6062
      // Predicated region
      $region65: #{_lambda_.1} parent=63 // pred_check
        %p6064 = pneg %p301
      $region66: #{_lambda_.1} parent=63 // pred_check_branch
        %6066 = sbr.rel (%p6064) target = $region68
      $region67: #{_lambda_.1} parent=63 // pred_region
        %s6067 = smul.u32 8, %s27
      $region68: #{_lambda_.1} parent=63 // pred_fallthru
        _
    $region64: #{_lambda_.1} parent=5 // pred_fallthru
      _
    %p6068 = scmp.le.s32.totalorder 2, %s17
    // Predicated region
    $region69: #{_lambda_.1} parent=5 // pred_check
      %p6069 = pneg %p6068
    $region70: #{_lambda_.1} parent=5 // pred_check_branch
      %6071 = sbr.rel (%p6069) target = $region72
    $region71: #{_lambda_.1} parent=5 // pred_region
      %s6072 = ssub.s32 %s17, 2
      // Predicated region
      $region73: #{_lambda_.1} parent=71 // pred_check
        %p6073 = pneg %p307
      $region74: #{_lambda_.1} parent=71 // pred_check_branch
        %6075 = sbr.rel (%p6073) target = $region76
      $region75: #{_lambda_.1} parent=71 // pred_region
        %s6076 = smul.u32 8, %s29
        %p6077 = scmp.lt.s32.totalorder %s28, 1
        %s6078 = scalar_select %p6077, %s28, 1
        %p6079 = scmp.lt.s32.totalorder %s6076, 15
        %s6080 = scalar_select %p6079, %s6076, 15
        %s6081 = smul.addr %s6080, 2
        %s6082 = smul.addr %s6078, 32
        %s6083 = sadd.s32 %s6081, %s6082
        %s6084 = smul.addr %s6083, 8
        %s6085 = scalar_lea.vmem %s11, %s6084
      $region76: #{_lambda_.1} parent=71 // pred_fallthru
        _
    $region72: #{_lambda_.1} parent=5 // pred_fallthru
      _
  $region6: #{_lambda_.1} parent=0 // loop_footer
    %s21 = sadd.s32 1, %s17
  $region7: #{_lambda_.1} parent=0 // loop_footer_branch
    %16 = sbr.rel target = $region3
  $region8: #{_lambda_.1} parent=0 // loop_exit
    _

</llo_original>
